<compile_context>
chip_gen: v7x
topology: tpu7x:2x2x1
jax: 0.10.0
libtpu: 0.0.40
codegen_flags: <defaults>
</compile_context>

<pallas_src>
import numpy as np

import jax
import jax.numpy as jnp
from jax.experimental import pallas as pl
from jax.experimental.pallas import tpu as pltpu


# ---------------------------------------------------------------------------
# Fused forward kernel (one grid step = one image)
# ---------------------------------------------------------------------------

def _lenet_kernel(x_ref, t1_ref, b1_ref, eh1_ref, sw1_ref,
                  t2_ref, b2_ref, eh2_ref, sw2_ref,
                  f1_ref, bf1_ref, w2t_ref, bf2_ref, w3t_ref, bf3_ref,
                  out_ref, p1_scr, p2_scr):
    f32 = jnp.float32

    # ---- conv1 + bias + ReLU: banded-Toeplitz matmuls over the 5 kernel rows.
    #      activation layout: (ho, oc*28 + wo)  -> (28, 168)
    a1 = jnp.dot(x_ref[0, 0:28, :], t1_ref[0], preferred_element_type=f32)
    for i in range(1, 5):
        a1 = a1 + jnp.dot(x_ref[0, i:i + 28, :], t1_ref[i],
                          preferred_element_type=f32)
    a1 = jnp.maximum(a1 + b1_ref[...], 0.0)                          # (28, 168)

    # ---- pool1: 2x2/2 max via even/odd 0-1 selection matmuls (rows then lanes)
    h1 = jnp.maximum(jnp.dot(eh1_ref[0], a1, preferred_element_type=f32),
                     jnp.dot(eh1_ref[1], a1, preferred_element_type=f32))
    p1_scr[...] = jnp.maximum(
        jnp.dot(h1, sw1_ref[0], preferred_element_type=f32),
        jnp.dot(h1, sw1_ref[1], preferred_element_type=f32))         # (14, 84)

    # ---- conv2 + bias + ReLU: layout (ho, oc*10 + wo) -> (10, 160)
    a2 = jnp.dot(p1_scr[0:10, :], t2_ref[0], preferred_element_type=f32)
    for i in range(1, 5):
        a2 = a2 + jnp.dot(p1_scr[i:i + 10, :], t2_ref[i],
                          preferred_element_type=f32)
    a2 = jnp.maximum(a2 + b2_ref[...], 0.0)                          # (10, 160)

    # ---- pool2
    h2 = jnp.maximum(jnp.dot(eh2_ref[0], a2, preferred_element_type=f32),
                     jnp.dot(eh2_ref[1], a2, preferred_element_type=f32))
    p2_scr[...] = jnp.maximum(
        jnp.dot(h2, sw2_ref[0], preferred_element_type=f32),
        jnp.dot(h2, sw2_ref[1], preferred_element_type=f32))         # (5, 80)

    # ---- fc1 + ReLU: PyTorch NCHW flatten folded into per-row weight slabs
    y = jnp.dot(p2_scr[0:1, :], f1_ref[0], preferred_element_type=f32)
    for h in range(1, 5):
        y = y + jnp.dot(p2_scr[h:h + 1, :], f1_ref[h],
                        preferred_element_type=f32)
    y = jnp.maximum(y + bf1_ref[...], 0.0)                           # (1, 120)

    # ---- fc2 + ReLU, fc3
    y = jnp.maximum(jnp.dot(y, w2t_ref[...], preferred_element_type=f32)
                    + bf2_ref[...], 0.0)                             # (1, 84)
    y = jnp.dot(y, w3t_ref[...], preferred_element_type=f32) + bf3_ref[...]
    out_ref[0] = y                                                   # (1, 10)


# ---------------------------------------------------------------------------
# Parameters: PyTorch-layout init + one-time host-side repack
# ---------------------------------------------------------------------------

def init_params(key):
    """Deterministic parameter init with the shapes from CNN.__init__."""
    ks = jax.random.split(key, 10)

    def nrm(k, shape, scale):
        return scale * jax.random.normal(k, shape, dtype=jnp.float32)

    return {
        "conv1_w": nrm(ks[0], (6, 1, 5, 5), 0.1),
        "conv1_b": nrm(ks[1], (6,), 0.1),
        "conv2_w": nrm(ks[2], (16, 6, 5, 5), 0.1),
        "conv2_b": nrm(ks[3], (16,), 0.1),
        "fc1_w": nrm(ks[4], (120, 400), 0.05),   # PyTorch Linear: (out, in)
        "fc1_b": nrm(ks[5], (120,), 0.05),
        "fc2_w": nrm(ks[6], (84, 120), 0.05),
        "fc2_b": nrm(ks[7], (84,), 0.05),
        "fc3_w": nrm(ks[8], (10, 84), 0.05),
        "fc3_b": nrm(ks[9], (10,), 0.05),
    }


def pack_params(params):
    """One-time repack of PyTorch-layout weights into the matmul operands the
    fused kernel consumes (Toeplitz conv slabs, pool selection matrices,
    flatten-folded fc1 slabs, pre-transposed fc weights)."""
    w1 = np.asarray(params["conv1_w"], np.float32)    # (6,1,5,5)
    b1 = np.asarray(params["conv1_b"], np.float32)
    w2 = np.asarray(params["conv2_w"], np.float32)    # (16,6,5,5)
    b2 = np.asarray(params["conv2_b"], np.float32)
    wf1 = np.asarray(params["fc1_w"], np.float32)     # (120,400)
    bf1 = np.asarray(params["fc1_b"], np.float32)
    wf2 = np.asarray(params["fc2_w"], np.float32)     # (84,120)
    bf2 = np.asarray(params["fc2_b"], np.float32)
    wf3 = np.asarray(params["fc3_w"], np.float32)     # (10,84)
    bf3 = np.asarray(params["fc3_b"], np.float32)

    # conv1 slabs: act1[ho, oc*28+wo] = sum_i (x[ho+i, :] @ T1[i])[oc*28+wo]
    T1 = np.zeros((5, 32, 6 * 28), np.float32)
    for i in range(5):
        for j in range(5):
            for wo in range(28):
                T1[i, wo + j, np.arange(6) * 28 + wo] = w1[:, 0, i, j]
    B1 = np.repeat(b1, 28)[None, :]                   # (1, 168)

    # conv2 slabs on the pooled lane layout (ic*14 + w)
    T2 = np.zeros((5, 6 * 14, 16 * 10), np.float32)
    for i in range(5):
        for j in range(5):
            for ic in range(6):
                for wo in range(10):
                    T2[i, ic * 14 + wo + j, np.arange(16) * 10 + wo] = w2[:, ic, i, j]
    B2 = np.repeat(b2, 10)[None, :]                   # (1, 160)

    # 2x2 max-pool selection matrices (rows: left-multiply, lanes: right-multiply)
    def row_sel(n_out):
        e = np.zeros((2, n_out, 2 * n_out), np.float32)
        e[0, np.arange(n_out), 2 * np.arange(n_out)] = 1.0
        e[1, np.arange(n_out), 2 * np.arange(n_out) + 1] = 1.0
        return e

    def lane_sel(ch, w_out):
        w_in = 2 * w_out
        s = np.zeros((2, ch * w_in, ch * w_out), np.float32)
        for c in range(ch):
            for w in range(w_out):
                s[0, c * w_in + 2 * w, c * w_out + w] = 1.0
                s[1, c * w_in + 2 * w + 1, c * w_out + w] = 1.0
        return s

    EH1, SW1 = row_sel(14), lane_sel(6, 14)           # (2,14,28), (2,168,84)
    EH2, SW2 = row_sel(5), lane_sel(16, 5)            # (2,5,10),  (2,160,80)

    # fc1 slabs: flat idx = oc*25 + h*5 + w  (PyTorch view(-1, 16*5*5) of NCHW)
    F1 = np.zeros((5, 16 * 5, 120), np.float32)
    for h in range(5):
        for oc in range(16):
            for w in range(5):
                F1[h, oc * 5 + w, :] = wf1[:, oc * 25 + h * 5 + w]

    as_j = lambda a: jnp.asarray(a, jnp.float32)
    return {
        "T1": as_j(T1), "B1": as_j(B1), "EH1": as_j(EH1), "SW1": as_j(SW1),
        "T2": as_j(T2), "B2": as_j(B2), "EH2": as_j(EH2), "SW2": as_j(SW2),
        "F1": as_j(F1), "BF1": as_j(bf1[None, :]),
        "W2T": as_j(wf2.T), "BF2": as_j(bf2[None, :]),
        "W3T": as_j(wf3.T), "BF3": as_j(bf3[None, :]),
    }


# ---------------------------------------------------------------------------
# Forward pass (single fused pallas_call, grid over batch)
# ---------------------------------------------------------------------------

@jax.jit
def cnn_forward(packed, x_nchw):
    assert x_nchw.shape[1:] == (1, 32, 32), x_nchw.shape
    N = x_nchw.shape[0]
    x = x_nchw.reshape(N, 32, 32).astype(jnp.float32)

    def full(rank):  # whole-array block, same block for every grid step
        return lambda n: (0,) * rank

    in_specs = [
        pl.BlockSpec((1, 32, 32), lambda n: (n, 0, 0)),      # image
        pl.BlockSpec(packed["T1"].shape, full(3)),
        pl.BlockSpec(packed["B1"].shape, full(2)),
        pl.BlockSpec(packed["EH1"].shape, full(3)),
        pl.BlockSpec(packed["SW1"].shape, full(3)),
        pl.BlockSpec(packed["T2"].shape, full(3)),
        pl.BlockSpec(packed["B2"].shape, full(2)),
        pl.BlockSpec(packed["EH2"].shape, full(3)),
        pl.BlockSpec(packed["SW2"].shape, full(3)),
        pl.BlockSpec(packed["F1"].shape, full(3)),
        pl.BlockSpec(packed["BF1"].shape, full(2)),
        pl.BlockSpec(packed["W2T"].shape, full(2)),
        pl.BlockSpec(packed["BF2"].shape, full(2)),
        pl.BlockSpec(packed["W3T"].shape, full(2)),
        pl.BlockSpec(packed["BF3"].shape, full(2)),
    ]

    grid_spec = pltpu.PrefetchScalarGridSpec(
        num_scalar_prefetch=0,
        grid=(N,),
        in_specs=in_specs,
        out_specs=pl.BlockSpec((1, 1, 10), lambda n: (n, 0, 0)),
        scratch_shapes=[
            pltpu.VMEM((14, 6 * 14), jnp.float32),   # pool1 activations
            pltpu.VMEM((5, 16 * 5), jnp.float32),    # pool2 activations
        ],
    )

    out = pl.pallas_call(
        _lenet_kernel,
        out_shape=jax.ShapeDtypeStruct((N, 1, 10), jnp.float32),
        grid_spec=grid_spec,
        compiler_params=pltpu.CompilerParams(
            dimension_semantics=("parallel",)),
    )(x, packed["T1"], packed["B1"], packed["EH1"], packed["SW1"],
      packed["T2"], packed["B2"], packed["EH2"], packed["SW2"],
      packed["F1"], packed["BF1"], packed["W2T"], packed["BF2"],
      packed["W3T"], packed["BF3"])
    return out.reshape(N, 10)


# ---------------------------------------------------------------------------
# Pure-JAX reference (same math as the PyTorch module) for a sanity check
# ---------------------------------------------------------------------------

def _im2col(x_nhwc, kh, kw):
    N, H, W, C = x_nhwc.shape
    Ho, Wo = H - kh + 1, W - kw + 1
    cols = []
    for i in range(kh):
        for j in range(kw):
            cols.append(x_nhwc[:, i:i + Ho, j:j + Wo, :])
    patches = jnp.stack(cols, axis=-2)              # (N, Ho, Wo, kh*kw, C)
    return patches.reshape(N * Ho * Wo, kh * kw * C), (N, Ho, Wo)


def cnn_forward_ref(params, x_nchw):
    def conv(x_nhwc, w_oihw, b):
        OC, IC, KH, KW = w_oihw.shape
        patches, (N, Ho, Wo) = _im2col(x_nhwc, KH, KW)
        w_mat = jnp.transpose(w_oihw, (2, 3, 1, 0)).reshape(KH * KW * IC, OC)
        return (patches @ w_mat + b).reshape(N, Ho, Wo, OC)

    def pool(x):
        return jnp.max(
            jnp.stack([x[:, 0::2, 0::2, :], x[:, 0::2, 1::2, :],
                       x[:, 1::2, 0::2, :], x[:, 1::2, 1::2, :]], 0), axis=0)

    x = jnp.transpose(x_nchw, (0, 2, 3, 1))
    x = pool(jax.nn.relu(conv(x, params["conv1_w"], params["conv1_b"])))
    x = pool(jax.nn.relu(conv(x, params["conv2_w"], params["conv2_b"])))
    N = x.shape[0]
    x = jnp.transpose(x, (0, 3, 1, 2)).reshape(N, 400)
    x = jax.nn.relu(x @ params["fc1_w"].T + params["fc1_b"])
    x = jax.nn.relu(x @ params["fc2_w"].T + params["fc2_b"])
    return x @ params["fc3_w"].T + params["fc3_b"]


if __name__ == "__main__":
    key = jax.random.PRNGKey(0)
    pkey, xkey = jax.random.split(key)
    params = init_params(pkey)
    packed = pack_params(params)

    # batch=2, 1 channel, 32x32 spatial (implied by fc1 = 16*5*5)
    x = jax.random.normal(xkey, (2, 1, 32, 32), dtype=jnp.float32)

    out = jax.block_until_ready(cnn_forward(packed, x))
    assert out.shape == (2, 10), out.shape

    ref = jax.block_until_ready(cnn_forward_ref(params, x))
    assert jnp.allclose(out, ref, atol=1e-3, rtol=1e-3), "mismatch vs reference"

    print("KERNEL_OK")
</pallas_src>

<mosaic_0001>
module attributes {stable_mosaic.version = 11 : i64} {
  func.func @_lenet_kernel(%arg0: i32, %arg1: memref<1x32x32xf32, #tpu.memory_space<vmem>>, %arg2: memref<5x32x168xf32, #tpu.memory_space<vmem>>, %arg3: memref<1x168xf32, #tpu.memory_space<vmem>>, %arg4: memref<2x14x28xf32, #tpu.memory_space<vmem>>, %arg5: memref<2x168x84xf32, #tpu.memory_space<vmem>>, %arg6: memref<5x84x160xf32, #tpu.memory_space<vmem>>, %arg7: memref<1x160xf32, #tpu.memory_space<vmem>>, %arg8: memref<2x5x10xf32, #tpu.memory_space<vmem>>, %arg9: memref<2x160x80xf32, #tpu.memory_space<vmem>>, %arg10: memref<5x80x120xf32, #tpu.memory_space<vmem>>, %arg11: memref<1x120xf32, #tpu.memory_space<vmem>>, %arg12: memref<120x84xf32, #tpu.memory_space<vmem>>, %arg13: memref<1x84xf32, #tpu.memory_space<vmem>>, %arg14: memref<84x10xf32, #tpu.memory_space<vmem>>, %arg15: memref<1x10xf32, #tpu.memory_space<vmem>>, %arg16: memref<1x1x10xf32, #tpu.memory_space<vmem>>, %arg17: memref<14x84xf32, #tpu.memory_space<vmem>>, %arg18: memref<5x80xf32, #tpu.memory_space<vmem>>) attributes {dimension_semantics = [#tpu.dimension_semantics<parallel>], iteration_bounds = array<i64: 2>, scalar_prefetch = 0 : i64, scratch_operands = 2 : i64, tpu.core_type = #tpu.core_type<tc>, window_params = [{transform_indices = @transform_0, window_bounds = array<i64: 1, 32, 32>}, {pipeline_mode = #tpu.pipeline_mode<synchronous>, transform_indices = @transform_1, window_bounds = array<i64: 5, 32, 168>}, {pipeline_mode = #tpu.pipeline_mode<synchronous>, transform_indices = @transform_2, window_bounds = array<i64: 1, 168>}, {pipeline_mode = #tpu.pipeline_mode<synchronous>, transform_indices = @transform_3, window_bounds = array<i64: 2, 14, 28>}, {pipeline_mode = #tpu.pipeline_mode<synchronous>, transform_indices = @transform_4, window_bounds = array<i64: 2, 168, 84>}, {pipeline_mode = #tpu.pipeline_mode<synchronous>, transform_indices = @transform_5, window_bounds = array<i64: 5, 84, 160>}, {pipeline_mode = #tpu.pipeline_mode<synchronous>, transform_indices = @transform_6, window_bounds = array<i64: 1, 160>}, {pipeline_mode = #tpu.pipeline_mode<synchronous>, transform_indices = @transform_7, window_bounds = array<i64: 2, 5, 10>}, {pipeline_mode = #tpu.pipeline_mode<synchronous>, transform_indices = @transform_8, window_bounds = array<i64: 2, 160, 80>}, {pipeline_mode = #tpu.pipeline_mode<synchronous>, transform_indices = @transform_9, window_bounds = array<i64: 5, 80, 120>}, {pipeline_mode = #tpu.pipeline_mode<synchronous>, transform_indices = @transform_10, window_bounds = array<i64: 1, 120>}, {pipeline_mode = #tpu.pipeline_mode<synchronous>, transform_indices = @transform_11, window_bounds = array<i64: 120, 84>}, {pipeline_mode = #tpu.pipeline_mode<synchronous>, transform_indices = @transform_12, window_bounds = array<i64: 1, 84>}, {pipeline_mode = #tpu.pipeline_mode<synchronous>, transform_indices = @transform_13, window_bounds = array<i64: 84, 10>}, {pipeline_mode = #tpu.pipeline_mode<synchronous>, transform_indices = @transform_14, window_bounds = array<i64: 1, 10>}, {transform_indices = @transform_15, window_bounds = array<i64: 1, 1, 10>}]} {
    %c0 = arith.constant 0 : index
    %c0_0 = arith.constant 0 : index
    %c0_1 = arith.constant 0 : index
    %0 = vector.load %arg1[%c0, %c0_0, %c0_1] : memref<1x32x32xf32, #tpu.memory_space<vmem>>, vector<1x28x32xf32>
    %1 = vector.shape_cast %0 : vector<1x28x32xf32> to vector<28x32xf32>
    %c0_2 = arith.constant 0 : index
    %c0_3 = arith.constant 0 : index
    %c0_4 = arith.constant 0 : index
    %2 = vector.load %arg2[%c0_2, %c0_3, %c0_4] : memref<5x32x168xf32, #tpu.memory_space<vmem>>, vector<1x32x168xf32>
    %3 = vector.shape_cast %2 : vector<1x32x168xf32> to vector<32x168xf32>
    %cst = arith.constant dense<0.000000e+00> : vector<28x168xf32>
    %4 = tpu.matmul %1, %3, %cst {dimension_numbers = #tpu.dot_dimension_numbers<[1], [0], [0], [1], [0, 0, 1, 1], [], []>} : vector<28x32xf32>, vector<32x168xf32>, vector<28x168xf32> -> vector<28x168xf32>
    %c0_5 = arith.constant 0 : index
    %c1 = arith.constant 1 : index
    %c0_6 = arith.constant 0 : index
    %5 = vector.load %arg1[%c0_5, %c1, %c0_6] : memref<1x32x32xf32, #tpu.memory_space<vmem>>, vector<1x28x32xf32>
    %6 = vector.shape_cast %5 : vector<1x28x32xf32> to vector<28x32xf32>
    %c1_7 = arith.constant 1 : index
    %c0_8 = arith.constant 0 : index
    %c0_9 = arith.constant 0 : index
    %7 = vector.load %arg2[%c1_7, %c0_8, %c0_9] : memref<5x32x168xf32, #tpu.memory_space<vmem>>, vector<1x32x168xf32>
    %8 = vector.shape_cast %7 : vector<1x32x168xf32> to vector<32x168xf32>
    %cst_10 = arith.constant dense<0.000000e+00> : vector<28x168xf32>
    %9 = tpu.matmul %6, %8, %cst_10 {dimension_numbers = #tpu.dot_dimension_numbers<[1], [0], [0], [1], [0, 0, 1, 1], [], []>} : vector<28x32xf32>, vector<32x168xf32>, vector<28x168xf32> -> vector<28x168xf32>
    %10 = arith.addf %4, %9 : vector<28x168xf32>
    %c0_11 = arith.constant 0 : index
    %c2 = arith.constant 2 : index
    %c0_12 = arith.constant 0 : index
    %11 = vector.load %arg1[%c0_11, %c2, %c0_12] : memref<1x32x32xf32, #tpu.memory_space<vmem>>, vector<1x28x32xf32>
    %12 = vector.shape_cast %11 : vector<1x28x32xf32> to vector<28x32xf32>
    %c2_13 = arith.constant 2 : index
    %c0_14 = arith.constant 0 : index
    %c0_15 = arith.constant 0 : index
    %13 = vector.load %arg2[%c2_13, %c0_14, %c0_15] : memref<5x32x168xf32, #tpu.memory_space<vmem>>, vector<1x32x168xf32>
    %14 = vector.shape_cast %13 : vector<1x32x168xf32> to vector<32x168xf32>
    %cst_16 = arith.constant dense<0.000000e+00> : vector<28x168xf32>
    %15 = tpu.matmul %12, %14, %cst_16 {dimension_numbers = #tpu.dot_dimension_numbers<[1], [0], [0], [1], [0, 0, 1, 1], [], []>} : vector<28x32xf32>, vector<32x168xf32>, vector<28x168xf32> -> vector<28x168xf32>
    %16 = arith.addf %10, %15 : vector<28x168xf32>
    %c0_17 = arith.constant 0 : index
    %c3 = arith.constant 3 : index
    %c0_18 = arith.constant 0 : index
    %17 = vector.load %arg1[%c0_17, %c3, %c0_18] : memref<1x32x32xf32, #tpu.memory_space<vmem>>, vector<1x28x32xf32>
    %18 = vector.shape_cast %17 : vector<1x28x32xf32> to vector<28x32xf32>
    %c3_19 = arith.constant 3 : index
    %c0_20 = arith.constant 0 : index
    %c0_21 = arith.constant 0 : index
    %19 = vector.load %arg2[%c3_19, %c0_20, %c0_21] : memref<5x32x168xf32, #tpu.memory_space<vmem>>, vector<1x32x168xf32>
    %20 = vector.shape_cast %19 : vector<1x32x168xf32> to vector<32x168xf32>
    %cst_22 = arith.constant dense<0.000000e+00> : vector<28x168xf32>
    %21 = tpu.matmul %18, %20, %cst_22 {dimension_numbers = #tpu.dot_dimension_numbers<[1], [0], [0], [1], [0, 0, 1, 1], [], []>} : vector<28x32xf32>, vector<32x168xf32>, vector<28x168xf32> -> vector<28x168xf32>
    %22 = arith.addf %16, %21 : vector<28x168xf32>
    %c0_23 = arith.constant 0 : index
    %c4 = arith.constant 4 : index
    %c0_24 = arith.constant 0 : index
    %23 = vector.load %arg1[%c0_23, %c4, %c0_24] : memref<1x32x32xf32, #tpu.memory_space<vmem>>, vector<1x28x32xf32>
    %24 = vector.shape_cast %23 : vector<1x28x32xf32> to vector<28x32xf32>
    %c4_25 = arith.constant 4 : index
    %c0_26 = arith.constant 0 : index
    %c0_27 = arith.constant 0 : index
    %25 = vector.load %arg2[%c4_25, %c0_26, %c0_27] : memref<5x32x168xf32, #tpu.memory_space<vmem>>, vector<1x32x168xf32>
    %26 = vector.shape_cast %25 : vector<1x32x168xf32> to vector<32x168xf32>
    %cst_28 = arith.constant dense<0.000000e+00> : vector<28x168xf32>
    %27 = tpu.matmul %24, %26, %cst_28 {dimension_numbers = #tpu.dot_dimension_numbers<[1], [0], [0], [1], [0, 0, 1, 1], [], []>} : vector<28x32xf32>, vector<32x168xf32>, vector<28x168xf32> -> vector<28x168xf32>
    %28 = arith.addf %22, %27 : vector<28x168xf32>
    %c0_29 = arith.constant 0 : index
    %c0_30 = arith.constant 0 : index
    %29 = vector.load %arg3[%c0_29, %c0_30] : memref<1x168xf32, #tpu.memory_space<vmem>>, vector<1x168xf32>
    %30 = vector.broadcast %29 : vector<1x168xf32> to vector<28x168xf32>
    %31 = arith.addf %28, %30 : vector<28x168xf32>
    %cst_31 = arith.constant 0.000000e+00 : f32
    %32 = vector.broadcast %cst_31 : f32 to vector<28x168xf32>
    %33 = arith.maximumf %31, %32 : vector<28x168xf32>
    %c0_32 = arith.constant 0 : index
    %c0_33 = arith.constant 0 : index
    %c0_34 = arith.constant 0 : index
    %34 = vector.load %arg4[%c0_32, %c0_33, %c0_34] : memref<2x14x28xf32, #tpu.memory_space<vmem>>, vector<1x14x28xf32>
    %35 = vector.shape_cast %34 : vector<1x14x28xf32> to vector<14x28xf32>
    %cst_35 = arith.constant dense<0.000000e+00> : vector<14x168xf32>
    %36 = tpu.matmul %35, %33, %cst_35 {dimension_numbers = #tpu.dot_dimension_numbers<[1], [0], [0], [1], [0, 0, 1, 1], [], []>} : vector<14x28xf32>, vector<28x168xf32>, vector<14x168xf32> -> vector<14x168xf32>
    %c1_36 = arith.constant 1 : index
    %c0_37 = arith.constant 0 : index
    %c0_38 = arith.constant 0 : index
    %37 = vector.load %arg4[%c1_36, %c0_37, %c0_38] : memref<2x14x28xf32, #tpu.memory_space<vmem>>, vector<1x14x28xf32>
    %38 = vector.shape_cast %37 : vector<1x14x28xf32> to vector<14x28xf32>
    %cst_39 = arith.constant dense<0.000000e+00> : vector<14x168xf32>
    %39 = tpu.matmul %38, %33, %cst_39 {dimension_numbers = #tpu.dot_dimension_numbers<[1], [0], [0], [1], [0, 0, 1, 1], [], []>} : vector<14x28xf32>, vector<28x168xf32>, vector<14x168xf32> -> vector<14x168xf32>
    %40 = arith.maximumf %36, %39 : vector<14x168xf32>
    %c0_40 = arith.constant 0 : index
    %c0_41 = arith.constant 0 : index
    %c0_42 = arith.constant 0 : index
    %41 = vector.load %arg5[%c0_40, %c0_41, %c0_42] : memref<2x168x84xf32, #tpu.memory_space<vmem>>, vector<1x168x84xf32>
    %42 = vector.shape_cast %41 : vector<1x168x84xf32> to vector<168x84xf32>
    %cst_43 = arith.constant dense<0.000000e+00> : vector<14x84xf32>
    %43 = tpu.matmul %40, %42, %cst_43 {dimension_numbers = #tpu.dot_dimension_numbers<[1], [0], [0], [1], [0, 0, 1, 1], [], []>} : vector<14x168xf32>, vector<168x84xf32>, vector<14x84xf32> -> vector<14x84xf32>
    %c1_44 = arith.constant 1 : index
    %c0_45 = arith.constant 0 : index
    %c0_46 = arith.constant 0 : index
    %44 = vector.load %arg5[%c1_44, %c0_45, %c0_46] : memref<2x168x84xf32, #tpu.memory_space<vmem>>, vector<1x168x84xf32>
    %45 = vector.shape_cast %44 : vector<1x168x84xf32> to vector<168x84xf32>
    %cst_47 = arith.constant dense<0.000000e+00> : vector<14x84xf32>
    %46 = tpu.matmul %40, %45, %cst_47 {dimension_numbers = #tpu.dot_dimension_numbers<[1], [0], [0], [1], [0, 0, 1, 1], [], []>} : vector<14x168xf32>, vector<168x84xf32>, vector<14x84xf32> -> vector<14x84xf32>
    %47 = arith.maximumf %43, %46 : vector<14x84xf32>
    %c0_48 = arith.constant 0 : index
    %c0_49 = arith.constant 0 : index
    %48 = vector.load %arg17[%c0_48, %c0_49] : memref<14x84xf32, #tpu.memory_space<vmem>>, vector<14x84xf32>
    tpu.vector_store %arg17[%c0_48, %c0_49], %47 {strides = array<i32>} : memref<14x84xf32, #tpu.memory_space<vmem>>, vector<14x84xf32>,
    %c0_50 = arith.constant 0 : index
    %c0_51 = arith.constant 0 : index
    %49 = vector.load %arg17[%c0_50, %c0_51] : memref<14x84xf32, #tpu.memory_space<vmem>>, vector<10x84xf32>
    %c0_52 = arith.constant 0 : index
    %c0_53 = arith.constant 0 : index
    %c0_54 = arith.constant 0 : index
    %50 = vector.load %arg6[%c0_52, %c0_53, %c0_54] : memref<5x84x160xf32, #tpu.memory_space<vmem>>, vector<1x84x160xf32>
    %51 = vector.shape_cast %50 : vector<1x84x160xf32> to vector<84x160xf32>
    %cst_55 = arith.constant dense<0.000000e+00> : vector<10x160xf32>
    %52 = tpu.matmul %49, %51, %cst_55 {dimension_numbers = #tpu.dot_dimension_numbers<[1], [0], [0], [1], [0, 0, 1, 1], [], []>} : vector<10x84xf32>, vector<84x160xf32>, vector<10x160xf32> -> vector<10x160xf32>
    %c1_56 = arith.constant 1 : index
    %c0_57 = arith.constant 0 : index
    %53 = vector.load %arg17[%c1_56, %c0_57] : memref<14x84xf32, #tpu.memory_space<vmem>>, vector<10x84xf32>
    %c1_58 = arith.constant 1 : index
    %c0_59 = arith.constant 0 : index
    %c0_60 = arith.constant 0 : index
    %54 = vector.load %arg6[%c1_58, %c0_59, %c0_60] : memref<5x84x160xf32, #tpu.memory_space<vmem>>, vector<1x84x160xf32>
    %55 = vector.shape_cast %54 : vector<1x84x160xf32> to vector<84x160xf32>
    %cst_61 = arith.constant dense<0.000000e+00> : vector<10x160xf32>
    %56 = tpu.matmul %53, %55, %cst_61 {dimension_numbers = #tpu.dot_dimension_numbers<[1], [0], [0], [1], [0, 0, 1, 1], [], []>} : vector<10x84xf32>, vector<84x160xf32>, vector<10x160xf32> -> vector<10x160xf32>
    %57 = arith.addf %52, %56 : vector<10x160xf32>
    %c2_62 = arith.constant 2 : index
    %c0_63 = arith.constant 0 : index
    %58 = vector.load %arg17[%c2_62, %c0_63] : memref<14x84xf32, #tpu.memory_space<vmem>>, vector<10x84xf32>
    %c2_64 = arith.constant 2 : index
    %c0_65 = arith.constant 0 : index
    %c0_66 = arith.constant 0 : index
    %59 = vector.load %arg6[%c2_64, %c0_65, %c0_66] : memref<5x84x160xf32, #tpu.memory_space<vmem>>, vector<1x84x160xf32>
    %60 = vector.shape_cast %59 : vector<1x84x160xf32> to vector<84x160xf32>
    %cst_67 = arith.constant dense<0.000000e+00> : vector<10x160xf32>
    %61 = tpu.matmul %58, %60, %cst_67 {dimension_numbers = #tpu.dot_dimension_numbers<[1], [0], [0], [1], [0, 0, 1, 1], [], []>} : vector<10x84xf32>, vector<84x160xf32>, vector<10x160xf32> -> vector<10x160xf32>
    %62 = arith.addf %57, %61 : vector<10x160xf32>
    %c3_68 = arith.constant 3 : index
    %c0_69 = arith.constant 0 : index
    %63 = vector.load %arg17[%c3_68, %c0_69] : memref<14x84xf32, #tpu.memory_space<vmem>>, vector<10x84xf32>
    %c3_70 = arith.constant 3 : index
    %c0_71 = arith.constant 0 : index
    %c0_72 = arith.constant 0 : index
    %64 = vector.load %arg6[%c3_70, %c0_71, %c0_72] : memref<5x84x160xf32, #tpu.memory_space<vmem>>, vector<1x84x160xf32>
    %65 = vector.shape_cast %64 : vector<1x84x160xf32> to vector<84x160xf32>
    %cst_73 = arith.constant dense<0.000000e+00> : vector<10x160xf32>
    %66 = tpu.matmul %63, %65, %cst_73 {dimension_numbers = #tpu.dot_dimension_numbers<[1], [0], [0], [1], [0, 0, 1, 1], [], []>} : vector<10x84xf32>, vector<84x160xf32>, vector<10x160xf32> -> vector<10x160xf32>
    %67 = arith.addf %62, %66 : vector<10x160xf32>
    %c4_74 = arith.constant 4 : index
    %c0_75 = arith.constant 0 : index
    %68 = vector.load %arg17[%c4_74, %c0_75] : memref<14x84xf32, #tpu.memory_space<vmem>>, vector<10x84xf32>
    %c4_76 = arith.constant 4 : index
    %c0_77 = arith.constant 0 : index
    %c0_78 = arith.constant 0 : index
    %69 = vector.load %arg6[%c4_76, %c0_77, %c0_78] : memref<5x84x160xf32, #tpu.memory_space<vmem>>, vector<1x84x160xf32>
    %70 = vector.shape_cast %69 : vector<1x84x160xf32> to vector<84x160xf32>
    %cst_79 = arith.constant dense<0.000000e+00> : vector<10x160xf32>
    %71 = tpu.matmul %68, %70, %cst_79 {dimension_numbers = #tpu.dot_dimension_numbers<[1], [0], [0], [1], [0, 0, 1, 1], [], []>} : vector<10x84xf32>, vector<84x160xf32>, vector<10x160xf32> -> vector<10x160xf32>
    %72 = arith.addf %67, %71 : vector<10x160xf32>
    %c0_80 = arith.constant 0 : index
    %c0_81 = arith.constant 0 : index
    %73 = vector.load %arg7[%c0_80, %c0_81] : memref<1x160xf32, #tpu.memory_space<vmem>>, vector<1x160xf32>
    %74 = vector.broadcast %73 : vector<1x160xf32> to vector<10x160xf32>
    %75 = arith.addf %72, %74 : vector<10x160xf32>
    %cst_82 = arith.constant 0.000000e+00 : f32
    %76 = vector.broadcast %cst_82 : f32 to vector<10x160xf32>
    %77 = arith.maximumf %75, %76 : vector<10x160xf32>
    %c0_83 = arith.constant 0 : index
    %c0_84 = arith.constant 0 : index
    %c0_85 = arith.constant 0 : index
    %78 = vector.load %arg8[%c0_83, %c0_84, %c0_85] : memref<2x5x10xf32, #tpu.memory_space<vmem>>, vector<1x5x10xf32>
    %79 = vector.shape_cast %78 : vector<1x5x10xf32> to vector<5x10xf32>
    %cst_86 = arith.constant dense<0.000000e+00> : vector<5x160xf32>
    %80 = tpu.matmul %79, %77, %cst_86 {dimension_numbers = #tpu.dot_dimension_numbers<[1], [0], [0], [1], [0, 0, 1, 1], [], []>} : vector<5x10xf32>, vector<10x160xf32>, vector<5x160xf32> -> vector<5x160xf32>
    %c1_87 = arith.constant 1 : index
    %c0_88 = arith.constant 0 : index
    %c0_89 = arith.constant 0 : index
    %81 = vector.load %arg8[%c1_87, %c0_88, %c0_89] : memref<2x5x10xf32, #tpu.memory_space<vmem>>, vector<1x5x10xf32>
    %82 = vector.shape_cast %81 : vector<1x5x10xf32> to vector<5x10xf32>
    %cst_90 = arith.constant dense<0.000000e+00> : vector<5x160xf32>
    %83 = tpu.matmul %82, %77, %cst_90 {dimension_numbers = #tpu.dot_dimension_numbers<[1], [0], [0], [1], [0, 0, 1, 1], [], []>} : vector<5x10xf32>, vector<10x160xf32>, vector<5x160xf32> -> vector<5x160xf32>
    %84 = arith.maximumf %80, %83 : vector<5x160xf32>
    %c0_91 = arith.constant 0 : index
    %c0_92 = arith.constant 0 : index
    %c0_93 = arith.constant 0 : index
    %85 = vector.load %arg9[%c0_91, %c0_92, %c0_93] : memref<2x160x80xf32, #tpu.memory_space<vmem>>, vector<1x160x80xf32>
    %86 = vector.shape_cast %85 : vector<1x160x80xf32> to vector<160x80xf32>
    %cst_94 = arith.constant dense<0.000000e+00> : vector<5x80xf32>
    %87 = tpu.matmul %84, %86, %cst_94 {dimension_numbers = #tpu.dot_dimension_numbers<[1], [0], [0], [1], [0, 0, 1, 1], [], []>} : vector<5x160xf32>, vector<160x80xf32>, vector<5x80xf32> -> vector<5x80xf32>
    %c1_95 = arith.constant 1 : index
    %c0_96 = arith.constant 0 : index
    %c0_97 = arith.constant 0 : index
    %88 = vector.load %arg9[%c1_95, %c0_96, %c0_97] : memref<2x160x80xf32, #tpu.memory_space<vmem>>, vector<1x160x80xf32>
    %89 = vector.shape_cast %88 : vector<1x160x80xf32> to vector<160x80xf32>
    %cst_98 = arith.constant dense<0.000000e+00> : vector<5x80xf32>
    %90 = tpu.matmul %84, %89, %cst_98 {dimension_numbers = #tpu.dot_dimension_numbers<[1], [0], [0], [1], [0, 0, 1, 1], [], []>} : vector<5x160xf32>, vector<160x80xf32>, vector<5x80xf32> -> vector<5x80xf32>
    %91 = arith.maximumf %87, %90 : vector<5x80xf32>
    %c0_99 = arith.constant 0 : index
    %c0_100 = arith.constant 0 : index
    %92 = vector.load %arg18[%c0_99, %c0_100] : memref<5x80xf32, #tpu.memory_space<vmem>>, vector<5x80xf32>
    tpu.vector_store %arg18[%c0_99, %c0_100], %91 {strides = array<i32>} : memref<5x80xf32, #tpu.memory_space<vmem>>, vector<5x80xf32>,
    %c0_101 = arith.constant 0 : index
    %c0_102 = arith.constant 0 : index
    %93 = vector.load %arg18[%c0_101, %c0_102] : memref<5x80xf32, #tpu.memory_space<vmem>>, vector<1x80xf32>
    %c0_103 = arith.constant 0 : index
    %c0_104 = arith.constant 0 : index
    %c0_105 = arith.constant 0 : index
    %94 = vector.load %arg10[%c0_103, %c0_104, %c0_105] : memref<5x80x120xf32, #tpu.memory_space<vmem>>, vector<1x80x120xf32>
    %95 = vector.shape_cast %94 : vector<1x80x120xf32> to vector<80x120xf32>
    %cst_106 = arith.constant dense<0.000000e+00> : vector<1x120xf32>
    %96 = tpu.matmul %93, %95, %cst_106 {dimension_numbers = #tpu.dot_dimension_numbers<[1], [0], [0], [1], [0, 0, 1, 1], [], []>} : vector<1x80xf32>, vector<80x120xf32>, vector<1x120xf32> -> vector<1x120xf32>
    %c1_107 = arith.constant 1 : index
    %c0_108 = arith.constant 0 : index
    %97 = vector.load %arg18[%c1_107, %c0_108] : memref<5x80xf32, #tpu.memory_space<vmem>>, vector<1x80xf32>
    %c1_109 = arith.constant 1 : index
    %c0_110 = arith.constant 0 : index
    %c0_111 = arith.constant 0 : index
    %98 = vector.load %arg10[%c1_109, %c0_110, %c0_111] : memref<5x80x120xf32, #tpu.memory_space<vmem>>, vector<1x80x120xf32>
    %99 = vector.shape_cast %98 : vector<1x80x120xf32> to vector<80x120xf32>
    %cst_112 = arith.constant dense<0.000000e+00> : vector<1x120xf32>
    %100 = tpu.matmul %97, %99, %cst_112 {dimension_numbers = #tpu.dot_dimension_numbers<[1], [0], [0], [1], [0, 0, 1, 1], [], []>} : vector<1x80xf32>, vector<80x120xf32>, vector<1x120xf32> -> vector<1x120xf32>
    %101 = arith.addf %96, %100 : vector<1x120xf32>
    %c2_113 = arith.constant 2 : index
    %c0_114 = arith.constant 0 : index
    %102 = vector.load %arg18[%c2_113, %c0_114] : memref<5x80xf32, #tpu.memory_space<vmem>>, vector<1x80xf32>
    %c2_115 = arith.constant 2 : index
    %c0_116 = arith.constant 0 : index
    %c0_117 = arith.constant 0 : index
    %103 = vector.load %arg10[%c2_115, %c0_116, %c0_117] : memref<5x80x120xf32, #tpu.memory_space<vmem>>, vector<1x80x120xf32>
    %104 = vector.shape_cast %103 : vector<1x80x120xf32> to vector<80x120xf32>
    %cst_118 = arith.constant dense<0.000000e+00> : vector<1x120xf32>
    %105 = tpu.matmul %102, %104, %cst_118 {dimension_numbers = #tpu.dot_dimension_numbers<[1], [0], [0], [1], [0, 0, 1, 1], [], []>} : vector<1x80xf32>, vector<80x120xf32>, vector<1x120xf32> -> vector<1x120xf32>
    %106 = arith.addf %101, %105 : vector<1x120xf32>
    %c3_119 = arith.constant 3 : index
    %c0_120 = arith.constant 0 : index
    %107 = vector.load %arg18[%c3_119, %c0_120] : memref<5x80xf32, #tpu.memory_space<vmem>>, vector<1x80xf32>
    %c3_121 = arith.constant 3 : index
    %c0_122 = arith.constant 0 : index
    %c0_123 = arith.constant 0 : index
    %108 = vector.load %arg10[%c3_121, %c0_122, %c0_123] : memref<5x80x120xf32, #tpu.memory_space<vmem>>, vector<1x80x120xf32>
    %109 = vector.shape_cast %108 : vector<1x80x120xf32> to vector<80x120xf32>
    %cst_124 = arith.constant dense<0.000000e+00> : vector<1x120xf32>
    %110 = tpu.matmul %107, %109, %cst_124 {dimension_numbers = #tpu.dot_dimension_numbers<[1], [0], [0], [1], [0, 0, 1, 1], [], []>} : vector<1x80xf32>, vector<80x120xf32>, vector<1x120xf32> -> vector<1x120xf32>
    %111 = arith.addf %106, %110 : vector<1x120xf32>
    %c4_125 = arith.constant 4 : index
    %c0_126 = arith.constant 0 : index
    %112 = vector.load %arg18[%c4_125, %c0_126] : memref<5x80xf32, #tpu.memory_space<vmem>>, vector<1x80xf32>
    %c4_127 = arith.constant 4 : index
    %c0_128 = arith.constant 0 : index
    %c0_129 = arith.constant 0 : index
    %113 = vector.load %arg10[%c4_127, %c0_128, %c0_129] : memref<5x80x120xf32, #tpu.memory_space<vmem>>, vector<1x80x120xf32>
    %114 = vector.shape_cast %113 : vector<1x80x120xf32> to vector<80x120xf32>
    %cst_130 = arith.constant dense<0.000000e+00> : vector<1x120xf32>
    %115 = tpu.matmul %112, %114, %cst_130 {dimension_numbers = #tpu.dot_dimension_numbers<[1], [0], [0], [1], [0, 0, 1, 1], [], []>} : vector<1x80xf32>, vector<80x120xf32>, vector<1x120xf32> -> vector<1x120xf32>
    %116 = arith.addf %111, %115 : vector<1x120xf32>
    %c0_131 = arith.constant 0 : index
    %c0_132 = arith.constant 0 : index
    %117 = vector.load %arg11[%c0_131, %c0_132] : memref<1x120xf32, #tpu.memory_space<vmem>>, vector<1x120xf32>
    %118 = arith.addf %116, %117 : vector<1x120xf32>
    %cst_133 = arith.constant 0.000000e+00 : f32
    %119 = vector.broadcast %cst_133 : f32 to vector<1x120xf32>
    %120 = arith.maximumf %118, %119 : vector<1x120xf32>
    %c0_134 = arith.constant 0 : index
    %c0_135 = arith.constant 0 : index
    %121 = vector.load %arg12[%c0_134, %c0_135] : memref<120x84xf32, #tpu.memory_space<vmem>>, vector<120x84xf32>
    %cst_136 = arith.constant dense<0.000000e+00> : vector<1x84xf32>
    %122 = tpu.matmul %120, %121, %cst_136 {dimension_numbers = #tpu.dot_dimension_numbers<[1], [0], [0], [1], [0, 0, 1, 1], [], []>} : vector<1x120xf32>, vector<120x84xf32>, vector<1x84xf32> -> vector<1x84xf32>
    %c0_137 = arith.constant 0 : index
    %c0_138 = arith.constant 0 : index
    %123 = vector.load %arg13[%c0_137, %c0_138] : memref<1x84xf32, #tpu.memory_space<vmem>>, vector<1x84xf32>
    %124 = arith.addf %122, %123 : vector<1x84xf32>
    %cst_139 = arith.constant 0.000000e+00 : f32
    %125 = vector.broadcast %cst_139 : f32 to vector<1x84xf32>
    %126 = arith.maximumf %124, %125 : vector<1x84xf32>
    %c0_140 = arith.constant 0 : index
    %c0_141 = arith.constant 0 : index
    %127 = vector.load %arg14[%c0_140, %c0_141] : memref<84x10xf32, #tpu.memory_space<vmem>>, vector<84x10xf32>
    %cst_142 = arith.constant dense<0.000000e+00> : vector<1x10xf32>
    %128 = tpu.matmul %126, %127, %cst_142 {dimension_numbers = #tpu.dot_dimension_numbers<[1], [0], [0], [1], [0, 0, 1, 1], [], []>} : vector<1x84xf32>, vector<84x10xf32>, vector<1x10xf32> -> vector<1x10xf32>
    %c0_143 = arith.constant 0 : index
    %c0_144 = arith.constant 0 : index
    %129 = vector.load %arg15[%c0_143, %c0_144] : memref<1x10xf32, #tpu.memory_space<vmem>>, vector<1x10xf32>
    %130 = arith.addf %128, %129 : vector<1x10xf32>
    %c0_145 = arith.constant 0 : index
    %c0_146 = arith.constant 0 : index
    %c0_147 = arith.constant 0 : index
    %131 = vector.load %arg16[%c0_145, %c0_146, %c0_147] : memref<1x1x10xf32, #tpu.memory_space<vmem>>, vector<1x1x10xf32>
    %132 = vector.shape_cast %131 : vector<1x1x10xf32> to vector<1x10xf32>
    %133 = vector.shape_cast %130 : vector<1x10xf32> to vector<1x1x10xf32>
    tpu.vector_store %arg16[%c0_145, %c0_146, %c0_147], %133 {strides = array<i32>} : memref<1x1x10xf32, #tpu.memory_space<vmem>>, vector<1x1x10xf32>,
    return
  }
  func.func @transform_0(%arg0: i32) -> (i32, i32, i32) {
    %c0_i32 = arith.constant 0 : i32
    %c0_i32_0 = arith.constant 0 : i32
    %c0_i32_1 = arith.constant 0 : i32
    return %arg0, %c0_i32, %c0_i32_0 : i32, i32, i32
  }
  func.func @transform_1(%arg0: i32) -> (i32, i32, i32) {
    %c0_i32 = arith.constant 0 : i32
    %c0_i32_0 = arith.constant 0 : i32
    %c0_i32_1 = arith.constant 0 : i32
    %c0_i32_2 = arith.constant 0 : i32
    return %c0_i32, %c0_i32_0, %c0_i32_1 : i32, i32, i32
  }
  func.func @transform_2(%arg0: i32) -> (i32, i32) {
    %c0_i32 = arith.constant 0 : i32
    %c0_i32_0 = arith.constant 0 : i32
    %c0_i32_1 = arith.constant 0 : i32
    return %c0_i32, %c0_i32_0 : i32, i32
  }
  func.func @transform_3(%arg0: i32) -> (i32, i32, i32) {
    %c0_i32 = arith.constant 0 : i32
    %c0_i32_0 = arith.constant 0 : i32
    %c0_i32_1 = arith.constant 0 : i32
    %c0_i32_2 = arith.constant 0 : i32
    return %c0_i32, %c0_i32_0, %c0_i32_1 : i32, i32, i32
  }
  func.func @transform_4(%arg0: i32) -> (i32, i32, i32) {
    %c0_i32 = arith.constant 0 : i32
    %c0_i32_0 = arith.constant 0 : i32
    %c0_i32_1 = arith.constant 0 : i32
    %c0_i32_2 = arith.constant 0 : i32
    return %c0_i32, %c0_i32_0, %c0_i32_1 : i32, i32, i32
  }
  func.func @transform_5(%arg0: i32) -> (i32, i32, i32) {
    %c0_i32 = arith.constant 0 : i32
    %c0_i32_0 = arith.constant 0 : i32
    %c0_i32_1 = arith.constant 0 : i32
    %c0_i32_2 = arith.constant 0 : i32
    return %c0_i32, %c0_i32_0, %c0_i32_1 : i32, i32, i32
  }
  func.func @transform_6(%arg0: i32) -> (i32, i32) {
    %c0_i32 = arith.constant 0 : i32
    %c0_i32_0 = arith.constant 0 : i32
    %c0_i32_1 = arith.constant 0 : i32
    return %c0_i32, %c0_i32_0 : i32, i32
  }
  func.func @transform_7(%arg0: i32) -> (i32, i32, i32) {
    %c0_i32 = arith.constant 0 : i32
    %c0_i32_0 = arith.constant 0 : i32
    %c0_i32_1 = arith.constant 0 : i32
    %c0_i32_2 = arith.constant 0 : i32
    return %c0_i32, %c0_i32_0, %c0_i32_1 : i32, i32, i32
  }
  func.func @transform_8(%arg0: i32) -> (i32, i32, i32) {
    %c0_i32 = arith.constant 0 : i32
    %c0_i32_0 = arith.constant 0 : i32
    %c0_i32_1 = arith.constant 0 : i32
    %c0_i32_2 = arith.constant 0 : i32
    return %c0_i32, %c0_i32_0, %c0_i32_1 : i32, i32, i32
  }
  func.func @transform_9(%arg0: i32) -> (i32, i32, i32) {
    %c0_i32 = arith.constant 0 : i32
    %c0_i32_0 = arith.constant 0 : i32
    %c0_i32_1 = arith.constant 0 : i32
    %c0_i32_2 = arith.constant 0 : i32
    return %c0_i32, %c0_i32_0, %c0_i32_1 : i32, i32, i32
  }
  func.func @transform_10(%arg0: i32) -> (i32, i32) {
    %c0_i32 = arith.constant 0 : i32
    %c0_i32_0 = arith.constant 0 : i32
    %c0_i32_1 = arith.constant 0 : i32
    return %c0_i32, %c0_i32_0 : i32, i32
  }
  func.func @transform_11(%arg0: i32) -> (i32, i32) {
    %c0_i32 = arith.constant 0 : i32
    %c0_i32_0 = arith.constant 0 : i32
    %c0_i32_1 = arith.constant 0 : i32
    return %c0_i32, %c0_i32_0 : i32, i32
  }
  func.func @transform_12(%arg0: i32) -> (i32, i32) {
    %c0_i32 = arith.constant 0 : i32
    %c0_i32_0 = arith.constant 0 : i32
    %c0_i32_1 = arith.constant 0 : i32
    return %c0_i32, %c0_i32_0 : i32, i32
  }
  func.func @transform_13(%arg0: i32) -> (i32, i32) {
    %c0_i32 = arith.constant 0 : i32
    %c0_i32_0 = arith.constant 0 : i32
    %c0_i32_1 = arith.constant 0 : i32
    return %c0_i32, %c0_i32_0 : i32, i32
  }
  func.func @transform_14(%arg0: i32) -> (i32, i32) {
    %c0_i32 = arith.constant 0 : i32
    %c0_i32_0 = arith.constant 0 : i32
    %c0_i32_1 = arith.constant 0 : i32
    return %c0_i32, %c0_i32_0 : i32, i32
  }
  func.func @transform_15(%arg0: i32) -> (i32, i32, i32) {
    %c0_i32 = arith.constant 0 : i32
    %c0_i32_0 = arith.constant 0 : i32
    %c0_i32_1 = arith.constant 0 : i32
    return %arg0, %c0_i32, %c0_i32_0 : i32, i32, i32
  }
}

</mosaic_0001>

<llo_original>
// kernel: cnn_forward.1
$region0: #{cnn_forward.1}
  #allocation0 [shape = 'u32[]', space=smem, size = 0x4, offset = 0x4, fixed_abs, tag = 'smem constant byte address 0x4 - core index']
  #allocation1 [shape = 'u32[144,128]{1,0:T(1,128)}', space=vmem, size = 0x12000, scoped, tag = 'internal scratch']
  #allocation2 [shape = 'f32[14,84]{1,0:T(8,128)}', space=vmem, size = 0x2000, scoped, tag = 'scratch operand']
  #allocation3 [shape = 'f32[5,80]{1,0:T(8,128)}', space=vmem, size = 0x1000, scoped, tag = 'scratch operand']
  %s0 = inlined_call_operand.vmem [shape: f32[2,32,32], index: 0, kind: input, shape index: {}]
  %s1 = inlined_call_operand.vmem [shape: f32[5,32,168], index: 1, kind: input, shape index: {}]
  %s2 = inlined_call_operand.vmem [shape: f32[1,168], index: 2, kind: input, shape index: {}]
  %s3 = inlined_call_operand.vmem [shape: f32[2,14,28], index: 3, kind: input, shape index: {}]
  %s4 = inlined_call_operand.vmem [shape: f32[2,168,84], index: 4, kind: input, shape index: {}]
  %s5 = inlined_call_operand.vmem [shape: f32[5,84,160], index: 5, kind: input, shape index: {}]
  %s6 = inlined_call_operand.vmem [shape: f32[1,160], index: 6, kind: input, shape index: {}]
  %s7 = inlined_call_operand.vmem [shape: f32[2,5,10], index: 7, kind: input, shape index: {}]
  %s8 = inlined_call_operand.vmem [shape: f32[2,160,80], index: 8, kind: input, shape index: {}]
  %s9 = inlined_call_operand.vmem [shape: f32[5,80,120], index: 9, kind: input, shape index: {}]
  %s10 = inlined_call_operand.vmem [shape: f32[1,120], index: 10, kind: input, shape index: {}]
  %s11 = inlined_call_operand.vmem [shape: f32[120,84], index: 11, kind: input, shape index: {}]
  %s12 = inlined_call_operand.vmem [shape: f32[1,84], index: 12, kind: input, shape index: {}]
  %s13 = inlined_call_operand.vmem [shape: f32[84,10], index: 13, kind: input, shape index: {}]
  %s14 = inlined_call_operand.vmem [shape: f32[1,10], index: 14, kind: input, shape index: {}]
  %s15 = inlined_call_operand.hbm [shape: f32[2,1,10], index: 15, kind: output, shape index: {}]
  %s16 = sld [smem:[#allocation0]]
  $region93: #{cnn_forward.1} parent=0
    _
  %s18 = ssub.s32 1, %s16
  %s19 = scalar_select 0, %s18, %s16
  $region1: #{cnn_forward.1} parent=0
    #allocation4 [shape = 'u8[1024]{0}', space=vmem, size = 0x400, scoped, tag = 'output window, operand 0']
    #allocation5 [shape = 's32[2]{0}', space=sflag, size = 0x8, scoped, tag = 'scoped memory for cnn_forward.1']
    %20 = vsyncpa [#allocation5], 0
    %s21 = scalar_lea.sflag [#allocation5], 1
    %22 = vsyncpa %s21, 0
    loop: start=0, step=1, limit=4
    $region2: #{cnn_forward.1} parent=1 // loop_pre_header
      _
    $region3: #{cnn_forward.1} parent=1 // loop_header
      %s24 = sphi 0, %s28
      %p25 = scmp.ge.s32.totalorder %s24, 4
      %s34 = sphi 0, %s36
      %s37 = sphi 0, %s34
      %s38 = sphi 0, %s37
      %s54 = sphi 0, %s38
      %s58 = sphi 0, %s58
      %s60 = sphi 0, %s58
      %s61 = sphi 0, %s60
      %s75 = sphi 0, %s61
      %s79 = sphi 0, %s79
      %s81 = sphi 0, %s79
      %s82 = sphi 0, %s81
      %s96 = sphi 0, %s82
      %s100 = sphi 0, %s100
      %s102 = sphi 0, %s100
      %s103 = sphi 0, %s102
      %s117 = sphi 0, %s103
      %s121 = sphi 0, %s121
      %s123 = sphi 0, %s121
      %s124 = sphi 0, %s123
      %s138 = sphi 0, %s124
      %s142 = sphi 0, %s142
      %s144 = sphi 0, %s142
      %s145 = sphi 0, %s144
      %s159 = sphi 0, %s145
      %s163 = sphi 0, %s163
      %s165 = sphi 0, %s163
      %s166 = sphi 0, %s165
      %s180 = sphi 0, %s166
      %s184 = sphi 0, %s184
      %s186 = sphi 0, %s184
      %s187 = sphi 0, %s186
      %s201 = sphi 0, %s187
      %s205 = sphi 0, %s205
      %s207 = sphi 0, %s205
      %s208 = sphi 0, %s207
      %s222 = sphi 0, %s208
      %s226 = sphi 0, %s226
      %s228 = sphi 0, %s226
      %s229 = sphi 0, %s228
      %s243 = sphi 0, %s229
      %s247 = sphi 0, %s247
      %s249 = sphi 0, %s247
      %s250 = sphi 0, %s249
      %s264 = sphi 0, %s250
      %s268 = sphi 0, %s268
      %s270 = sphi 0, %s268
      %s271 = sphi 0, %s270
      %s285 = sphi 0, %s271
      %s289 = sphi 0, %s289
      %s291 = sphi 0, %s289
      %s292 = sphi 0, %s291
      %s306 = sphi 0, %s292
      %s310 = sphi 0, %s310
      %s312 = sphi 0, %s310
      %s313 = sphi 0, %s312
      %s327 = sphi 0, %s313
      %s331 = sphi 0, %s331
      %s333 = sphi 0, %s331
      %s334 = sphi 0, %s333
      %s348 = sphi 0, %s334
      %s354 = sphi 0, %s356
      %s357 = sphi 0, %s354
      %s358 = sphi 0, %s357
      %s374 = sphi 0, %s358
    $region4: #{cnn_forward.1} parent=1 // loop_header_branch
      %27 = sbr.rel (%p25) target = $region8
    $region5: #{cnn_forward.1} parent=1 // loop_body
      %s29 = ssub.s32 %s24, 1
      %s30 = ssub.s32 %s24, 2
      %s31 = sadd.s32 %s24, 1
      %s32 = ssub.s32 %s24, %s31
      %p33 = scmp.eq.s32.totalorder %s32, 0
      %s35 = sadd.s32 %s34, 1
      %s36 = scalar_select %p33, %s34, %s35
      %p39 = pneg %p33
      %p40 = scmp.eq.s32.totalorder %s24, 1
      %p41 = por %p39, %p40
      %p42 = scmp.ne.s32.totalorder %s34, %s37
      %p43 = scmp.eq.s32.totalorder %s24, 0
      %p44 = por %p42, %p43
      %p45 = scmp.ne.s32.totalorder %s34, %s37
      %p46 = scmp.eq.s32.totalorder %s29, 1
      %p47 = por %p45, %p46
      %p48 = scmp.ne.s32.totalorder %s37, %s38
      %p49 = scmp.eq.s32.totalorder %s29, 0
      %p50 = por %p48, %p49
      %p51 = scmp.ne.s32.totalorder %s37, %s38
      %p52 = scmp.eq.s32.totalorder %s30, 1
      %p53 = por %p51, %p52
      %p55 = scmp.ne.s32.totalorder %s38, %s54
      %p56 = scmp.eq.s32.totalorder %s30, 0
      %p57 = por %p55, %p56
      %s59 = sadd.s32 %s58, 1
      %p62 = scmp.eq.s32.totalorder %s24, 1
      %p63 = scmp.ne.s32.totalorder %s58, %s60
      %p64 = scmp.eq.s32.totalorder %s24, 0
      %p65 = por %p63, %p64
      %p66 = scmp.ne.s32.totalorder %s58, %s60
      %p67 = scmp.eq.s32.totalorder %s29, 1
      %p68 = por %p66, %p67
      %p69 = scmp.ne.s32.totalorder %s60, %s61
      %p70 = scmp.eq.s32.totalorder %s29, 0
      %p71 = por %p69, %p70
      %p72 = scmp.ne.s32.totalorder %s60, %s61
      %p73 = scmp.eq.s32.totalorder %s30, 1
      %p74 = por %p72, %p73
      %p76 = scmp.ne.s32.totalorder %s61, %s75
      %p77 = scmp.eq.s32.totalorder %s30, 0
      %p78 = por %p76, %p77
      %s80 = sadd.s32 %s79, 1
      %p83 = scmp.eq.s32.totalorder %s24, 1
      %p84 = scmp.ne.s32.totalorder %s79, %s81
      %p85 = scmp.eq.s32.totalorder %s24, 0
      %p86 = por %p84, %p85
      %p87 = scmp.ne.s32.totalorder %s79, %s81
      %p88 = scmp.eq.s32.totalorder %s29, 1
      %p89 = por %p87, %p88
      %p90 = scmp.ne.s32.totalorder %s81, %s82
      %p91 = scmp.eq.s32.totalorder %s29, 0
      %p92 = por %p90, %p91
      %p93 = scmp.ne.s32.totalorder %s81, %s82
      %p94 = scmp.eq.s32.totalorder %s30, 1
      %p95 = por %p93, %p94
      %p97 = scmp.ne.s32.totalorder %s82, %s96
      %p98 = scmp.eq.s32.totalorder %s30, 0
      %p99 = por %p97, %p98
      %s101 = sadd.s32 %s100, 1
      %p104 = scmp.eq.s32.totalorder %s24, 1
      %p105 = scmp.ne.s32.totalorder %s100, %s102
      %p106 = scmp.eq.s32.totalorder %s24, 0
      %p107 = por %p105, %p106
      %p108 = scmp.ne.s32.totalorder %s100, %s102
      %p109 = scmp.eq.s32.totalorder %s29, 1
      %p110 = por %p108, %p109
      %p111 = scmp.ne.s32.totalorder %s102, %s103
      %p112 = scmp.eq.s32.totalorder %s29, 0
      %p113 = por %p111, %p112
      %p114 = scmp.ne.s32.totalorder %s102, %s103
      %p115 = scmp.eq.s32.totalorder %s30, 1
      %p116 = por %p114, %p115
      %p118 = scmp.ne.s32.totalorder %s103, %s117
      %p119 = scmp.eq.s32.totalorder %s30, 0
      %p120 = por %p118, %p119
      %s122 = sadd.s32 %s121, 1
      %p125 = scmp.eq.s32.totalorder %s24, 1
      %p126 = scmp.ne.s32.totalorder %s121, %s123
      %p127 = scmp.eq.s32.totalorder %s24, 0
      %p128 = por %p126, %p127
      %p129 = scmp.ne.s32.totalorder %s121, %s123
      %p130 = scmp.eq.s32.totalorder %s29, 1
      %p131 = por %p129, %p130
      %p132 = scmp.ne.s32.totalorder %s123, %s124
      %p133 = scmp.eq.s32.totalorder %s29, 0
      %p134 = por %p132, %p133
      %p135 = scmp.ne.s32.totalorder %s123, %s124
      %p136 = scmp.eq.s32.totalorder %s30, 1
      %p137 = por %p135, %p136
      %p139 = scmp.ne.s32.totalorder %s124, %s138
      %p140 = scmp.eq.s32.totalorder %s30, 0
      %p141 = por %p139, %p140
      %s143 = sadd.s32 %s142, 1
      %p146 = scmp.eq.s32.totalorder %s24, 1
      %p147 = scmp.ne.s32.totalorder %s142, %s144
      %p148 = scmp.eq.s32.totalorder %s24, 0
      %p149 = por %p147, %p148
      %p150 = scmp.ne.s32.totalorder %s142, %s144
      %p151 = scmp.eq.s32.totalorder %s29, 1
      %p152 = por %p150, %p151
      %p153 = scmp.ne.s32.totalorder %s144, %s145
      %p154 = scmp.eq.s32.totalorder %s29, 0
      %p155 = por %p153, %p154
      %p156 = scmp.ne.s32.totalorder %s144, %s145
      %p157 = scmp.eq.s32.totalorder %s30, 1
      %p158 = por %p156, %p157
      %p160 = scmp.ne.s32.totalorder %s145, %s159
      %p161 = scmp.eq.s32.totalorder %s30, 0
      %p162 = por %p160, %p161
      %s164 = sadd.s32 %s163, 1
      %p167 = scmp.eq.s32.totalorder %s24, 1
      %p168 = scmp.ne.s32.totalorder %s163, %s165
      %p169 = scmp.eq.s32.totalorder %s24, 0
      %p170 = por %p168, %p169
      %p171 = scmp.ne.s32.totalorder %s163, %s165
      %p172 = scmp.eq.s32.totalorder %s29, 1
      %p173 = por %p171, %p172
      %p174 = scmp.ne.s32.totalorder %s165, %s166
      %p175 = scmp.eq.s32.totalorder %s29, 0
      %p176 = por %p174, %p175
      %p177 = scmp.ne.s32.totalorder %s165, %s166
      %p178 = scmp.eq.s32.totalorder %s30, 1
      %p179 = por %p177, %p178
      %p181 = scmp.ne.s32.totalorder %s166, %s180
      %p182 = scmp.eq.s32.totalorder %s30, 0
      %p183 = por %p181, %p182
      %s185 = sadd.s32 %s184, 1
      %p188 = scmp.eq.s32.totalorder %s24, 1
      %p189 = scmp.ne.s32.totalorder %s184, %s186
      %p190 = scmp.eq.s32.totalorder %s24, 0
      %p191 = por %p189, %p190
      %p192 = scmp.ne.s32.totalorder %s184, %s186
      %p193 = scmp.eq.s32.totalorder %s29, 1
      %p194 = por %p192, %p193
      %p195 = scmp.ne.s32.totalorder %s186, %s187
      %p196 = scmp.eq.s32.totalorder %s29, 0
      %p197 = por %p195, %p196
      %p198 = scmp.ne.s32.totalorder %s186, %s187
      %p199 = scmp.eq.s32.totalorder %s30, 1
      %p200 = por %p198, %p199
      %p202 = scmp.ne.s32.totalorder %s187, %s201
      %p203 = scmp.eq.s32.totalorder %s30, 0
      %p204 = por %p202, %p203
      %s206 = sadd.s32 %s205, 1
      %p209 = scmp.eq.s32.totalorder %s24, 1
      %p210 = scmp.ne.s32.totalorder %s205, %s207
      %p211 = scmp.eq.s32.totalorder %s24, 0
      %p212 = por %p210, %p211
      %p213 = scmp.ne.s32.totalorder %s205, %s207
      %p214 = scmp.eq.s32.totalorder %s29, 1
      %p215 = por %p213, %p214
      %p216 = scmp.ne.s32.totalorder %s207, %s208
      %p217 = scmp.eq.s32.totalorder %s29, 0
      %p218 = por %p216, %p217
      %p219 = scmp.ne.s32.totalorder %s207, %s208
      %p220 = scmp.eq.s32.totalorder %s30, 1
      %p221 = por %p219, %p220
      %p223 = scmp.ne.s32.totalorder %s208, %s222
      %p224 = scmp.eq.s32.totalorder %s30, 0
      %p225 = por %p223, %p224
      %s227 = sadd.s32 %s226, 1
      %p230 = scmp.eq.s32.totalorder %s24, 1
      %p231 = scmp.ne.s32.totalorder %s226, %s228
      %p232 = scmp.eq.s32.totalorder %s24, 0
      %p233 = por %p231, %p232
      %p234 = scmp.ne.s32.totalorder %s226, %s228
      %p235 = scmp.eq.s32.totalorder %s29, 1
      %p236 = por %p234, %p235
      %p237 = scmp.ne.s32.totalorder %s228, %s229
      %p238 = scmp.eq.s32.totalorder %s29, 0
      %p239 = por %p237, %p238
      %p240 = scmp.ne.s32.totalorder %s228, %s229
      %p241 = scmp.eq.s32.totalorder %s30, 1
      %p242 = por %p240, %p241
      %p244 = scmp.ne.s32.totalorder %s229, %s243
      %p245 = scmp.eq.s32.totalorder %s30, 0
      %p246 = por %p244, %p245
      %s248 = sadd.s32 %s247, 1
      %p251 = scmp.eq.s32.totalorder %s24, 1
      %p252 = scmp.ne.s32.totalorder %s247, %s249
      %p253 = scmp.eq.s32.totalorder %s24, 0
      %p254 = por %p252, %p253
      %p255 = scmp.ne.s32.totalorder %s247, %s249
      %p256 = scmp.eq.s32.totalorder %s29, 1
      %p257 = por %p255, %p256
      %p258 = scmp.ne.s32.totalorder %s249, %s250
      %p259 = scmp.eq.s32.totalorder %s29, 0
      %p260 = por %p258, %p259
      %p261 = scmp.ne.s32.totalorder %s249, %s250
      %p262 = scmp.eq.s32.totalorder %s30, 1
      %p263 = por %p261, %p262
      %p265 = scmp.ne.s32.totalorder %s250, %s264
      %p266 = scmp.eq.s32.totalorder %s30, 0
      %p267 = por %p265, %p266
      %s269 = sadd.s32 %s268, 1
      %p272 = scmp.eq.s32.totalorder %s24, 1
      %p273 = scmp.ne.s32.totalorder %s268, %s270
      %p274 = scmp.eq.s32.totalorder %s24, 0
      %p275 = por %p273, %p274
      %p276 = scmp.ne.s32.totalorder %s268, %s270
      %p277 = scmp.eq.s32.totalorder %s29, 1
      %p278 = por %p276, %p277
      %p279 = scmp.ne.s32.totalorder %s270, %s271
      %p280 = scmp.eq.s32.totalorder %s29, 0
      %p281 = por %p279, %p280
      %p282 = scmp.ne.s32.totalorder %s270, %s271
      %p283 = scmp.eq.s32.totalorder %s30, 1
      %p284 = por %p282, %p283
      %p286 = scmp.ne.s32.totalorder %s271, %s285
      %p287 = scmp.eq.s32.totalorder %s30, 0
      %p288 = por %p286, %p287
      %s290 = sadd.s32 %s289, 1
      %p293 = scmp.eq.s32.totalorder %s24, 1
      %p294 = scmp.ne.s32.totalorder %s289, %s291
      %p295 = scmp.eq.s32.totalorder %s24, 0
      %p296 = por %p294, %p295
      %p297 = scmp.ne.s32.totalorder %s289, %s291
      %p298 = scmp.eq.s32.totalorder %s29, 1
      %p299 = por %p297, %p298
      %p300 = scmp.ne.s32.totalorder %s291, %s292
      %p301 = scmp.eq.s32.totalorder %s29, 0
      %p302 = por %p300, %p301
      %p303 = scmp.ne.s32.totalorder %s291, %s292
      %p304 = scmp.eq.s32.totalorder %s30, 1
      %p305 = por %p303, %p304
      %p307 = scmp.ne.s32.totalorder %s292, %s306
      %p308 = scmp.eq.s32.totalorder %s30, 0
      %p309 = por %p307, %p308
      %s311 = sadd.s32 %s310, 1
      %p314 = scmp.eq.s32.totalorder %s24, 1
      %p315 = scmp.ne.s32.totalorder %s310, %s312
      %p316 = scmp.eq.s32.totalorder %s24, 0
      %p317 = por %p315, %p316
      %p318 = scmp.ne.s32.totalorder %s310, %s312
      %p319 = scmp.eq.s32.totalorder %s29, 1
      %p320 = por %p318, %p319
      %p321 = scmp.ne.s32.totalorder %s312, %s313
      %p322 = scmp.eq.s32.totalorder %s29, 0
      %p323 = por %p321, %p322
      %p324 = scmp.ne.s32.totalorder %s312, %s313
      %p325 = scmp.eq.s32.totalorder %s30, 1
      %p326 = por %p324, %p325
      %p328 = scmp.ne.s32.totalorder %s313, %s327
      %p329 = scmp.eq.s32.totalorder %s30, 0
      %p330 = por %p328, %p329
      %s332 = sadd.s32 %s331, 1
      %p335 = scmp.eq.s32.totalorder %s24, 1
      %p336 = scmp.ne.s32.totalorder %s331, %s333
      %p337 = scmp.eq.s32.totalorder %s24, 0
      %p338 = por %p336, %p337
      %p339 = scmp.ne.s32.totalorder %s331, %s333
      %p340 = scmp.eq.s32.totalorder %s29, 1
      %p341 = por %p339, %p340
      %p342 = scmp.ne.s32.totalorder %s333, %s334
      %p343 = scmp.eq.s32.totalorder %s29, 0
      %p344 = por %p342, %p343
      %p345 = scmp.ne.s32.totalorder %s333, %s334
      %p346 = scmp.eq.s32.totalorder %s30, 1
      %p347 = por %p345, %p346
      %p349 = scmp.ne.s32.totalorder %s334, %s348
      %p350 = scmp.eq.s32.totalorder %s30, 0
      %p351 = por %p349, %p350
      %s352 = ssub.s32 %s24, %s31
      %p353 = scmp.eq.s32.totalorder %s352, 0
      %s355 = sadd.s32 %s354, 1
      %s356 = scalar_select %p353, %s354, %s355
      %p359 = pneg %p353
      %p360 = scmp.eq.s32.totalorder %s24, 1
      %p361 = por %p359, %p360
      %p362 = scmp.ne.s32.totalorder %s354, %s357
      %p363 = scmp.eq.s32.totalorder %s24, 0
      %p364 = por %p362, %p363
      %p365 = scmp.ne.s32.totalorder %s354, %s357
      %p366 = scmp.eq.s32.totalorder %s29, 1
      %p367 = por %p365, %p366
      %p368 = scmp.ne.s32.totalorder %s357, %s358
      %p369 = scmp.eq.s32.totalorder %s29, 0
      %p370 = por %p368, %p369
      %p371 = scmp.ne.s32.totalorder %s357, %s358
      %p372 = scmp.eq.s32.totalorder %s30, 1
      %p373 = por %p371, %p372
      %p375 = scmp.ne.s32.totalorder %s358, %s374
      %p376 = scmp.eq.s32.totalorder %s30, 0
      %p377 = por %p375, %p376
      %p378 = scmp.le.s32.totalorder 1, %s24
      %p379 = scmp.lt.s32.totalorder %s24, 3
      %p380 = pnand %p378, %p379
      %p381 = pneg %p380
      // Predicated region
      $region9: #{cnn_forward.1} parent=5 // pred_check
        _
      $region10: #{cnn_forward.1} parent=5 // pred_check_branch
        %383 = sbr.rel (%p380) target = $region12
      $region11: #{cnn_forward.1} parent=5 // pred_region
        %s384 = ssub.s32 %s24, 1
        // Predicated region
        $region13: #{cnn_forward.1} parent=11 // pred_check
          %p385 = pneg %p71
        $region14: #{cnn_forward.1} parent=11 // pred_check_branch
          %387 = sbr.rel (%p385) target = $region16
        $region15: #{cnn_forward.1} parent=11 // pred_region
          _
        $region16: #{cnn_forward.1} parent=11 // pred_fallthru
          _
        // Predicated region
        $region17: #{cnn_forward.1} parent=11 // pred_check
          %p388 = pneg %p92
        $region18: #{cnn_forward.1} parent=11 // pred_check_branch
          %390 = sbr.rel (%p388) target = $region20
        $region19: #{cnn_forward.1} parent=11 // pred_region
          _
        $region20: #{cnn_forward.1} parent=11 // pred_fallthru
          _
        // Predicated region
        $region21: #{cnn_forward.1} parent=11 // pred_check
          %p391 = pneg %p113
        $region22: #{cnn_forward.1} parent=11 // pred_check_branch
          %393 = sbr.rel (%p391) target = $region24
        $region23: #{cnn_forward.1} parent=11 // pred_region
          _
        $region24: #{cnn_forward.1} parent=11 // pred_fallthru
          _
        // Predicated region
        $region25: #{cnn_forward.1} parent=11 // pred_check
          %p394 = pneg %p134
        $region26: #{cnn_forward.1} parent=11 // pred_check_branch
          %396 = sbr.rel (%p394) target = $region28
        $region27: #{cnn_forward.1} parent=11 // pred_region
          _
        $region28: #{cnn_forward.1} parent=11 // pred_fallthru
          _
        // Predicated region
        $region29: #{cnn_forward.1} parent=11 // pred_check
          %p397 = pneg %p155
        $region30: #{cnn_forward.1} parent=11 // pred_check_branch
          %399 = sbr.rel (%p397) target = $region32
        $region31: #{cnn_forward.1} parent=11 // pred_region
          _
        $region32: #{cnn_forward.1} parent=11 // pred_fallthru
          _
        // Predicated region
        $region33: #{cnn_forward.1} parent=11 // pred_check
          %p400 = pneg %p176
        $region34: #{cnn_forward.1} parent=11 // pred_check_branch
          %402 = sbr.rel (%p400) target = $region36
        $region35: #{cnn_forward.1} parent=11 // pred_region
          _
        $region36: #{cnn_forward.1} parent=11 // pred_fallthru
          _
        // Predicated region
        $region37: #{cnn_forward.1} parent=11 // pred_check
          %p403 = pneg %p197
        $region38: #{cnn_forward.1} parent=11 // pred_check_branch
          %405 = sbr.rel (%p403) target = $region40
        $region39: #{cnn_forward.1} parent=11 // pred_region
          _
        $region40: #{cnn_forward.1} parent=11 // pred_fallthru
          _
        // Predicated region
        $region41: #{cnn_forward.1} parent=11 // pred_check
          %p406 = pneg %p218
        $region42: #{cnn_forward.1} parent=11 // pred_check_branch
          %408 = sbr.rel (%p406) target = $region44
        $region43: #{cnn_forward.1} parent=11 // pred_region
          _
        $region44: #{cnn_forward.1} parent=11 // pred_fallthru
          _
        // Predicated region
        $region45: #{cnn_forward.1} parent=11 // pred_check
          %p409 = pneg %p239
        $region46: #{cnn_forward.1} parent=11 // pred_check_branch
          %411 = sbr.rel (%p409) target = $region48
        $region47: #{cnn_forward.1} parent=11 // pred_region
          _
        $region48: #{cnn_forward.1} parent=11 // pred_fallthru
          _
        // Predicated region
        $region49: #{cnn_forward.1} parent=11 // pred_check
          %p412 = pneg %p260
        $region50: #{cnn_forward.1} parent=11 // pred_check_branch
          %414 = sbr.rel (%p412) target = $region52
        $region51: #{cnn_forward.1} parent=11 // pred_region
          _
        $region52: #{cnn_forward.1} parent=11 // pred_fallthru
          _
        // Predicated region
        $region53: #{cnn_forward.1} parent=11 // pred_check
          %p415 = pneg %p281
        $region54: #{cnn_forward.1} parent=11 // pred_check_branch
          %417 = sbr.rel (%p415) target = $region56
        $region55: #{cnn_forward.1} parent=11 // pred_region
          _
        $region56: #{cnn_forward.1} parent=11 // pred_fallthru
          _
        // Predicated region
        $region57: #{cnn_forward.1} parent=11 // pred_check
          %p418 = pneg %p302
        $region58: #{cnn_forward.1} parent=11 // pred_check_branch
          %420 = sbr.rel (%p418) target = $region60
        $region59: #{cnn_forward.1} parent=11 // pred_region
          _
        $region60: #{cnn_forward.1} parent=11 // pred_fallthru
          _
        // Predicated region
        $region61: #{cnn_forward.1} parent=11 // pred_check
          %p421 = pneg %p323
        $region62: #{cnn_forward.1} parent=11 // pred_check_branch
          %423 = sbr.rel (%p421) target = $region64
        $region63: #{cnn_forward.1} parent=11 // pred_region
          _
        $region64: #{cnn_forward.1} parent=11 // pred_fallthru
          _
        // Predicated region
        $region65: #{cnn_forward.1} parent=11 // pred_check
          %p424 = pneg %p344
        $region66: #{cnn_forward.1} parent=11 // pred_check_branch
          %426 = sbr.rel (%p424) target = $region68
        $region67: #{cnn_forward.1} parent=11 // pred_region
          _
        $region68: #{cnn_forward.1} parent=11 // pred_fallthru
          _
      $region12: #{cnn_forward.1} parent=5 // pred_fallthru
        _
      %p427 = scmp.lt.s32.totalorder %s24, 2
      // Predicated region
      $region69: #{cnn_forward.1} parent=5 // pred_check
        %p428 = pneg %p427
      $region70: #{cnn_forward.1} parent=5 // pred_check_branch
        %430 = sbr.rel (%p428) target = $region72
      $region71: #{cnn_forward.1} parent=5 // pred_region
        // Predicated region
        $region73: #{cnn_forward.1} parent=71 // pred_check
          %p431 = pneg %p44
        $region74: #{cnn_forward.1} parent=71 // pred_check_branch
          %433 = sbr.rel (%p431) target = $region76
        $region75: #{cnn_forward.1} parent=71 // pred_region
          %p434 = scmp.lt.s32.totalorder %s24, 1
          %s435 = scalar_select %p434, %s24, 1
          %s436 = smul.addr %s435, 4
          %s437 = smul.addr %s436, 8
          %s438 = scalar_lea.vmem %s0, %s437
        $region76: #{cnn_forward.1} parent=71 // pred_fallthru
          _
      $region72: #{cnn_forward.1} parent=5 // pred_fallthru
        _
      %p439 = scmp.le.s32.totalorder 1, %s24
      %p440 = scmp.lt.s32.totalorder %s24, 3
      %p441 = pnand %p439, %p440
      %p442 = pneg %p441
      // Predicated region
      $region77: #{cnn_forward.1} parent=5 // pred_check
        _
      $region78: #{cnn_forward.1} parent=5 // pred_check_branch
        %444 = sbr.rel (%p441) target = $region80
      $region79: #{cnn_forward.1} parent=5 // pred_region
        %s445 = ssub.s32 %s24, 1
        %p446 = scmp.lt.s32.totalorder %s29, 1
        %s447 = scalar_select %p446, %s29, 1
        %s448 = smul.addr %s447, 4
        %s449 = smul.addr %s448, 8
        %s450 = scalar_lea.vmem %s0, %s449
        %p451 = pneg %p50
        %p452 = pneg %p47
        %p453 = pneg %p71
        %p454 = pneg %p68
        %p455 = pneg %p92
        %p456 = pneg %p89
        %p457 = pneg %p113
        %p458 = pneg %p110
        %p459 = pneg %p134
        %p460 = pneg %p131
        %p461 = pneg %p155
        %p462 = pneg %p152
        %p463 = pneg %p176
        %p464 = pneg %p173
        %p465 = pneg %p197
        %p466 = pneg %p194
        %p467 = pneg %p218
        %p468 = pneg %p215
        %p469 = pneg %p239
        %p470 = pneg %p236
        %p471 = pneg %p260
        %p472 = pneg %p257
        %p473 = pneg %p281
        %p474 = pneg %p278
        %p475 = pneg %p302
        %p476 = pneg %p299
        %p477 = pneg %p323
        %p478 = pneg %p320
        %p479 = pneg %p344
        %p480 = pneg %p341
        %p481 = pneg %p370
        %p482 = pneg %p367
        %s483 = sand.u32 %s357, 1
        %s484 = scalar_lea.sflag [#allocation5], %s483
        %s485 = sand.u32 %s357, 1
        %s486 = scalar_lea.vmem [#allocation4], %s485
        %p487 = scmp.lt.s32.totalorder %s29, 1
        %s488 = scalar_select %p487, %s29, 1
        %s489 = smul.addr %s488, 4
        %s490 = smul.addr %s489, 8
        %s491 = scalar_lea.vmem %s0, %s490
        %v492 = vld [vmem:[%s491] sm:$0xff]
        %v493 = vld [vmem:[%s491 + $0x8] sm:$0xff]
        %v494 = vld [vmem:[%s491 + $0x10] sm:$0xff]
        %v495 = vld [vmem:[%s491 + $0x18] sm:$0xf]
        %v496 = vld [vmem:[%s1] sm:$0xff]
        %v497 = vld [vmem:[%s1 + $0x8] sm:$0xff]
        %v498 = vld [vmem:[%s1 + $0x10] sm:$0xff]
        %v499 = vld [vmem:[%s1 + $0x18] sm:$0xff]
        %v500 = vld [vmem:[%s1 + $0x20] sm:$0xff]
        %v501 = vld [vmem:[%s1 + $0x28] sm:$0xff]
        %v502 = vld [vmem:[%s1 + $0x30] sm:$0xff]
        %v503 = vld [vmem:[%s1 + $0x38] sm:$0xff]
        %v504 = vld [vmem:[%s491 + $0x1] sm:$0xff]
        %v505 = vld [vmem:[%s491 + $0x9] sm:$0xff]
        %v506 = vld [vmem:[%s491 + $0x11] sm:$0xff]
        %v507 = vld [vmem:[%s491 + $0x19] sm:$0xf]
        %s508 = scalar_lea.vmem %s1, 64
        %v509 = vld [vmem:[%s508] sm:$0xff]
        %v510 = vld [vmem:[%s508 + $0x8] sm:$0xff]
        %v511 = vld [vmem:[%s508 + $0x10] sm:$0xff]
        %v512 = vld [vmem:[%s508 + $0x18] sm:$0xff]
        %v513 = vld [vmem:[%s508 + $0x20] sm:$0xff]
        %v514 = vld [vmem:[%s508 + $0x28] sm:$0xff]
        %v515 = vld [vmem:[%s508 + $0x30] sm:$0xff]
        %v516 = vld [vmem:[%s508 + $0x38] sm:$0xff]
        %vm517 = vcmask 261120
        %v519 = vsel %vm517, %v504, 0
        %v522 = vsel %vm517, %v505, 0
        %v525 = vsel %vm517, %v506, 0
        %v528 = vsel %vm517, %v507, 0
        %530 = vmatprep.subr.mxu0 %v510
        %531 = vmatpush1.msra.mxu0 %v509
        %532 = vmatprep.subr.mxu0 %v512
        %533 = vmatpush1.msra.mxu0 %v511
        %534 = vmatprep.subr.mxu0 %v514
        %535 = vmatpush1.msra.mxu0 %v513
        %536 = vmatprep.subr.mxu0 %v516
        %537 = vmatpush1.msra.mxu0 %v515
        %538 = vmatprep.subr.mxu0 0.0
        %539 = vmatpush1.msra.mxu0 0.0
        %540 = vmatprep.subr.mxu0 0.0
        %541 = vmatpush1.msra.mxu0 0.0
        %542 = vmatprep.subr.mxu0 0.0
        %543 = vmatpush1.msra.mxu0 0.0
        %544 = vmatprep.subr.mxu0 0.0
        %545 = vmatpush1.msra.mxu0 0.0
        %546 = vmatprep.subr.mxu0 0.0
        %547 = vmatpush1.msra.mxu0 0.0
        %548 = vmatprep.subr.mxu0 0.0
        %549 = vmatpush1.msra.mxu0 0.0
        %550 = vmatprep.subr.mxu0 0.0
        %551 = vmatpush1.msra.mxu0 0.0
        %552 = vmatprep.subr.mxu0 0.0
        %553 = vmatpush1.msra.mxu0 0.0
        %554 = vmatprep.subr.mxu0 0.0
        %555 = vmatpush1.msra.mxu0 0.0
        %556 = vmatprep.subr.mxu0 0.0
        %557 = vmatpush1.msra.mxu0 0.0
        %558 = vmatprep.subr.mxu0 0.0
        %559 = vmatpush1.msra.mxu0 0.0
        %560 = vmatprep.subr.mxu0 0.0
        %561 = vmatpush1.msra.mxu0 0.0
        %562 = vmatprep.subr.mxu0 0.0
        %563 = vmatpush1.msra.mxu0 0.0
        %564 = vmatprep.subr.mxu0 0.0
        %565 = vmatpush1.msra.mxu0 0.0
        %566 = vmatprep.subr.mxu0 0.0
        %567 = vmatpush1.msra.mxu0 0.0
        %568 = vmatprep.subr.mxu0 0.0
        %569 = vmatpush1.msra.mxu0 0.0
        %570 = vmatprep.subr.mxu0 0.0
        %571 = vmatpush1.msra.mxu0 0.0
        %572 = vmatprep.subr.mxu0 0.0
        %573 = vmatpush1.msra.mxu0 0.0
        %574 = vmatprep.subr.mxu0 0.0
        %575 = vmatpush1.msra.mxu0 0.0
        %576 = vmatprep.subr.mxu0 0.0
        %577 = vmatpush1.msra.mxu0 0.0
        %578 = vmatprep.subr.mxu0 0.0
        %579 = vmatpush1.msra.mxu0 0.0
        %580 = vmatprep.subr.mxu0 0.0
        %581 = vmatpush1.msra.mxu0 0.0
        %582 = vmatprep.subr.mxu0 0.0
        %583 = vmatpush1.msra.mxu0 0.0
        %584 = vmatprep.subr.mxu0 0.0
        %585 = vmatpush1.msra.mxu0 0.0
        %586 = vmatprep.subr.mxu0 0.0
        %587 = vmatpush1.msra.mxu0 0.0
        %588 = vmatprep.subr.mxu0 0.0
        %589 = vmatpush1.msra.mxu0 0.0
        %590 = vmatprep.subr.mxu0 0.0
        %591 = vmatpush1.msra.mxu0 0.0
        %592 = vmatprep.subr.mxu0 0.0
        %593 = vmatpush1.msra.mxu0 0.0
        %594 = vmatprep.mubr.f32.mxu0 0.0
        %595 = vmatmul.mubr.f32.gmra.mrb[0].mxu0 %v519
        %v596 = vpop.f32.mrb[0].mxu0
        %v597 = vadd.f32 0.0, %v596
        %v598 = vpop.f32.mrb[0].mxu0
        %v599 = vadd.f32 0.0, %v598
        %600 = vmatprep.mubr.f32.mxu0 0.0
        %601 = vmatmul.mubr.f32.gmra.mrb[0].mxu0 %v522
        %v602 = vpop.f32.mrb[0].mxu0
        %v603 = vadd.f32 0.0, %v602
        %v604 = vpop.f32.mrb[0].mxu0
        %v605 = vadd.f32 0.0, %v604
        %606 = vmatprep.mubr.f32.mxu0 0.0
        %607 = vmatmul.mubr.f32.gmra.mrb[0].mxu0 %v525
        %v608 = vpop.f32.mrb[0].mxu0
        %v609 = vadd.f32 0.0, %v608
        %v610 = vpop.f32.mrb[0].mxu0
        %v611 = vadd.f32 0.0, %v610
        %612 = vmatprep.mubr.f32.mxu0 0.0
        %613 = vmatmul.mubr.f32.gmra.mrb[0].mxu0 %v528
        %v614 = vpop.f32.mrb[0].mxu0
        %v615 = vadd.f32 0.0, %v614
        %v616 = vpop.f32.mrb[0].mxu0
        %v617 = vadd.f32 0.0, %v616
        %618 = vdwg.mxu0
        %v620 = vsel %vm517, %v492, 0
        %v623 = vsel %vm517, %v493, 0
        %v626 = vsel %vm517, %v494, 0
        %v629 = vsel %vm517, %v495, 0
        %631 = vmatprep.subr.mxu0 %v497
        %632 = vmatpush1.msra.mxu0 %v496
        %633 = vmatprep.subr.mxu0 %v499
        %634 = vmatpush1.msra.mxu0 %v498
        %635 = vmatprep.subr.mxu0 %v501
        %636 = vmatpush1.msra.mxu0 %v500
        %637 = vmatprep.subr.mxu0 %v503
        %638 = vmatpush1.msra.mxu0 %v502
        %639 = vmatprep.subr.mxu0 0.0
        %640 = vmatpush1.msra.mxu0 0.0
        %641 = vmatprep.subr.mxu0 0.0
        %642 = vmatpush1.msra.mxu0 0.0
        %643 = vmatprep.subr.mxu0 0.0
        %644 = vmatpush1.msra.mxu0 0.0
        %645 = vmatprep.subr.mxu0 0.0
        %646 = vmatpush1.msra.mxu0 0.0
        %647 = vmatprep.subr.mxu0 0.0
        %648 = vmatpush1.msra.mxu0 0.0
        %649 = vmatprep.subr.mxu0 0.0
        %650 = vmatpush1.msra.mxu0 0.0
        %651 = vmatprep.subr.mxu0 0.0
        %652 = vmatpush1.msra.mxu0 0.0
        %653 = vmatprep.subr.mxu0 0.0
        %654 = vmatpush1.msra.mxu0 0.0
        %655 = vmatprep.subr.mxu0 0.0
        %656 = vmatpush1.msra.mxu0 0.0
        %657 = vmatprep.subr.mxu0 0.0
        %658 = vmatpush1.msra.mxu0 0.0
        %659 = vmatprep.subr.mxu0 0.0
        %660 = vmatpush1.msra.mxu0 0.0
        %661 = vmatprep.subr.mxu0 0.0
        %662 = vmatpush1.msra.mxu0 0.0
        %663 = vmatprep.subr.mxu0 0.0
        %664 = vmatpush1.msra.mxu0 0.0
        %665 = vmatprep.subr.mxu0 0.0
        %666 = vmatpush1.msra.mxu0 0.0
        %667 = vmatprep.subr.mxu0 0.0
        %668 = vmatpush1.msra.mxu0 0.0
        %669 = vmatprep.subr.mxu0 0.0
        %670 = vmatpush1.msra.mxu0 0.0
        %671 = vmatprep.subr.mxu0 0.0
        %672 = vmatpush1.msra.mxu0 0.0
        %673 = vmatprep.subr.mxu0 0.0
        %674 = vmatpush1.msra.mxu0 0.0
        %675 = vmatprep.subr.mxu0 0.0
        %676 = vmatpush1.msra.mxu0 0.0
        %677 = vmatprep.subr.mxu0 0.0
        %678 = vmatpush1.msra.mxu0 0.0
        %679 = vmatprep.subr.mxu0 0.0
        %680 = vmatpush1.msra.mxu0 0.0
        %681 = vmatprep.subr.mxu0 0.0
        %682 = vmatpush1.msra.mxu0 0.0
        %683 = vmatprep.subr.mxu0 0.0
        %684 = vmatpush1.msra.mxu0 0.0
        %685 = vmatprep.subr.mxu0 0.0
        %686 = vmatpush1.msra.mxu0 0.0
        %687 = vmatprep.subr.mxu0 0.0
        %688 = vmatpush1.msra.mxu0 0.0
        %689 = vmatprep.subr.mxu0 0.0
        %690 = vmatpush1.msra.mxu0 0.0
        %691 = vmatprep.subr.mxu0 0.0
        %692 = vmatpush1.msra.mxu0 0.0
        %693 = vmatprep.subr.mxu0 0.0
        %694 = vmatpush1.msra.mxu0 0.0
        %695 = vmatprep.mubr.f32.mxu0 0.0
        %696 = vmatmul.mubr.f32.gmra.mrb[0].mxu0 %v620
        %v697 = vpop.f32.mrb[0].mxu0
        %v698 = vadd.f32 %v597, %v697
        %v699 = vpop.f32.mrb[0].mxu0
        %v700 = vadd.f32 %v599, %v699
        %701 = vmatprep.mubr.f32.mxu0 0.0
        %702 = vmatmul.mubr.f32.gmra.mrb[0].mxu0 %v623
        %v703 = vpop.f32.mrb[0].mxu0
        %v704 = vadd.f32 %v603, %v703
        %v705 = vpop.f32.mrb[0].mxu0
        %v706 = vadd.f32 %v605, %v705
        %707 = vmatprep.mubr.f32.mxu0 0.0
        %708 = vmatmul.mubr.f32.gmra.mrb[0].mxu0 %v626
        %v709 = vpop.f32.mrb[0].mxu0
        %v710 = vadd.f32 %v609, %v709
        %v711 = vpop.f32.mrb[0].mxu0
        %v712 = vadd.f32 %v611, %v711
        %713 = vmatprep.mubr.f32.mxu0 0.0
        %714 = vmatmul.mubr.f32.gmra.mrb[0].mxu0 %v629
        %v715 = vpop.f32.mrb[0].mxu0
        %v716 = vadd.f32 %v615, %v715
        %v717 = vpop.f32.mrb[0].mxu0
        %v718 = vadd.f32 %v617, %v717
        %719 = vdwg.mxu0
        %v720 = vld [vmem:[%s491 + $0x2] sm:$0xff]
        %v721 = vld [vmem:[%s491 + $0xa] sm:$0xff]
        %v722 = vld [vmem:[%s491 + $0x12] sm:$0xff]
        %v723 = vld [vmem:[%s491 + $0x1a] sm:$0xf]
        %s724 = scalar_lea.vmem %s1, 128
        %v725 = vld [vmem:[%s724] sm:$0xff]
        %v726 = vld [vmem:[%s724 + $0x8] sm:$0xff]
        %v727 = vld [vmem:[%s724 + $0x10] sm:$0xff]
        %v728 = vld [vmem:[%s724 + $0x18] sm:$0xff]
        %v729 = vld [vmem:[%s724 + $0x20] sm:$0xff]
        %v730 = vld [vmem:[%s724 + $0x28] sm:$0xff]
        %v731 = vld [vmem:[%s724 + $0x30] sm:$0xff]
        %v732 = vld [vmem:[%s724 + $0x38] sm:$0xff]
        %v734 = vsel %vm517, %v720, 0
        %v737 = vsel %vm517, %v721, 0
        %v740 = vsel %vm517, %v722, 0
        %v743 = vsel %vm517, %v723, 0
        %745 = vmatprep.subr.mxu0 %v726
        %746 = vmatpush1.msra.mxu0 %v725
        %747 = vmatprep.subr.mxu0 %v728
        %748 = vmatpush1.msra.mxu0 %v727
        %749 = vmatprep.subr.mxu0 %v730
        %750 = vmatpush1.msra.mxu0 %v729
        %751 = vmatprep.subr.mxu0 %v732
        %752 = vmatpush1.msra.mxu0 %v731
        %753 = vmatprep.subr.mxu0 0.0
        %754 = vmatpush1.msra.mxu0 0.0
        %755 = vmatprep.subr.mxu0 0.0
        %756 = vmatpush1.msra.mxu0 0.0
        %757 = vmatprep.subr.mxu0 0.0
        %758 = vmatpush1.msra.mxu0 0.0
        %759 = vmatprep.subr.mxu0 0.0
        %760 = vmatpush1.msra.mxu0 0.0
        %761 = vmatprep.subr.mxu0 0.0
        %762 = vmatpush1.msra.mxu0 0.0
        %763 = vmatprep.subr.mxu0 0.0
        %764 = vmatpush1.msra.mxu0 0.0
        %765 = vmatprep.subr.mxu0 0.0
        %766 = vmatpush1.msra.mxu0 0.0
        %767 = vmatprep.subr.mxu0 0.0
        %768 = vmatpush1.msra.mxu0 0.0
        %769 = vmatprep.subr.mxu0 0.0
        %770 = vmatpush1.msra.mxu0 0.0
        %771 = vmatprep.subr.mxu0 0.0
        %772 = vmatpush1.msra.mxu0 0.0
        %773 = vmatprep.subr.mxu0 0.0
        %774 = vmatpush1.msra.mxu0 0.0
        %775 = vmatprep.subr.mxu0 0.0
        %776 = vmatpush1.msra.mxu0 0.0
        %777 = vmatprep.subr.mxu0 0.0
        %778 = vmatpush1.msra.mxu0 0.0
        %779 = vmatprep.subr.mxu0 0.0
        %780 = vmatpush1.msra.mxu0 0.0
        %781 = vmatprep.subr.mxu0 0.0
        %782 = vmatpush1.msra.mxu0 0.0
        %783 = vmatprep.subr.mxu0 0.0
        %784 = vmatpush1.msra.mxu0 0.0
        %785 = vmatprep.subr.mxu0 0.0
        %786 = vmatpush1.msra.mxu0 0.0
        %787 = vmatprep.subr.mxu0 0.0
        %788 = vmatpush1.msra.mxu0 0.0
        %789 = vmatprep.subr.mxu0 0.0
        %790 = vmatpush1.msra.mxu0 0.0
        %791 = vmatprep.subr.mxu0 0.0
        %792 = vmatpush1.msra.mxu0 0.0
        %793 = vmatprep.subr.mxu0 0.0
        %794 = vmatpush1.msra.mxu0 0.0
        %795 = vmatprep.subr.mxu0 0.0
        %796 = vmatpush1.msra.mxu0 0.0
        %797 = vmatprep.subr.mxu0 0.0
        %798 = vmatpush1.msra.mxu0 0.0
        %799 = vmatprep.subr.mxu0 0.0
        %800 = vmatpush1.msra.mxu0 0.0
        %801 = vmatprep.subr.mxu0 0.0
        %802 = vmatpush1.msra.mxu0 0.0
        %803 = vmatprep.subr.mxu0 0.0
        %804 = vmatpush1.msra.mxu0 0.0
        %805 = vmatprep.subr.mxu0 0.0
        %806 = vmatpush1.msra.mxu0 0.0
        %807 = vmatprep.subr.mxu0 0.0
        %808 = vmatpush1.msra.mxu0 0.0
        %809 = vmatprep.mubr.f32.mxu0 0.0
        %810 = vmatmul.mubr.f32.gmra.mrb[0].mxu0 %v734
        %v811 = vpop.f32.mrb[0].mxu0
        %v812 = vadd.f32 0.0, %v811
        %v813 = vpop.f32.mrb[0].mxu0
        %v814 = vadd.f32 0.0, %v813
        %815 = vmatprep.mubr.f32.mxu0 0.0
        %816 = vmatmul.mubr.f32.gmra.mrb[0].mxu0 %v737
        %v817 = vpop.f32.mrb[0].mxu0
        %v818 = vadd.f32 0.0, %v817
        %v819 = vpop.f32.mrb[0].mxu0
        %v820 = vadd.f32 0.0, %v819
        %821 = vmatprep.mubr.f32.mxu0 0.0
        %822 = vmatmul.mubr.f32.gmra.mrb[0].mxu0 %v740
        %v823 = vpop.f32.mrb[0].mxu0
        %v824 = vadd.f32 0.0, %v823
        %v825 = vpop.f32.mrb[0].mxu0
        %v826 = vadd.f32 0.0, %v825
        %827 = vmatprep.mubr.f32.mxu0 0.0
        %828 = vmatmul.mubr.f32.gmra.mrb[0].mxu0 %v743
        %v829 = vpop.f32.mrb[0].mxu0
        %v830 = vadd.f32 0.0, %v829
        %v831 = vpop.f32.mrb[0].mxu0
        %v832 = vadd.f32 0.0, %v831
        %833 = vdwg.mxu0
        %v834 = vadd.f32 %v698, %v812
        %v835 = vadd.f32 %v700, %v814
        %v836 = vadd.f32 %v704, %v818
        %v837 = vadd.f32 %v706, %v820
        %v838 = vadd.f32 %v710, %v824
        %v839 = vadd.f32 %v712, %v826
        %v840 = vadd.f32 %v716, %v830
        %v841 = vadd.f32 %v718, %v832
        %v842 = vld [vmem:[%s491 + $0x3] sm:$0xff]
        %v843 = vld [vmem:[%s491 + $0xb] sm:$0xff]
        %v844 = vld [vmem:[%s491 + $0x13] sm:$0xff]
        %v845 = vld [vmem:[%s491 + $0x1b] sm:$0xf]
        %s846 = scalar_lea.vmem %s1, 192
        %v847 = vld [vmem:[%s846] sm:$0xff]
        %v848 = vld [vmem:[%s846 + $0x8] sm:$0xff]
        %v849 = vld [vmem:[%s846 + $0x10] sm:$0xff]
        %v850 = vld [vmem:[%s846 + $0x18] sm:$0xff]
        %v851 = vld [vmem:[%s846 + $0x20] sm:$0xff]
        %v852 = vld [vmem:[%s846 + $0x28] sm:$0xff]
        %v853 = vld [vmem:[%s846 + $0x30] sm:$0xff]
        %v854 = vld [vmem:[%s846 + $0x38] sm:$0xff]
        %v856 = vsel %vm517, %v842, 0
        %v859 = vsel %vm517, %v843, 0
        %v862 = vsel %vm517, %v844, 0
        %v865 = vsel %vm517, %v845, 0
        %867 = vmatprep.subr.mxu0 %v848
        %868 = vmatpush1.msra.mxu0 %v847
        %869 = vmatprep.subr.mxu0 %v850
        %870 = vmatpush1.msra.mxu0 %v849
        %871 = vmatprep.subr.mxu0 %v852
        %872 = vmatpush1.msra.mxu0 %v851
        %873 = vmatprep.subr.mxu0 %v854
        %874 = vmatpush1.msra.mxu0 %v853
        %875 = vmatprep.subr.mxu0 0.0
        %876 = vmatpush1.msra.mxu0 0.0
        %877 = vmatprep.subr.mxu0 0.0
        %878 = vmatpush1.msra.mxu0 0.0
        %879 = vmatprep.subr.mxu0 0.0
        %880 = vmatpush1.msra.mxu0 0.0
        %881 = vmatprep.subr.mxu0 0.0
        %882 = vmatpush1.msra.mxu0 0.0
        %883 = vmatprep.subr.mxu0 0.0
        %884 = vmatpush1.msra.mxu0 0.0
        %885 = vmatprep.subr.mxu0 0.0
        %886 = vmatpush1.msra.mxu0 0.0
        %887 = vmatprep.subr.mxu0 0.0
        %888 = vmatpush1.msra.mxu0 0.0
        %889 = vmatprep.subr.mxu0 0.0
        %890 = vmatpush1.msra.mxu0 0.0
        %891 = vmatprep.subr.mxu0 0.0
        %892 = vmatpush1.msra.mxu0 0.0
        %893 = vmatprep.subr.mxu0 0.0
        %894 = vmatpush1.msra.mxu0 0.0
        %895 = vmatprep.subr.mxu0 0.0
        %896 = vmatpush1.msra.mxu0 0.0
        %897 = vmatprep.subr.mxu0 0.0
        %898 = vmatpush1.msra.mxu0 0.0
        %899 = vmatprep.subr.mxu0 0.0
        %900 = vmatpush1.msra.mxu0 0.0
        %901 = vmatprep.subr.mxu0 0.0
        %902 = vmatpush1.msra.mxu0 0.0
        %903 = vmatprep.subr.mxu0 0.0
        %904 = vmatpush1.msra.mxu0 0.0
        %905 = vmatprep.subr.mxu0 0.0
        %906 = vmatpush1.msra.mxu0 0.0
        %907 = vmatprep.subr.mxu0 0.0
        %908 = vmatpush1.msra.mxu0 0.0
        %909 = vmatprep.subr.mxu0 0.0
        %910 = vmatpush1.msra.mxu0 0.0
        %911 = vmatprep.subr.mxu0 0.0
        %912 = vmatpush1.msra.mxu0 0.0
        %913 = vmatprep.subr.mxu0 0.0
        %914 = vmatpush1.msra.mxu0 0.0
        %915 = vmatprep.subr.mxu0 0.0
        %916 = vmatpush1.msra.mxu0 0.0
        %917 = vmatprep.subr.mxu0 0.0
        %918 = vmatpush1.msra.mxu0 0.0
        %919 = vmatprep.subr.mxu0 0.0
        %920 = vmatpush1.msra.mxu0 0.0
        %921 = vmatprep.subr.mxu0 0.0
        %922 = vmatpush1.msra.mxu0 0.0
        %923 = vmatprep.subr.mxu0 0.0
        %924 = vmatpush1.msra.mxu0 0.0
        %925 = vmatprep.subr.mxu0 0.0
        %926 = vmatpush1.msra.mxu0 0.0
        %927 = vmatprep.subr.mxu0 0.0
        %928 = vmatpush1.msra.mxu0 0.0
        %929 = vmatprep.subr.mxu0 0.0
        %930 = vmatpush1.msra.mxu0 0.0
        %931 = vmatprep.mubr.f32.mxu0 0.0
        %932 = vmatmul.mubr.f32.gmra.mrb[0].mxu0 %v856
        %v933 = vpop.f32.mrb[0].mxu0
        %v934 = vadd.f32 0.0, %v933
        %v935 = vpop.f32.mrb[0].mxu0
        %v936 = vadd.f32 0.0, %v935
        %937 = vmatprep.mubr.f32.mxu0 0.0
        %938 = vmatmul.mubr.f32.gmra.mrb[0].mxu0 %v859
        %v939 = vpop.f32.mrb[0].mxu0
        %v940 = vadd.f32 0.0, %v939
        %v941 = vpop.f32.mrb[0].mxu0
        %v942 = vadd.f32 0.0, %v941
        %943 = vmatprep.mubr.f32.mxu0 0.0
        %944 = vmatmul.mubr.f32.gmra.mrb[0].mxu0 %v862
        %v945 = vpop.f32.mrb[0].mxu0
        %v946 = vadd.f32 0.0, %v945
        %v947 = vpop.f32.mrb[0].mxu0
        %v948 = vadd.f32 0.0, %v947
        %949 = vmatprep.mubr.f32.mxu0 0.0
        %950 = vmatmul.mubr.f32.gmra.mrb[0].mxu0 %v865
        %v951 = vpop.f32.mrb[0].mxu0
        %v952 = vadd.f32 0.0, %v951
        %v953 = vpop.f32.mrb[0].mxu0
        %v954 = vadd.f32 0.0, %v953
        %955 = vdwg.mxu0
        %v956 = vadd.f32 %v834, %v934
        %v957 = vadd.f32 %v835, %v936
        %v958 = vadd.f32 %v836, %v940
        %v959 = vadd.f32 %v837, %v942
        %v960 = vadd.f32 %v838, %v946
        %v961 = vadd.f32 %v839, %v948
        %v962 = vadd.f32 %v840, %v952
        %v963 = vadd.f32 %v841, %v954
        %v964 = vld [vmem:[%s491 + $0x4] sm:$0xff]
        %v965 = vld [vmem:[%s491 + $0xc] sm:$0xff]
        %v966 = vld [vmem:[%s491 + $0x14] sm:$0xff]
        %v967 = vld [vmem:[%s491 + $0x1c] sm:$0xf]
        %s968 = scalar_lea.vmem %s1, 256
        %v969 = vld [vmem:[%s968] sm:$0xff]
        %v970 = vld [vmem:[%s968 + $0x8] sm:$0xff]
        %v971 = vld [vmem:[%s968 + $0x10] sm:$0xff]
        %v972 = vld [vmem:[%s968 + $0x18] sm:$0xff]
        %v973 = vld [vmem:[%s968 + $0x20] sm:$0xff]
        %v974 = vld [vmem:[%s968 + $0x28] sm:$0xff]
        %v975 = vld [vmem:[%s968 + $0x30] sm:$0xff]
        %v976 = vld [vmem:[%s968 + $0x38] sm:$0xff]
        %v978 = vsel %vm517, %v964, 0
        %v981 = vsel %vm517, %v965, 0
        %v984 = vsel %vm517, %v966, 0
        %v987 = vsel %vm517, %v967, 0
        %989 = vmatprep.subr.mxu0 %v970
        %990 = vmatpush1.msra.mxu0 %v969
        %991 = vmatprep.subr.mxu0 %v972
        %992 = vmatpush1.msra.mxu0 %v971
        %993 = vmatprep.subr.mxu0 %v974
        %994 = vmatpush1.msra.mxu0 %v973
        %995 = vmatprep.subr.mxu0 %v976
        %996 = vmatpush1.msra.mxu0 %v975
        %997 = vmatprep.subr.mxu0 0.0
        %998 = vmatpush1.msra.mxu0 0.0
        %999 = vmatprep.subr.mxu0 0.0
        %1000 = vmatpush1.msra.mxu0 0.0
        %1001 = vmatprep.subr.mxu0 0.0
        %1002 = vmatpush1.msra.mxu0 0.0
        %1003 = vmatprep.subr.mxu0 0.0
        %1004 = vmatpush1.msra.mxu0 0.0
        %1005 = vmatprep.subr.mxu0 0.0
        %1006 = vmatpush1.msra.mxu0 0.0
        %1007 = vmatprep.subr.mxu0 0.0
        %1008 = vmatpush1.msra.mxu0 0.0
        %1009 = vmatprep.subr.mxu0 0.0
        %1010 = vmatpush1.msra.mxu0 0.0
        %1011 = vmatprep.subr.mxu0 0.0
        %1012 = vmatpush1.msra.mxu0 0.0
        %1013 = vmatprep.subr.mxu0 0.0
        %1014 = vmatpush1.msra.mxu0 0.0
        %1015 = vmatprep.subr.mxu0 0.0
        %1016 = vmatpush1.msra.mxu0 0.0
        %1017 = vmatprep.subr.mxu0 0.0
        %1018 = vmatpush1.msra.mxu0 0.0
        %1019 = vmatprep.subr.mxu0 0.0
        %1020 = vmatpush1.msra.mxu0 0.0
        %1021 = vmatprep.subr.mxu0 0.0
        %1022 = vmatpush1.msra.mxu0 0.0
        %1023 = vmatprep.subr.mxu0 0.0
        %1024 = vmatpush1.msra.mxu0 0.0
        %1025 = vmatprep.subr.mxu0 0.0
        %1026 = vmatpush1.msra.mxu0 0.0
        %1027 = vmatprep.subr.mxu0 0.0
        %1028 = vmatpush1.msra.mxu0 0.0
        %1029 = vmatprep.subr.mxu0 0.0
        %1030 = vmatpush1.msra.mxu0 0.0
        %1031 = vmatprep.subr.mxu0 0.0
        %1032 = vmatpush1.msra.mxu0 0.0
        %1033 = vmatprep.subr.mxu0 0.0
        %1034 = vmatpush1.msra.mxu0 0.0
        %1035 = vmatprep.subr.mxu0 0.0
        %1036 = vmatpush1.msra.mxu0 0.0
        %1037 = vmatprep.subr.mxu0 0.0
        %1038 = vmatpush1.msra.mxu0 0.0
        %1039 = vmatprep.subr.mxu0 0.0
        %1040 = vmatpush1.msra.mxu0 0.0
        %1041 = vmatprep.subr.mxu0 0.0
        %1042 = vmatpush1.msra.mxu0 0.0
        %1043 = vmatprep.subr.mxu0 0.0
        %1044 = vmatpush1.msra.mxu0 0.0
        %1045 = vmatprep.subr.mxu0 0.0
        %1046 = vmatpush1.msra.mxu0 0.0
        %1047 = vmatprep.subr.mxu0 0.0
        %1048 = vmatpush1.msra.mxu0 0.0
        %1049 = vmatprep.subr.mxu0 0.0
        %1050 = vmatpush1.msra.mxu0 0.0
        %1051 = vmatprep.subr.mxu0 0.0
        %1052 = vmatpush1.msra.mxu0 0.0
        %1053 = vmatprep.mubr.f32.mxu0 0.0
        %1054 = vmatmul.mubr.f32.gmra.mrb[0].mxu0 %v978
        %v1055 = vpop.f32.mrb[0].mxu0
        %v1056 = vadd.f32 0.0, %v1055
        %v1057 = vpop.f32.mrb[0].mxu0
        %v1058 = vadd.f32 0.0, %v1057
        %1059 = vmatprep.mubr.f32.mxu0 0.0
        %1060 = vmatmul.mubr.f32.gmra.mrb[0].mxu0 %v981
        %v1061 = vpop.f32.mrb[0].mxu0
        %v1062 = vadd.f32 0.0, %v1061
        %v1063 = vpop.f32.mrb[0].mxu0
        %v1064 = vadd.f32 0.0, %v1063
        %1065 = vmatprep.mubr.f32.mxu0 0.0
        %1066 = vmatmul.mubr.f32.gmra.mrb[0].mxu0 %v984
        %v1067 = vpop.f32.mrb[0].mxu0
        %v1068 = vadd.f32 0.0, %v1067
        %v1069 = vpop.f32.mrb[0].mxu0
        %v1070 = vadd.f32 0.0, %v1069
        %1071 = vmatprep.mubr.f32.mxu0 0.0
        %1072 = vmatmul.mubr.f32.gmra.mrb[0].mxu0 %v987
        %v1073 = vpop.f32.mrb[0].mxu0
        %v1074 = vadd.f32 0.0, %v1073
        %v1075 = vpop.f32.mrb[0].mxu0
        %v1076 = vadd.f32 0.0, %v1075
        %1077 = vdwg.mxu0
        %v1078 = vadd.f32 %v956, %v1056
        %v1079 = vadd.f32 %v957, %v1058
        %v1080 = vadd.f32 %v958, %v1062
        %v1081 = vadd.f32 %v959, %v1064
        %v1082 = vadd.f32 %v960, %v1068
        %v1083 = vadd.f32 %v961, %v1070
        %v1084 = vadd.f32 %v962, %v1074
        %v1085 = vadd.f32 %v963, %v1076
        %v1086 = vld [vmem:[%s2] sm:$0x3]
        %v1088 = vlaneseq
        %v1089 = vshrl.u32 %v1088, 7
        %v1090 = vsub.s32 0, %v1089
        %v1091 = vrot.slane %v1086, %v1090
        %v1092 = vlaneseq
        %v1093 = vshrl.u32 %v1092, 7
        %v1094 = vsub.s32 1, %v1093
        %v1095 = vrot.slane %v1086, %v1094
        %v1098 = vadd.f32 %v1078, %v1091
        %v1099 = vadd.f32 %v1079, %v1095
        %v1100 = vadd.f32 %v1080, %v1091
        %v1101 = vadd.f32 %v1081, %v1095
        %v1102 = vadd.f32 %v1082, %v1091
        %v1103 = vadd.f32 %v1083, %v1095
        %v1104 = vadd.f32 %v1084, %v1091
        %v1105 = vadd.f32 %v1085, %v1095
        %v1106 = vmax.f32 %v1098, 0.0
        %v1107 = vmax.f32 %v1099, 0.0
        %v1108 = vmax.f32 %v1100, 0.0
        %v1109 = vmax.f32 %v1101, 0.0
        %v1110 = vmax.f32 %v1102, 0.0
        %v1111 = vmax.f32 %v1103, 0.0
        %v1112 = vmax.f32 %v1104, 0.0
        %v1113 = vmax.f32 %v1105, 0.0
        %v1114 = vld [vmem:[%s3] sm:$0xff]
        %v1115 = vld [vmem:[%s3 + $0x8] sm:$0x3f]
        %vm1116 = vcmask 228352
        %v1118 = vsel %vm1116, %v1114, 0
        %v1121 = vsel %vm1116, %v1115, 0
        %vm1123 = vcmask 1043456
        %v1125 = vsel %vm1123, %v1112, 0
        %v1128 = vsel %vm1123, %v1113, 0
        %1130 = vmatprep.subr.mxu0 %v1107
        %1131 = vmatpush1.msra.mxu0 %v1106
        %1132 = vmatprep.subr.mxu0 %v1109
        %1133 = vmatpush1.msra.mxu0 %v1108
        %1134 = vmatprep.subr.mxu0 %v1111
        %1135 = vmatpush1.msra.mxu0 %v1110
        %1136 = vmatprep.subr.mxu0 %v1128
        %1137 = vmatpush1.msra.mxu0 %v1125
        %1138 = vmatprep.subr.mxu0 0.0
        %1139 = vmatpush1.msra.mxu0 0.0
        %1140 = vmatprep.subr.mxu0 0.0
        %1141 = vmatpush1.msra.mxu0 0.0
        %1142 = vmatprep.subr.mxu0 0.0
        %1143 = vmatpush1.msra.mxu0 0.0
        %1144 = vmatprep.subr.mxu0 0.0
        %1145 = vmatpush1.msra.mxu0 0.0
        %1146 = vmatprep.subr.mxu0 0.0
        %1147 = vmatpush1.msra.mxu0 0.0
        %1148 = vmatprep.subr.mxu0 0.0
        %1149 = vmatpush1.msra.mxu0 0.0
        %1150 = vmatprep.subr.mxu0 0.0
        %1151 = vmatpush1.msra.mxu0 0.0
        %1152 = vmatprep.subr.mxu0 0.0
        %1153 = vmatpush1.msra.mxu0 0.0
        %1154 = vmatprep.subr.mxu0 0.0
        %1155 = vmatpush1.msra.mxu0 0.0
        %1156 = vmatprep.subr.mxu0 0.0
        %1157 = vmatpush1.msra.mxu0 0.0
        %1158 = vmatprep.subr.mxu0 0.0
        %1159 = vmatpush1.msra.mxu0 0.0
        %1160 = vmatprep.subr.mxu0 0.0
        %1161 = vmatpush1.msra.mxu0 0.0
        %1162 = vmatprep.subr.mxu0 0.0
        %1163 = vmatpush1.msra.mxu0 0.0
        %1164 = vmatprep.subr.mxu0 0.0
        %1165 = vmatpush1.msra.mxu0 0.0
        %1166 = vmatprep.subr.mxu0 0.0
        %1167 = vmatpush1.msra.mxu0 0.0
        %1168 = vmatprep.subr.mxu0 0.0
        %1169 = vmatpush1.msra.mxu0 0.0
        %1170 = vmatprep.subr.mxu0 0.0
        %1171 = vmatpush1.msra.mxu0 0.0
        %1172 = vmatprep.subr.mxu0 0.0
        %1173 = vmatpush1.msra.mxu0 0.0
        %1174 = vmatprep.subr.mxu0 0.0
        %1175 = vmatpush1.msra.mxu0 0.0
        %1176 = vmatprep.subr.mxu0 0.0
        %1177 = vmatpush1.msra.mxu0 0.0
        %1178 = vmatprep.subr.mxu0 0.0
        %1179 = vmatpush1.msra.mxu0 0.0
        %1180 = vmatprep.subr.mxu0 0.0
        %1181 = vmatpush1.msra.mxu0 0.0
        %1182 = vmatprep.subr.mxu0 0.0
        %1183 = vmatpush1.msra.mxu0 0.0
        %1184 = vmatprep.subr.mxu0 0.0
        %1185 = vmatpush1.msra.mxu0 0.0
        %1186 = vmatprep.subr.mxu0 0.0
        %1187 = vmatpush1.msra.mxu0 0.0
        %1188 = vmatprep.subr.mxu0 0.0
        %1189 = vmatpush1.msra.mxu0 0.0
        %1190 = vmatprep.subr.mxu0 0.0
        %1191 = vmatpush1.msra.mxu0 0.0
        %1192 = vmatprep.subr.mxu0 0.0
        %1193 = vmatpush1.msra.mxu0 0.0
        %1194 = vmatprep.mubr.f32.mxu0 0.0
        %1195 = vmatmul.mubr.f32.gmra.mrb[0].mxu0 %v1118
        %v1196 = vpop.f32.mrb[0].mxu0
        %v1197 = vadd.f32 0.0, %v1196
        %v1198 = vpop.f32.mrb[0].mxu0
        %v1199 = vadd.f32 0.0, %v1198
        %1200 = vmatprep.mubr.f32.mxu0 0.0
        %1201 = vmatmul.mubr.f32.gmra.mrb[0].mxu0 %v1121
        %v1202 = vpop.f32.mrb[0].mxu0
        %v1203 = vadd.f32 0.0, %v1202
        %v1204 = vpop.f32.mrb[0].mxu0
        %v1205 = vadd.f32 0.0, %v1204
        %1206 = vdwg.mxu0
        %s1207 = scalar_lea.vmem %s3, 16
        %v1208 = vld [vmem:[%s1207] sm:$0xff]
        %v1209 = vld [vmem:[%s1207 + $0x8] sm:$0x3f]
        %v1211 = vsel %vm1116, %v1208, 0
        %v1214 = vsel %vm1116, %v1209, 0
        %1216 = vmatprep.subr.mxu0 %v1107
        %1217 = vmatpush1.msra.mxu0 %v1106
        %1218 = vmatprep.subr.mxu0 %v1109
        %1219 = vmatpush1.msra.mxu0 %v1108
        %1220 = vmatprep.subr.mxu0 %v1111
        %1221 = vmatpush1.msra.mxu0 %v1110
        %1222 = vmatprep.subr.mxu0 %v1128
        %1223 = vmatpush1.msra.mxu0 %v1125
        %1224 = vmatprep.subr.mxu0 0.0
        %1225 = vmatpush1.msra.mxu0 0.0
        %1226 = vmatprep.subr.mxu0 0.0
        %1227 = vmatpush1.msra.mxu0 0.0
        %1228 = vmatprep.subr.mxu0 0.0
        %1229 = vmatpush1.msra.mxu0 0.0
        %1230 = vmatprep.subr.mxu0 0.0
        %1231 = vmatpush1.msra.mxu0 0.0
        %1232 = vmatprep.subr.mxu0 0.0
        %1233 = vmatpush1.msra.mxu0 0.0
        %1234 = vmatprep.subr.mxu0 0.0
        %1235 = vmatpush1.msra.mxu0 0.0
        %1236 = vmatprep.subr.mxu0 0.0
        %1237 = vmatpush1.msra.mxu0 0.0
        %1238 = vmatprep.subr.mxu0 0.0
        %1239 = vmatpush1.msra.mxu0 0.0
        %1240 = vmatprep.subr.mxu0 0.0
        %1241 = vmatpush1.msra.mxu0 0.0
        %1242 = vmatprep.subr.mxu0 0.0
        %1243 = vmatpush1.msra.mxu0 0.0
        %1244 = vmatprep.subr.mxu0 0.0
        %1245 = vmatpush1.msra.mxu0 0.0
        %1246 = vmatprep.subr.mxu0 0.0
        %1247 = vmatpush1.msra.mxu0 0.0
        %1248 = vmatprep.subr.mxu0 0.0
        %1249 = vmatpush1.msra.mxu0 0.0
        %1250 = vmatprep.subr.mxu0 0.0
        %1251 = vmatpush1.msra.mxu0 0.0
        %1252 = vmatprep.subr.mxu0 0.0
        %1253 = vmatpush1.msra.mxu0 0.0
        %1254 = vmatprep.subr.mxu0 0.0
        %1255 = vmatpush1.msra.mxu0 0.0
        %1256 = vmatprep.subr.mxu0 0.0
        %1257 = vmatpush1.msra.mxu0 0.0
        %1258 = vmatprep.subr.mxu0 0.0
        %1259 = vmatpush1.msra.mxu0 0.0
        %1260 = vmatprep.subr.mxu0 0.0
        %1261 = vmatpush1.msra.mxu0 0.0
        %1262 = vmatprep.subr.mxu0 0.0
        %1263 = vmatpush1.msra.mxu0 0.0
        %1264 = vmatprep.subr.mxu0 0.0
        %1265 = vmatpush1.msra.mxu0 0.0
        %1266 = vmatprep.subr.mxu0 0.0
        %1267 = vmatpush1.msra.mxu0 0.0
        %1268 = vmatprep.subr.mxu0 0.0
        %1269 = vmatpush1.msra.mxu0 0.0
        %1270 = vmatprep.subr.mxu0 0.0
        %1271 = vmatpush1.msra.mxu0 0.0
        %1272 = vmatprep.subr.mxu0 0.0
        %1273 = vmatpush1.msra.mxu0 0.0
        %1274 = vmatprep.subr.mxu0 0.0
        %1275 = vmatpush1.msra.mxu0 0.0
        %1276 = vmatprep.subr.mxu0 0.0
        %1277 = vmatpush1.msra.mxu0 0.0
        %1278 = vmatprep.subr.mxu0 0.0
        %1279 = vmatpush1.msra.mxu0 0.0
        %1280 = vmatprep.mubr.f32.mxu0 0.0
        %1281 = vmatmul.mubr.f32.gmra.mrb[0].mxu0 %v1211
        %v1282 = vpop.f32.mrb[0].mxu0
        %v1283 = vadd.f32 0.0, %v1282
        %v1284 = vpop.f32.mrb[0].mxu0
        %v1285 = vadd.f32 0.0, %v1284
        %1286 = vmatprep.mubr.f32.mxu0 0.0
        %1287 = vmatmul.mubr.f32.gmra.mrb[0].mxu0 %v1214
        %v1288 = vpop.f32.mrb[0].mxu0
        %v1289 = vadd.f32 0.0, %v1288
        %v1290 = vpop.f32.mrb[0].mxu0
        %v1291 = vadd.f32 0.0, %v1290
        %1292 = vdwg.mxu0
        %v1293 = vmax.f32 %v1197, %v1283
        %v1294 = vmax.f32 %v1199, %v1285
        %v1295 = vmax.f32 %v1203, %v1289
        %v1296 = vmax.f32 %v1205, %v1291
        %v1297 = vld [vmem:[%s4] sm:$0xff]
        %v1298 = vld [vmem:[%s4 + $0x8] sm:$0xff]
        %v1299 = vld [vmem:[%s4 + $0x10] sm:$0xff]
        %v1300 = vld [vmem:[%s4 + $0x18] sm:$0xff]
        %v1301 = vld [vmem:[%s4 + $0x20] sm:$0xff]
        %v1302 = vld [vmem:[%s4 + $0x28] sm:$0xff]
        %v1303 = vld [vmem:[%s4 + $0x30] sm:$0xff]
        %v1304 = vld [vmem:[%s4 + $0x38] sm:$0xff]
        %v1305 = vld [vmem:[%s4 + $0x40] sm:$0xff]
        %v1306 = vld [vmem:[%s4 + $0x48] sm:$0xff]
        %v1307 = vld [vmem:[%s4 + $0x50] sm:$0xff]
        %v1308 = vld [vmem:[%s4 + $0x58] sm:$0xff]
        %v1309 = vld [vmem:[%s4 + $0x60] sm:$0xff]
        %v1310 = vld [vmem:[%s4 + $0x68] sm:$0xff]
        %v1311 = vld [vmem:[%s4 + $0x70] sm:$0xff]
        %v1312 = vld [vmem:[%s4 + $0x78] sm:$0xff]
        %v1313 = vld [vmem:[%s4 + $0x80] sm:$0xff]
        %v1314 = vld [vmem:[%s4 + $0x88] sm:$0xff]
        %v1315 = vld [vmem:[%s4 + $0x90] sm:$0xff]
        %v1316 = vld [vmem:[%s4 + $0x98] sm:$0xff]
        %v1317 = vld [vmem:[%s4 + $0xa0] sm:$0xff]
        %vm1318 = vcmask 326656
        %v1320 = vsel %vm1318, %v1294, 0
        %v1323 = vsel %vm1318, %v1296, 0
        %1325 = vmatprep.subr.mxu0 0.0
        %1326 = vmatpush1.msra.mxu0 %v1297
        %1327 = vmatprep.subr.mxu0 0.0
        %1328 = vmatpush1.msra.mxu0 %v1298
        %1329 = vmatprep.subr.mxu0 0.0
        %1330 = vmatpush1.msra.mxu0 %v1299
        %1331 = vmatprep.subr.mxu0 0.0
        %1332 = vmatpush1.msra.mxu0 %v1300
        %1333 = vmatprep.subr.mxu0 0.0
        %1334 = vmatpush1.msra.mxu0 %v1301
        %1335 = vmatprep.subr.mxu0 0.0
        %1336 = vmatpush1.msra.mxu0 %v1302
        %1337 = vmatprep.subr.mxu0 0.0
        %1338 = vmatpush1.msra.mxu0 %v1303
        %1339 = vmatprep.subr.mxu0 0.0
        %1340 = vmatpush1.msra.mxu0 %v1304
        %1341 = vmatprep.subr.mxu0 0.0
        %1342 = vmatpush1.msra.mxu0 %v1305
        %1343 = vmatprep.subr.mxu0 0.0
        %1344 = vmatpush1.msra.mxu0 %v1306
        %1345 = vmatprep.subr.mxu0 0.0
        %1346 = vmatpush1.msra.mxu0 %v1307
        %1347 = vmatprep.subr.mxu0 0.0
        %1348 = vmatpush1.msra.mxu0 %v1308
        %1349 = vmatprep.subr.mxu0 0.0
        %1350 = vmatpush1.msra.mxu0 %v1309
        %1351 = vmatprep.subr.mxu0 0.0
        %1352 = vmatpush1.msra.mxu0 %v1310
        %1353 = vmatprep.subr.mxu0 0.0
        %1354 = vmatpush1.msra.mxu0 %v1311
        %1355 = vmatprep.subr.mxu0 0.0
        %1356 = vmatpush1.msra.mxu0 %v1312
        %1357 = vmatprep.subr.mxu0 0.0
        %1358 = vmatpush1.msra.mxu0 %v1313
        %1359 = vmatprep.subr.mxu0 0.0
        %1360 = vmatpush1.msra.mxu0 %v1314
        %1361 = vmatprep.subr.mxu0 0.0
        %1362 = vmatpush1.msra.mxu0 %v1315
        %1363 = vmatprep.subr.mxu0 0.0
        %1364 = vmatpush1.msra.mxu0 %v1316
        %1365 = vmatprep.subr.mxu0 0.0
        %1366 = vmatpush1.msra.mxu0 %v1317
        %1367 = vmatprep.subr.mxu0 0.0
        %1368 = vmatpush1.msra.mxu0 0.0
        %1369 = vmatprep.subr.mxu0 0.0
        %1370 = vmatpush1.msra.mxu0 0.0
        %1371 = vmatprep.subr.mxu0 0.0
        %1372 = vmatpush1.msra.mxu0 0.0
        %1373 = vmatprep.subr.mxu0 0.0
        %1374 = vmatpush1.msra.mxu0 0.0
        %1375 = vmatprep.subr.mxu0 0.0
        %1376 = vmatpush1.msra.mxu0 0.0
        %1377 = vmatprep.subr.mxu0 0.0
        %1378 = vmatpush1.msra.mxu0 0.0
        %1379 = vmatprep.subr.mxu0 0.0
        %1380 = vmatpush1.msra.mxu0 0.0
        %1381 = vmatprep.subr.mxu0 0.0
        %1382 = vmatpush1.msra.mxu0 0.0
        %1383 = vmatprep.subr.mxu0 0.0
        %1384 = vmatpush1.msra.mxu0 0.0
        %1385 = vmatprep.subr.mxu0 0.0
        %1386 = vmatpush1.msra.mxu0 0.0
        %1387 = vmatprep.subr.mxu0 0.0
        %1388 = vmatpush1.msra.mxu0 0.0
        %1389 = vmatprep.mubr.f32.mxu0 %v1320
        %1390 = vmatmul.mubr.f32.gmra.mrb[0].mxu0 %v1293
        %v1391 = vpop.f32.mrb[0].mxu0
        %v1392 = vadd.f32 0.0, %v1391
        %v1393 = vpop.f32.mrb[0].mxu0
        %1394 = vmatprep.mubr.f32.mxu0 %v1323
        %1395 = vmatmul.mubr.f32.gmra.mrb[0].mxu0 %v1295
        %v1396 = vpop.f32.mrb[0].mxu0
        %v1397 = vadd.f32 0.0, %v1396
        %v1398 = vpop.f32.mrb[0].mxu0
        %1399 = vdwg.mxu0
        %s1400 = scalar_lea.vmem %s4, 168
        %v1401 = vld [vmem:[%s1400] sm:$0xff]
        %v1402 = vld [vmem:[%s1400 + $0x8] sm:$0xff]
        %v1403 = vld [vmem:[%s1400 + $0x10] sm:$0xff]
        %v1404 = vld [vmem:[%s1400 + $0x18] sm:$0xff]
        %v1405 = vld [vmem:[%s1400 + $0x20] sm:$0xff]
        %v1406 = vld [vmem:[%s1400 + $0x28] sm:$0xff]
        %v1407 = vld [vmem:[%s1400 + $0x30] sm:$0xff]
        %v1408 = vld [vmem:[%s1400 + $0x38] sm:$0xff]
        %v1409 = vld [vmem:[%s1400 + $0x40] sm:$0xff]
        %v1410 = vld [vmem:[%s1400 + $0x48] sm:$0xff]
        %v1411 = vld [vmem:[%s1400 + $0x50] sm:$0xff]
        %v1412 = vld [vmem:[%s1400 + $0x58] sm:$0xff]
        %v1413 = vld [vmem:[%s1400 + $0x60] sm:$0xff]
        %v1414 = vld [vmem:[%s1400 + $0x68] sm:$0xff]
        %v1415 = vld [vmem:[%s1400 + $0x70] sm:$0xff]
        %v1416 = vld [vmem:[%s1400 + $0x78] sm:$0xff]
        %v1417 = vld [vmem:[%s1400 + $0x80] sm:$0xff]
        %v1418 = vld [vmem:[%s1400 + $0x88] sm:$0xff]
        %v1419 = vld [vmem:[%s1400 + $0x90] sm:$0xff]
        %v1420 = vld [vmem:[%s1400 + $0x98] sm:$0xff]
        %v1421 = vld [vmem:[%s1400 + $0xa0] sm:$0xff]
        %1422 = vmatprep.subr.mxu0 0.0
        %1423 = vmatpush1.msra.mxu0 %v1401
        %1424 = vmatprep.subr.mxu0 0.0
        %1425 = vmatpush1.msra.mxu0 %v1402
        %1426 = vmatprep.subr.mxu0 0.0
        %1427 = vmatpush1.msra.mxu0 %v1403
        %1428 = vmatprep.subr.mxu0 0.0
        %1429 = vmatpush1.msra.mxu0 %v1404
        %1430 = vmatprep.subr.mxu0 0.0
        %1431 = vmatpush1.msra.mxu0 %v1405
        %1432 = vmatprep.subr.mxu0 0.0
        %1433 = vmatpush1.msra.mxu0 %v1406
        %1434 = vmatprep.subr.mxu0 0.0
        %1435 = vmatpush1.msra.mxu0 %v1407
        %1436 = vmatprep.subr.mxu0 0.0
        %1437 = vmatpush1.msra.mxu0 %v1408
        %1438 = vmatprep.subr.mxu0 0.0
        %1439 = vmatpush1.msra.mxu0 %v1409
        %1440 = vmatprep.subr.mxu0 0.0
        %1441 = vmatpush1.msra.mxu0 %v1410
        %1442 = vmatprep.subr.mxu0 0.0
        %1443 = vmatpush1.msra.mxu0 %v1411
        %1444 = vmatprep.subr.mxu0 0.0
        %1445 = vmatpush1.msra.mxu0 %v1412
        %1446 = vmatprep.subr.mxu0 0.0
        %1447 = vmatpush1.msra.mxu0 %v1413
        %1448 = vmatprep.subr.mxu0 0.0
        %1449 = vmatpush1.msra.mxu0 %v1414
        %1450 = vmatprep.subr.mxu0 0.0
        %1451 = vmatpush1.msra.mxu0 %v1415
        %1452 = vmatprep.subr.mxu0 0.0
        %1453 = vmatpush1.msra.mxu0 %v1416
        %1454 = vmatprep.subr.mxu0 0.0
        %1455 = vmatpush1.msra.mxu0 %v1417
        %1456 = vmatprep.subr.mxu0 0.0
        %1457 = vmatpush1.msra.mxu0 %v1418
        %1458 = vmatprep.subr.mxu0 0.0
        %1459 = vmatpush1.msra.mxu0 %v1419
        %1460 = vmatprep.subr.mxu0 0.0
        %1461 = vmatpush1.msra.mxu0 %v1420
        %1462 = vmatprep.subr.mxu0 0.0
        %1463 = vmatpush1.msra.mxu0 %v1421
        %1464 = vmatprep.subr.mxu0 0.0
        %1465 = vmatpush1.msra.mxu0 0.0
        %1466 = vmatprep.subr.mxu0 0.0
        %1467 = vmatpush1.msra.mxu0 0.0
        %1468 = vmatprep.subr.mxu0 0.0
        %1469 = vmatpush1.msra.mxu0 0.0
        %1470 = vmatprep.subr.mxu0 0.0
        %1471 = vmatpush1.msra.mxu0 0.0
        %1472 = vmatprep.subr.mxu0 0.0
        %1473 = vmatpush1.msra.mxu0 0.0
        %1474 = vmatprep.subr.mxu0 0.0
        %1475 = vmatpush1.msra.mxu0 0.0
        %1476 = vmatprep.subr.mxu0 0.0
        %1477 = vmatpush1.msra.mxu0 0.0
        %1478 = vmatprep.subr.mxu0 0.0
        %1479 = vmatpush1.msra.mxu0 0.0
        %1480 = vmatprep.subr.mxu0 0.0
        %1481 = vmatpush1.msra.mxu0 0.0
        %1482 = vmatprep.subr.mxu0 0.0
        %1483 = vmatpush1.msra.mxu0 0.0
        %1484 = vmatprep.subr.mxu0 0.0
        %1485 = vmatpush1.msra.mxu0 0.0
        %1486 = vmatprep.mubr.f32.mxu0 %v1320
        %1487 = vmatmul.mubr.f32.gmra.mrb[0].mxu0 %v1293
        %v1488 = vpop.f32.mrb[0].mxu0
        %v1489 = vadd.f32 0.0, %v1488
        %v1490 = vpop.f32.mrb[0].mxu0
        %1491 = vmatprep.mubr.f32.mxu0 %v1323
        %1492 = vmatmul.mubr.f32.gmra.mrb[0].mxu0 %v1295
        %v1493 = vpop.f32.mrb[0].mxu0
        %v1494 = vadd.f32 0.0, %v1493
        %v1495 = vpop.f32.mrb[0].mxu0
        %1496 = vdwg.mxu0
        %v1497 = vmax.f32 %v1392, %v1489
        %v1498 = vmax.f32 %v1397, %v1494
        %vm1499 = vcmask 687104
        %1500 = vst.msk [vmem:[#allocation2] sm:$0xff] %vm1499, %v1497
        %vm1501 = vcmask 685056
        %1502 = vst.msk [vmem:[#allocation2 + $0x8] sm:$0x3f] %vm1501, %v1498
        %v1503 = vld [vmem:[#allocation2] sm:$0xff]
        %v1504 = vld [vmem:[#allocation2 + $0x8] sm:$0x3]
        %v1505 = vld [vmem:[%s5] sm:$0xff]
        %v1506 = vld [vmem:[%s5 + $0x8] sm:$0xff]
        %v1507 = vld [vmem:[%s5 + $0x10] sm:$0xff]
        %v1508 = vld [vmem:[%s5 + $0x18] sm:$0xff]
        %v1509 = vld [vmem:[%s5 + $0x20] sm:$0xff]
        %v1510 = vld [vmem:[%s5 + $0x28] sm:$0xff]
        %v1511 = vld [vmem:[%s5 + $0x30] sm:$0xff]
        %v1512 = vld [vmem:[%s5 + $0x38] sm:$0xff]
        %v1513 = vld [vmem:[%s5 + $0x40] sm:$0xff]
        %v1514 = vld [vmem:[%s5 + $0x48] sm:$0xff]
        %v1515 = vld [vmem:[%s5 + $0x50] sm:$0xff]
        %v1516 = vld [vmem:[%s5 + $0x58] sm:$0xff]
        %v1517 = vld [vmem:[%s5 + $0x60] sm:$0xff]
        %v1518 = vld [vmem:[%s5 + $0x68] sm:$0xff]
        %v1519 = vld [vmem:[%s5 + $0x70] sm:$0xff]
        %v1520 = vld [vmem:[%s5 + $0x78] sm:$0xff]
        %v1521 = vld [vmem:[%s5 + $0x80] sm:$0xff]
        %v1522 = vld [vmem:[%s5 + $0x88] sm:$0xff]
        %v1523 = vld [vmem:[%s5 + $0x90] sm:$0xff]
        %v1524 = vld [vmem:[%s5 + $0x98] sm:$0xff]
        %v1525 = vld [vmem:[%s5 + $0xa0] sm:$0xf]
        %v1526 = vld [vmem:[%s5 + $0xa8] sm:$0xf]
        %v1527 = vld [vmem:[#allocation2 + $0x1] sm:$0xff]
        %v1528 = vld [vmem:[#allocation2 + $0x9] sm:$0x3]
        %s1529 = scalar_lea.vmem %s5, 176
        %v1530 = vld [vmem:[%s1529] sm:$0xff]
        %v1531 = vld [vmem:[%s1529 + $0x8] sm:$0xff]
        %v1532 = vld [vmem:[%s1529 + $0x10] sm:$0xff]
        %v1533 = vld [vmem:[%s1529 + $0x18] sm:$0xff]
        %v1534 = vld [vmem:[%s1529 + $0x20] sm:$0xff]
        %v1535 = vld [vmem:[%s1529 + $0x28] sm:$0xff]
        %v1536 = vld [vmem:[%s1529 + $0x30] sm:$0xff]
        %v1537 = vld [vmem:[%s1529 + $0x38] sm:$0xff]
        %v1538 = vld [vmem:[%s1529 + $0x40] sm:$0xff]
        %v1539 = vld [vmem:[%s1529 + $0x48] sm:$0xff]
        %v1540 = vld [vmem:[%s1529 + $0x50] sm:$0xff]
        %v1541 = vld [vmem:[%s1529 + $0x58] sm:$0xff]
        %v1542 = vld [vmem:[%s1529 + $0x60] sm:$0xff]
        %v1543 = vld [vmem:[%s1529 + $0x68] sm:$0xff]
        %v1544 = vld [vmem:[%s1529 + $0x70] sm:$0xff]
        %v1545 = vld [vmem:[%s1529 + $0x78] sm:$0xff]
        %v1546 = vld [vmem:[%s1529 + $0x80] sm:$0xff]
        %v1547 = vld [vmem:[%s1529 + $0x88] sm:$0xff]
        %v1548 = vld [vmem:[%s1529 + $0x90] sm:$0xff]
        %v1549 = vld [vmem:[%s1529 + $0x98] sm:$0xff]
        %v1550 = vld [vmem:[%s1529 + $0xa0] sm:$0xf]
        %v1551 = vld [vmem:[%s1529 + $0xa8] sm:$0xf]
        %v1553 = vsel %vm1499, %v1527, 0
        %v1556 = vsel %vm1499, %v1528, 0
        %v1559 = vsel %vm1123, %v1550, 0
        %v1562 = vsel %vm1123, %v1551, 0
        %1564 = vmatprep.subr.mxu0 %v1531
        %1565 = vmatpush1.msra.mxu0 %v1530
        %1566 = vmatprep.subr.mxu0 %v1533
        %1567 = vmatpush1.msra.mxu0 %v1532
        %1568 = vmatprep.subr.mxu0 %v1535
        %1569 = vmatpush1.msra.mxu0 %v1534
        %1570 = vmatprep.subr.mxu0 %v1537
        %1571 = vmatpush1.msra.mxu0 %v1536
        %1572 = vmatprep.subr.mxu0 %v1539
        %1573 = vmatpush1.msra.mxu0 %v1538
        %1574 = vmatprep.subr.mxu0 %v1541
        %1575 = vmatpush1.msra.mxu0 %v1540
        %1576 = vmatprep.subr.mxu0 %v1543
        %1577 = vmatpush1.msra.mxu0 %v1542
        %1578 = vmatprep.subr.mxu0 %v1545
        %1579 = vmatpush1.msra.mxu0 %v1544
        %1580 = vmatprep.subr.mxu0 %v1547
        %1581 = vmatpush1.msra.mxu0 %v1546
        %1582 = vmatprep.subr.mxu0 %v1549
        %1583 = vmatpush1.msra.mxu0 %v1548
        %1584 = vmatprep.subr.mxu0 %v1562
        %1585 = vmatpush1.msra.mxu0 %v1559
        %1586 = vmatprep.subr.mxu0 0.0
        %1587 = vmatpush1.msra.mxu0 0.0
        %1588 = vmatprep.subr.mxu0 0.0
        %1589 = vmatpush1.msra.mxu0 0.0
        %1590 = vmatprep.subr.mxu0 0.0
        %1591 = vmatpush1.msra.mxu0 0.0
        %1592 = vmatprep.subr.mxu0 0.0
        %1593 = vmatpush1.msra.mxu0 0.0
        %1594 = vmatprep.subr.mxu0 0.0
        %1595 = vmatpush1.msra.mxu0 0.0
        %1596 = vmatprep.subr.mxu0 0.0
        %1597 = vmatpush1.msra.mxu0 0.0
        %1598 = vmatprep.subr.mxu0 0.0
        %1599 = vmatpush1.msra.mxu0 0.0
        %1600 = vmatprep.subr.mxu0 0.0
        %1601 = vmatpush1.msra.mxu0 0.0
        %1602 = vmatprep.subr.mxu0 0.0
        %1603 = vmatpush1.msra.mxu0 0.0
        %1604 = vmatprep.subr.mxu0 0.0
        %1605 = vmatpush1.msra.mxu0 0.0
        %1606 = vmatprep.subr.mxu0 0.0
        %1607 = vmatpush1.msra.mxu0 0.0
        %1608 = vmatprep.subr.mxu0 0.0
        %1609 = vmatpush1.msra.mxu0 0.0
        %1610 = vmatprep.subr.mxu0 0.0
        %1611 = vmatpush1.msra.mxu0 0.0
        %1612 = vmatprep.subr.mxu0 0.0
        %1613 = vmatpush1.msra.mxu0 0.0
        %1614 = vmatprep.subr.mxu0 0.0
        %1615 = vmatpush1.msra.mxu0 0.0
        %1616 = vmatprep.subr.mxu0 0.0
        %1617 = vmatpush1.msra.mxu0 0.0
        %1618 = vmatprep.subr.mxu0 0.0
        %1619 = vmatpush1.msra.mxu0 0.0
        %1620 = vmatprep.subr.mxu0 0.0
        %1621 = vmatpush1.msra.mxu0 0.0
        %1622 = vmatprep.subr.mxu0 0.0
        %1623 = vmatpush1.msra.mxu0 0.0
        %1624 = vmatprep.subr.mxu0 0.0
        %1625 = vmatpush1.msra.mxu0 0.0
        %1626 = vmatprep.subr.mxu0 0.0
        %1627 = vmatpush1.msra.mxu0 0.0
        %1628 = vmatprep.mubr.f32.mxu0 0.0
        %1629 = vmatmul.mubr.f32.gmra.mrb[0].mxu0 %v1553
        %v1630 = vpop.f32.mrb[0].mxu0
        %v1631 = vadd.f32 0.0, %v1630
        %v1632 = vpop.f32.mrb[0].mxu0
        %v1633 = vadd.f32 0.0, %v1632
        %1634 = vmatprep.mubr.f32.mxu0 0.0
        %1635 = vmatmul.mubr.f32.gmra.mrb[0].mxu0 %v1556
        %v1636 = vpop.f32.mrb[0].mxu0
        %v1637 = vadd.f32 0.0, %v1636
        %v1638 = vpop.f32.mrb[0].mxu0
        %v1639 = vadd.f32 0.0, %v1638
        %1640 = vdwg.mxu0
        %v1642 = vsel %vm1499, %v1503, 0
        %v1645 = vsel %vm1499, %v1504, 0
        %v1648 = vsel %vm1123, %v1525, 0
        %v1651 = vsel %vm1123, %v1526, 0
        %1653 = vmatprep.subr.mxu0 %v1506
        %1654 = vmatpush1.msra.mxu0 %v1505
        %1655 = vmatprep.subr.mxu0 %v1508
        %1656 = vmatpush1.msra.mxu0 %v1507
        %1657 = vmatprep.subr.mxu0 %v1510
        %1658 = vmatpush1.msra.mxu0 %v1509
        %1659 = vmatprep.subr.mxu0 %v1512
        %1660 = vmatpush1.msra.mxu0 %v1511
        %1661 = vmatprep.subr.mxu0 %v1514
        %1662 = vmatpush1.msra.mxu0 %v1513
        %1663 = vmatprep.subr.mxu0 %v1516
        %1664 = vmatpush1.msra.mxu0 %v1515
        %1665 = vmatprep.subr.mxu0 %v1518
        %1666 = vmatpush1.msra.mxu0 %v1517
        %1667 = vmatprep.subr.mxu0 %v1520
        %1668 = vmatpush1.msra.mxu0 %v1519
        %1669 = vmatprep.subr.mxu0 %v1522
        %1670 = vmatpush1.msra.mxu0 %v1521
        %1671 = vmatprep.subr.mxu0 %v1524
        %1672 = vmatpush1.msra.mxu0 %v1523
        %1673 = vmatprep.subr.mxu0 %v1651
        %1674 = vmatpush1.msra.mxu0 %v1648
        %1675 = vmatprep.subr.mxu0 0.0
        %1676 = vmatpush1.msra.mxu0 0.0
        %1677 = vmatprep.subr.mxu0 0.0
        %1678 = vmatpush1.msra.mxu0 0.0
        %1679 = vmatprep.subr.mxu0 0.0
        %1680 = vmatpush1.msra.mxu0 0.0
        %1681 = vmatprep.subr.mxu0 0.0
        %1682 = vmatpush1.msra.mxu0 0.0
        %1683 = vmatprep.subr.mxu0 0.0
        %1684 = vmatpush1.msra.mxu0 0.0
        %1685 = vmatprep.subr.mxu0 0.0
        %1686 = vmatpush1.msra.mxu0 0.0
        %1687 = vmatprep.subr.mxu0 0.0
        %1688 = vmatpush1.msra.mxu0 0.0
        %1689 = vmatprep.subr.mxu0 0.0
        %1690 = vmatpush1.msra.mxu0 0.0
        %1691 = vmatprep.subr.mxu0 0.0
        %1692 = vmatpush1.msra.mxu0 0.0
        %1693 = vmatprep.subr.mxu0 0.0
        %1694 = vmatpush1.msra.mxu0 0.0
        %1695 = vmatprep.subr.mxu0 0.0
        %1696 = vmatpush1.msra.mxu0 0.0
        %1697 = vmatprep.subr.mxu0 0.0
        %1698 = vmatpush1.msra.mxu0 0.0
        %1699 = vmatprep.subr.mxu0 0.0
        %1700 = vmatpush1.msra.mxu0 0.0
        %1701 = vmatprep.subr.mxu0 0.0
        %1702 = vmatpush1.msra.mxu0 0.0
        %1703 = vmatprep.subr.mxu0 0.0
        %1704 = vmatpush1.msra.mxu0 0.0
        %1705 = vmatprep.subr.mxu0 0.0
        %1706 = vmatpush1.msra.mxu0 0.0
        %1707 = vmatprep.subr.mxu0 0.0
        %1708 = vmatpush1.msra.mxu0 0.0
        %1709 = vmatprep.subr.mxu0 0.0
        %1710 = vmatpush1.msra.mxu0 0.0
        %1711 = vmatprep.subr.mxu0 0.0
        %1712 = vmatpush1.msra.mxu0 0.0
        %1713 = vmatprep.subr.mxu0 0.0
        %1714 = vmatpush1.msra.mxu0 0.0
        %1715 = vmatprep.subr.mxu0 0.0
        %1716 = vmatpush1.msra.mxu0 0.0
        %1717 = vmatprep.mubr.f32.mxu0 0.0
        %1718 = vmatmul.mubr.f32.gmra.mrb[0].mxu0 %v1642
        %v1719 = vpop.f32.mrb[0].mxu0
        %v1720 = vadd.f32 %v1631, %v1719
        %v1721 = vpop.f32.mrb[0].mxu0
        %v1722 = vadd.f32 %v1633, %v1721
        %1723 = vmatprep.mubr.f32.mxu0 0.0
        %1724 = vmatmul.mubr.f32.gmra.mrb[0].mxu0 %v1645
        %v1725 = vpop.f32.mrb[0].mxu0
        %v1726 = vadd.f32 %v1637, %v1725
        %v1727 = vpop.f32.mrb[0].mxu0
        %v1728 = vadd.f32 %v1639, %v1727
        %1729 = vdwg.mxu0
        %v1730 = vld [vmem:[#allocation2 + $0x2] sm:$0xff]
        %v1731 = vld [vmem:[#allocation2 + $0xa] sm:$0x3]
        %s1732 = scalar_lea.vmem %s5, 352
        %v1733 = vld [vmem:[%s1732] sm:$0xff]
        %v1734 = vld [vmem:[%s1732 + $0x8] sm:$0xff]
        %v1735 = vld [vmem:[%s1732 + $0x10] sm:$0xff]
        %v1736 = vld [vmem:[%s1732 + $0x18] sm:$0xff]
        %v1737 = vld [vmem:[%s1732 + $0x20] sm:$0xff]
        %v1738 = vld [vmem:[%s1732 + $0x28] sm:$0xff]
        %v1739 = vld [vmem:[%s1732 + $0x30] sm:$0xff]
        %v1740 = vld [vmem:[%s1732 + $0x38] sm:$0xff]
        %v1741 = vld [vmem:[%s1732 + $0x40] sm:$0xff]
        %v1742 = vld [vmem:[%s1732 + $0x48] sm:$0xff]
        %v1743 = vld [vmem:[%s1732 + $0x50] sm:$0xff]
        %v1744 = vld [vmem:[%s1732 + $0x58] sm:$0xff]
        %v1745 = vld [vmem:[%s1732 + $0x60] sm:$0xff]
        %v1746 = vld [vmem:[%s1732 + $0x68] sm:$0xff]
        %v1747 = vld [vmem:[%s1732 + $0x70] sm:$0xff]
        %v1748 = vld [vmem:[%s1732 + $0x78] sm:$0xff]
        %v1749 = vld [vmem:[%s1732 + $0x80] sm:$0xff]
        %v1750 = vld [vmem:[%s1732 + $0x88] sm:$0xff]
        %v1751 = vld [vmem:[%s1732 + $0x90] sm:$0xff]
        %v1752 = vld [vmem:[%s1732 + $0x98] sm:$0xff]
        %v1753 = vld [vmem:[%s1732 + $0xa0] sm:$0xf]
        %v1754 = vld [vmem:[%s1732 + $0xa8] sm:$0xf]
        %v1756 = vsel %vm1499, %v1730, 0
        %v1759 = vsel %vm1499, %v1731, 0
        %v1762 = vsel %vm1123, %v1753, 0
        %v1765 = vsel %vm1123, %v1754, 0
        %1767 = vmatprep.subr.mxu0 %v1734
        %1768 = vmatpush1.msra.mxu0 %v1733
        %1769 = vmatprep.subr.mxu0 %v1736
        %1770 = vmatpush1.msra.mxu0 %v1735
        %1771 = vmatprep.subr.mxu0 %v1738
        %1772 = vmatpush1.msra.mxu0 %v1737
        %1773 = vmatprep.subr.mxu0 %v1740
        %1774 = vmatpush1.msra.mxu0 %v1739
        %1775 = vmatprep.subr.mxu0 %v1742
        %1776 = vmatpush1.msra.mxu0 %v1741
        %1777 = vmatprep.subr.mxu0 %v1744
        %1778 = vmatpush1.msra.mxu0 %v1743
        %1779 = vmatprep.subr.mxu0 %v1746
        %1780 = vmatpush1.msra.mxu0 %v1745
        %1781 = vmatprep.subr.mxu0 %v1748
        %1782 = vmatpush1.msra.mxu0 %v1747
        %1783 = vmatprep.subr.mxu0 %v1750
        %1784 = vmatpush1.msra.mxu0 %v1749
        %1785 = vmatprep.subr.mxu0 %v1752
        %1786 = vmatpush1.msra.mxu0 %v1751
        %1787 = vmatprep.subr.mxu0 %v1765
        %1788 = vmatpush1.msra.mxu0 %v1762
        %1789 = vmatprep.subr.mxu0 0.0
        %1790 = vmatpush1.msra.mxu0 0.0
        %1791 = vmatprep.subr.mxu0 0.0
        %1792 = vmatpush1.msra.mxu0 0.0
        %1793 = vmatprep.subr.mxu0 0.0
        %1794 = vmatpush1.msra.mxu0 0.0
        %1795 = vmatprep.subr.mxu0 0.0
        %1796 = vmatpush1.msra.mxu0 0.0
        %1797 = vmatprep.subr.mxu0 0.0
        %1798 = vmatpush1.msra.mxu0 0.0
        %1799 = vmatprep.subr.mxu0 0.0
        %1800 = vmatpush1.msra.mxu0 0.0
        %1801 = vmatprep.subr.mxu0 0.0
        %1802 = vmatpush1.msra.mxu0 0.0
        %1803 = vmatprep.subr.mxu0 0.0
        %1804 = vmatpush1.msra.mxu0 0.0
        %1805 = vmatprep.subr.mxu0 0.0
        %1806 = vmatpush1.msra.mxu0 0.0
        %1807 = vmatprep.subr.mxu0 0.0
        %1808 = vmatpush1.msra.mxu0 0.0
        %1809 = vmatprep.subr.mxu0 0.0
        %1810 = vmatpush1.msra.mxu0 0.0
        %1811 = vmatprep.subr.mxu0 0.0
        %1812 = vmatpush1.msra.mxu0 0.0
        %1813 = vmatprep.subr.mxu0 0.0
        %1814 = vmatpush1.msra.mxu0 0.0
        %1815 = vmatprep.subr.mxu0 0.0
        %1816 = vmatpush1.msra.mxu0 0.0
        %1817 = vmatprep.subr.mxu0 0.0
        %1818 = vmatpush1.msra.mxu0 0.0
        %1819 = vmatprep.subr.mxu0 0.0
        %1820 = vmatpush1.msra.mxu0 0.0
        %1821 = vmatprep.subr.mxu0 0.0
        %1822 = vmatpush1.msra.mxu0 0.0
        %1823 = vmatprep.subr.mxu0 0.0
        %1824 = vmatpush1.msra.mxu0 0.0
        %1825 = vmatprep.subr.mxu0 0.0
        %1826 = vmatpush1.msra.mxu0 0.0
        %1827 = vmatprep.subr.mxu0 0.0
        %1828 = vmatpush1.msra.mxu0 0.0
        %1829 = vmatprep.subr.mxu0 0.0
        %1830 = vmatpush1.msra.mxu0 0.0
        %1831 = vmatprep.mubr.f32.mxu0 0.0
        %1832 = vmatmul.mubr.f32.gmra.mrb[0].mxu0 %v1756
        %v1833 = vpop.f32.mrb[0].mxu0
        %v1834 = vadd.f32 0.0, %v1833
        %v1835 = vpop.f32.mrb[0].mxu0
        %v1836 = vadd.f32 0.0, %v1835
        %1837 = vmatprep.mubr.f32.mxu0 0.0
        %1838 = vmatmul.mubr.f32.gmra.mrb[0].mxu0 %v1759
        %v1839 = vpop.f32.mrb[0].mxu0
        %v1840 = vadd.f32 0.0, %v1839
        %v1841 = vpop.f32.mrb[0].mxu0
        %v1842 = vadd.f32 0.0, %v1841
        %1843 = vdwg.mxu0
        %v1844 = vadd.f32 %v1720, %v1834
        %v1845 = vadd.f32 %v1722, %v1836
        %v1846 = vadd.f32 %v1726, %v1840
        %v1847 = vadd.f32 %v1728, %v1842
        %v1848 = vld [vmem:[#allocation2 + $0x3] sm:$0xff]
        %v1849 = vld [vmem:[#allocation2 + $0xb] sm:$0x3]
        %s1850 = scalar_lea.vmem %s5, 528
        %v1851 = vld [vmem:[%s1850] sm:$0xff]
        %v1852 = vld [vmem:[%s1850 + $0x8] sm:$0xff]
        %v1853 = vld [vmem:[%s1850 + $0x10] sm:$0xff]
        %v1854 = vld [vmem:[%s1850 + $0x18] sm:$0xff]
        %v1855 = vld [vmem:[%s1850 + $0x20] sm:$0xff]
        %v1856 = vld [vmem:[%s1850 + $0x28] sm:$0xff]
        %v1857 = vld [vmem:[%s1850 + $0x30] sm:$0xff]
        %v1858 = vld [vmem:[%s1850 + $0x38] sm:$0xff]
        %v1859 = vld [vmem:[%s1850 + $0x40] sm:$0xff]
        %v1860 = vld [vmem:[%s1850 + $0x48] sm:$0xff]
        %v1861 = vld [vmem:[%s1850 + $0x50] sm:$0xff]
        %v1862 = vld [vmem:[%s1850 + $0x58] sm:$0xff]
        %v1863 = vld [vmem:[%s1850 + $0x60] sm:$0xff]
        %v1864 = vld [vmem:[%s1850 + $0x68] sm:$0xff]
        %v1865 = vld [vmem:[%s1850 + $0x70] sm:$0xff]
        %v1866 = vld [vmem:[%s1850 + $0x78] sm:$0xff]
        %v1867 = vld [vmem:[%s1850 + $0x80] sm:$0xff]
        %v1868 = vld [vmem:[%s1850 + $0x88] sm:$0xff]
        %v1869 = vld [vmem:[%s1850 + $0x90] sm:$0xff]
        %v1870 = vld [vmem:[%s1850 + $0x98] sm:$0xff]
        %v1871 = vld [vmem:[%s1850 + $0xa0] sm:$0xf]
        %v1872 = vld [vmem:[%s1850 + $0xa8] sm:$0xf]
        %v1874 = vsel %vm1499, %v1848, 0
        %v1877 = vsel %vm1499, %v1849, 0
        %v1880 = vsel %vm1123, %v1871, 0
        %v1883 = vsel %vm1123, %v1872, 0
        %1885 = vmatprep.subr.mxu0 %v1852
        %1886 = vmatpush1.msra.mxu0 %v1851
        %1887 = vmatprep.subr.mxu0 %v1854
        %1888 = vmatpush1.msra.mxu0 %v1853
        %1889 = vmatprep.subr.mxu0 %v1856
        %1890 = vmatpush1.msra.mxu0 %v1855
        %1891 = vmatprep.subr.mxu0 %v1858
        %1892 = vmatpush1.msra.mxu0 %v1857
        %1893 = vmatprep.subr.mxu0 %v1860
        %1894 = vmatpush1.msra.mxu0 %v1859
        %1895 = vmatprep.subr.mxu0 %v1862
        %1896 = vmatpush1.msra.mxu0 %v1861
        %1897 = vmatprep.subr.mxu0 %v1864
        %1898 = vmatpush1.msra.mxu0 %v1863
        %1899 = vmatprep.subr.mxu0 %v1866
        %1900 = vmatpush1.msra.mxu0 %v1865
        %1901 = vmatprep.subr.mxu0 %v1868
        %1902 = vmatpush1.msra.mxu0 %v1867
        %1903 = vmatprep.subr.mxu0 %v1870
        %1904 = vmatpush1.msra.mxu0 %v1869
        %1905 = vmatprep.subr.mxu0 %v1883
        %1906 = vmatpush1.msra.mxu0 %v1880
        %1907 = vmatprep.subr.mxu0 0.0
        %1908 = vmatpush1.msra.mxu0 0.0
        %1909 = vmatprep.subr.mxu0 0.0
        %1910 = vmatpush1.msra.mxu0 0.0
        %1911 = vmatprep.subr.mxu0 0.0
        %1912 = vmatpush1.msra.mxu0 0.0
        %1913 = vmatprep.subr.mxu0 0.0
        %1914 = vmatpush1.msra.mxu0 0.0
        %1915 = vmatprep.subr.mxu0 0.0
        %1916 = vmatpush1.msra.mxu0 0.0
        %1917 = vmatprep.subr.mxu0 0.0
        %1918 = vmatpush1.msra.mxu0 0.0
        %1919 = vmatprep.subr.mxu0 0.0
        %1920 = vmatpush1.msra.mxu0 0.0
        %1921 = vmatprep.subr.mxu0 0.0
        %1922 = vmatpush1.msra.mxu0 0.0
        %1923 = vmatprep.subr.mxu0 0.0
        %1924 = vmatpush1.msra.mxu0 0.0
        %1925 = vmatprep.subr.mxu0 0.0
        %1926 = vmatpush1.msra.mxu0 0.0
        %1927 = vmatprep.subr.mxu0 0.0
        %1928 = vmatpush1.msra.mxu0 0.0
        %1929 = vmatprep.subr.mxu0 0.0
        %1930 = vmatpush1.msra.mxu0 0.0
        %1931 = vmatprep.subr.mxu0 0.0
        %1932 = vmatpush1.msra.mxu0 0.0
        %1933 = vmatprep.subr.mxu0 0.0
        %1934 = vmatpush1.msra.mxu0 0.0
        %1935 = vmatprep.subr.mxu0 0.0
        %1936 = vmatpush1.msra.mxu0 0.0
        %1937 = vmatprep.subr.mxu0 0.0
        %1938 = vmatpush1.msra.mxu0 0.0
        %1939 = vmatprep.subr.mxu0 0.0
        %1940 = vmatpush1.msra.mxu0 0.0
        %1941 = vmatprep.subr.mxu0 0.0
        %1942 = vmatpush1.msra.mxu0 0.0
        %1943 = vmatprep.subr.mxu0 0.0
        %1944 = vmatpush1.msra.mxu0 0.0
        %1945 = vmatprep.subr.mxu0 0.0
        %1946 = vmatpush1.msra.mxu0 0.0
        %1947 = vmatprep.subr.mxu0 0.0
        %1948 = vmatpush1.msra.mxu0 0.0
        %1949 = vmatprep.mubr.f32.mxu0 0.0
        %1950 = vmatmul.mubr.f32.gmra.mrb[0].mxu0 %v1874
        %v1951 = vpop.f32.mrb[0].mxu0
        %v1952 = vadd.f32 0.0, %v1951
        %v1953 = vpop.f32.mrb[0].mxu0
        %v1954 = vadd.f32 0.0, %v1953
        %1955 = vmatprep.mubr.f32.mxu0 0.0
        %1956 = vmatmul.mubr.f32.gmra.mrb[0].mxu0 %v1877
        %v1957 = vpop.f32.mrb[0].mxu0
        %v1958 = vadd.f32 0.0, %v1957
        %v1959 = vpop.f32.mrb[0].mxu0
        %v1960 = vadd.f32 0.0, %v1959
        %1961 = vdwg.mxu0
        %v1962 = vadd.f32 %v1844, %v1952
        %v1963 = vadd.f32 %v1845, %v1954
        %v1964 = vadd.f32 %v1846, %v1958
        %v1965 = vadd.f32 %v1847, %v1960
        %v1966 = vld [vmem:[#allocation2 + $0x4] sm:$0xff]
        %v1967 = vld [vmem:[#allocation2 + $0xc] sm:$0x3]
        %s1968 = scalar_lea.vmem %s5, 704
        %v1969 = vld [vmem:[%s1968] sm:$0xff]
        %v1970 = vld [vmem:[%s1968 + $0x8] sm:$0xff]
        %v1971 = vld [vmem:[%s1968 + $0x10] sm:$0xff]
        %v1972 = vld [vmem:[%s1968 + $0x18] sm:$0xff]
        %v1973 = vld [vmem:[%s1968 + $0x20] sm:$0xff]
        %v1974 = vld [vmem:[%s1968 + $0x28] sm:$0xff]
        %v1975 = vld [vmem:[%s1968 + $0x30] sm:$0xff]
        %v1976 = vld [vmem:[%s1968 + $0x38] sm:$0xff]
        %v1977 = vld [vmem:[%s1968 + $0x40] sm:$0xff]
        %v1978 = vld [vmem:[%s1968 + $0x48] sm:$0xff]
        %v1979 = vld [vmem:[%s1968 + $0x50] sm:$0xff]
        %v1980 = vld [vmem:[%s1968 + $0x58] sm:$0xff]
        %v1981 = vld [vmem:[%s1968 + $0x60] sm:$0xff]
        %v1982 = vld [vmem:[%s1968 + $0x68] sm:$0xff]
        %v1983 = vld [vmem:[%s1968 + $0x70] sm:$0xff]
        %v1984 = vld [vmem:[%s1968 + $0x78] sm:$0xff]
        %v1985 = vld [vmem:[%s1968 + $0x80] sm:$0xff]
        %v1986 = vld [vmem:[%s1968 + $0x88] sm:$0xff]
        %v1987 = vld [vmem:[%s1968 + $0x90] sm:$0xff]
        %v1988 = vld [vmem:[%s1968 + $0x98] sm:$0xff]
        %v1989 = vld [vmem:[%s1968 + $0xa0] sm:$0xf]
        %v1990 = vld [vmem:[%s1968 + $0xa8] sm:$0xf]
        %v1992 = vsel %vm1499, %v1966, 0
        %v1995 = vsel %vm1499, %v1967, 0
        %v1998 = vsel %vm1123, %v1989, 0
        %v2001 = vsel %vm1123, %v1990, 0
        %2003 = vmatprep.subr.mxu0 %v1970
        %2004 = vmatpush1.msra.mxu0 %v1969
        %2005 = vmatprep.subr.mxu0 %v1972
        %2006 = vmatpush1.msra.mxu0 %v1971
        %2007 = vmatprep.subr.mxu0 %v1974
        %2008 = vmatpush1.msra.mxu0 %v1973
        %2009 = vmatprep.subr.mxu0 %v1976
        %2010 = vmatpush1.msra.mxu0 %v1975
        %2011 = vmatprep.subr.mxu0 %v1978
        %2012 = vmatpush1.msra.mxu0 %v1977
        %2013 = vmatprep.subr.mxu0 %v1980
        %2014 = vmatpush1.msra.mxu0 %v1979
        %2015 = vmatprep.subr.mxu0 %v1982
        %2016 = vmatpush1.msra.mxu0 %v1981
        %2017 = vmatprep.subr.mxu0 %v1984
        %2018 = vmatpush1.msra.mxu0 %v1983
        %2019 = vmatprep.subr.mxu0 %v1986
        %2020 = vmatpush1.msra.mxu0 %v1985
        %2021 = vmatprep.subr.mxu0 %v1988
        %2022 = vmatpush1.msra.mxu0 %v1987
        %2023 = vmatprep.subr.mxu0 %v2001
        %2024 = vmatpush1.msra.mxu0 %v1998
        %2025 = vmatprep.subr.mxu0 0.0
        %2026 = vmatpush1.msra.mxu0 0.0
        %2027 = vmatprep.subr.mxu0 0.0
        %2028 = vmatpush1.msra.mxu0 0.0
        %2029 = vmatprep.subr.mxu0 0.0
        %2030 = vmatpush1.msra.mxu0 0.0
        %2031 = vmatprep.subr.mxu0 0.0
        %2032 = vmatpush1.msra.mxu0 0.0
        %2033 = vmatprep.subr.mxu0 0.0
        %2034 = vmatpush1.msra.mxu0 0.0
        %2035 = vmatprep.subr.mxu0 0.0
        %2036 = vmatpush1.msra.mxu0 0.0
        %2037 = vmatprep.subr.mxu0 0.0
        %2038 = vmatpush1.msra.mxu0 0.0
        %2039 = vmatprep.subr.mxu0 0.0
        %2040 = vmatpush1.msra.mxu0 0.0
        %2041 = vmatprep.subr.mxu0 0.0
        %2042 = vmatpush1.msra.mxu0 0.0
        %2043 = vmatprep.subr.mxu0 0.0
        %2044 = vmatpush1.msra.mxu0 0.0
        %2045 = vmatprep.subr.mxu0 0.0
        %2046 = vmatpush1.msra.mxu0 0.0
        %2047 = vmatprep.subr.mxu0 0.0
        %2048 = vmatpush1.msra.mxu0 0.0
        %2049 = vmatprep.subr.mxu0 0.0
        %2050 = vmatpush1.msra.mxu0 0.0
        %2051 = vmatprep.subr.mxu0 0.0
        %2052 = vmatpush1.msra.mxu0 0.0
        %2053 = vmatprep.subr.mxu0 0.0
        %2054 = vmatpush1.msra.mxu0 0.0
        %2055 = vmatprep.subr.mxu0 0.0
        %2056 = vmatpush1.msra.mxu0 0.0
        %2057 = vmatprep.subr.mxu0 0.0
        %2058 = vmatpush1.msra.mxu0 0.0
        %2059 = vmatprep.subr.mxu0 0.0
        %2060 = vmatpush1.msra.mxu0 0.0
        %2061 = vmatprep.subr.mxu0 0.0
        %2062 = vmatpush1.msra.mxu0 0.0
        %2063 = vmatprep.subr.mxu0 0.0
        %2064 = vmatpush1.msra.mxu0 0.0
        %2065 = vmatprep.subr.mxu0 0.0
        %2066 = vmatpush1.msra.mxu0 0.0
        %2067 = vmatprep.mubr.f32.mxu0 0.0
        %2068 = vmatmul.mubr.f32.gmra.mrb[0].mxu0 %v1992
        %v2069 = vpop.f32.mrb[0].mxu0
        %v2070 = vadd.f32 0.0, %v2069
        %v2071 = vpop.f32.mrb[0].mxu0
        %v2072 = vadd.f32 0.0, %v2071
        %2073 = vmatprep.mubr.f32.mxu0 0.0
        %2074 = vmatmul.mubr.f32.gmra.mrb[0].mxu0 %v1995
        %v2075 = vpop.f32.mrb[0].mxu0
        %v2076 = vadd.f32 0.0, %v2075
        %v2077 = vpop.f32.mrb[0].mxu0
        %v2078 = vadd.f32 0.0, %v2077
        %2079 = vdwg.mxu0
        %v2080 = vadd.f32 %v1962, %v2070
        %v2081 = vadd.f32 %v1963, %v2072
        %v2082 = vadd.f32 %v1964, %v2076
        %v2083 = vadd.f32 %v1965, %v2078
        %v2084 = vld [vmem:[%s6] sm:$0x3]
        %v2086 = vlaneseq
        %v2087 = vshrl.u32 %v2086, 7
        %v2088 = vsub.s32 0, %v2087
        %v2089 = vrot.slane %v2084, %v2088
        %v2090 = vlaneseq
        %v2091 = vshrl.u32 %v2090, 7
        %v2092 = vsub.s32 1, %v2091
        %v2093 = vrot.slane %v2084, %v2092
        %v2096 = vadd.f32 %v2080, %v2089
        %v2097 = vadd.f32 %v2081, %v2093
        %v2098 = vadd.f32 %v2082, %v2089
        %v2099 = vadd.f32 %v2083, %v2093
        %v2100 = vmax.f32 %v2096, 0.0
        %v2101 = vmax.f32 %v2097, 0.0
        %v2102 = vmax.f32 %v2098, 0.0
        %v2103 = vmax.f32 %v2099, 0.0
        %v2104 = vld [vmem:[%s7] sm:$0x1f]
        %vm2105 = vcmask 80896
        %v2107 = vsel %vm2105, %v2104, 0
        %vm2109 = vcmask 1041408
        %v2111 = vsel %vm2109, %v2102, 0
        %v2114 = vsel %vm2109, %v2103, 0
        %2116 = vmatprep.subr.mxu0 %v2101
        %2117 = vmatpush1.msra.mxu0 %v2100
        %2118 = vmatprep.subr.mxu0 %v2114
        %2119 = vmatpush1.msra.mxu0 %v2111
        %2120 = vmatprep.subr.mxu0 0.0
        %2121 = vmatpush1.msra.mxu0 0.0
        %2122 = vmatprep.subr.mxu0 0.0
        %2123 = vmatpush1.msra.mxu0 0.0
        %2124 = vmatprep.subr.mxu0 0.0
        %2125 = vmatpush1.msra.mxu0 0.0
        %2126 = vmatprep.subr.mxu0 0.0
        %2127 = vmatpush1.msra.mxu0 0.0
        %2128 = vmatprep.subr.mxu0 0.0
        %2129 = vmatpush1.msra.mxu0 0.0
        %2130 = vmatprep.subr.mxu0 0.0
        %2131 = vmatpush1.msra.mxu0 0.0
        %2132 = vmatprep.subr.mxu0 0.0
        %2133 = vmatpush1.msra.mxu0 0.0
        %2134 = vmatprep.subr.mxu0 0.0
        %2135 = vmatpush1.msra.mxu0 0.0
        %2136 = vmatprep.subr.mxu0 0.0
        %2137 = vmatpush1.msra.mxu0 0.0
        %2138 = vmatprep.subr.mxu0 0.0
        %2139 = vmatpush1.msra.mxu0 0.0
        %2140 = vmatprep.subr.mxu0 0.0
        %2141 = vmatpush1.msra.mxu0 0.0
        %2142 = vmatprep.subr.mxu0 0.0
        %2143 = vmatpush1.msra.mxu0 0.0
        %2144 = vmatprep.subr.mxu0 0.0
        %2145 = vmatpush1.msra.mxu0 0.0
        %2146 = vmatprep.subr.mxu0 0.0
        %2147 = vmatpush1.msra.mxu0 0.0
        %2148 = vmatprep.subr.mxu0 0.0
        %2149 = vmatpush1.msra.mxu0 0.0
        %2150 = vmatprep.subr.mxu0 0.0
        %2151 = vmatpush1.msra.mxu0 0.0
        %2152 = vmatprep.subr.mxu0 0.0
        %2153 = vmatpush1.msra.mxu0 0.0
        %2154 = vmatprep.subr.mxu0 0.0
        %2155 = vmatpush1.msra.mxu0 0.0
        %2156 = vmatprep.subr.mxu0 0.0
        %2157 = vmatpush1.msra.mxu0 0.0
        %2158 = vmatprep.subr.mxu0 0.0
        %2159 = vmatpush1.msra.mxu0 0.0
        %2160 = vmatprep.subr.mxu0 0.0
        %2161 = vmatpush1.msra.mxu0 0.0
        %2162 = vmatprep.subr.mxu0 0.0
        %2163 = vmatpush1.msra.mxu0 0.0
        %2164 = vmatprep.subr.mxu0 0.0
        %2165 = vmatpush1.msra.mxu0 0.0
        %2166 = vmatprep.subr.mxu0 0.0
        %2167 = vmatpush1.msra.mxu0 0.0
        %2168 = vmatprep.subr.mxu0 0.0
        %2169 = vmatpush1.msra.mxu0 0.0
        %2170 = vmatprep.subr.mxu0 0.0
        %2171 = vmatpush1.msra.mxu0 0.0
        %2172 = vmatprep.subr.mxu0 0.0
        %2173 = vmatpush1.msra.mxu0 0.0
        %2174 = vmatprep.subr.mxu0 0.0
        %2175 = vmatpush1.msra.mxu0 0.0
        %2176 = vmatprep.subr.mxu0 0.0
        %2177 = vmatpush1.msra.mxu0 0.0
        %2178 = vmatprep.subr.mxu0 0.0
        %2179 = vmatpush1.msra.mxu0 0.0
        %2180 = vmatprep.mubr.f32.mxu0 0.0
        %2181 = vmatmul.mubr.f32.gmra.mrb[0].mxu0 %v2107
        %v2182 = vpop.f32.mrb[0].mxu0
        %v2183 = vadd.f32 0.0, %v2182
        %v2184 = vpop.f32.mrb[0].mxu0
        %v2185 = vadd.f32 0.0, %v2184
        %2186 = vdwg.mxu0
        %s2187 = scalar_lea.vmem %s7, 8
        %v2188 = vld [vmem:[%s2187] sm:$0x1f]
        %v2190 = vsel %vm2105, %v2188, 0
        %2192 = vmatprep.subr.mxu0 %v2101
        %2193 = vmatpush1.msra.mxu0 %v2100
        %2194 = vmatprep.subr.mxu0 %v2114
        %2195 = vmatpush1.msra.mxu0 %v2111
        %2196 = vmatprep.subr.mxu0 0.0
        %2197 = vmatpush1.msra.mxu0 0.0
        %2198 = vmatprep.subr.mxu0 0.0
        %2199 = vmatpush1.msra.mxu0 0.0
        %2200 = vmatprep.subr.mxu0 0.0
        %2201 = vmatpush1.msra.mxu0 0.0
        %2202 = vmatprep.subr.mxu0 0.0
        %2203 = vmatpush1.msra.mxu0 0.0
        %2204 = vmatprep.subr.mxu0 0.0
        %2205 = vmatpush1.msra.mxu0 0.0
        %2206 = vmatprep.subr.mxu0 0.0
        %2207 = vmatpush1.msra.mxu0 0.0
        %2208 = vmatprep.subr.mxu0 0.0
        %2209 = vmatpush1.msra.mxu0 0.0
        %2210 = vmatprep.subr.mxu0 0.0
        %2211 = vmatpush1.msra.mxu0 0.0
        %2212 = vmatprep.subr.mxu0 0.0
        %2213 = vmatpush1.msra.mxu0 0.0
        %2214 = vmatprep.subr.mxu0 0.0
        %2215 = vmatpush1.msra.mxu0 0.0
        %2216 = vmatprep.subr.mxu0 0.0
        %2217 = vmatpush1.msra.mxu0 0.0
        %2218 = vmatprep.subr.mxu0 0.0
        %2219 = vmatpush1.msra.mxu0 0.0
        %2220 = vmatprep.subr.mxu0 0.0
        %2221 = vmatpush1.msra.mxu0 0.0
        %2222 = vmatprep.subr.mxu0 0.0
        %2223 = vmatpush1.msra.mxu0 0.0
        %2224 = vmatprep.subr.mxu0 0.0
        %2225 = vmatpush1.msra.mxu0 0.0
        %2226 = vmatprep.subr.mxu0 0.0
        %2227 = vmatpush1.msra.mxu0 0.0
        %2228 = vmatprep.subr.mxu0 0.0
        %2229 = vmatpush1.msra.mxu0 0.0
        %2230 = vmatprep.subr.mxu0 0.0
        %2231 = vmatpush1.msra.mxu0 0.0
        %2232 = vmatprep.subr.mxu0 0.0
        %2233 = vmatpush1.msra.mxu0 0.0
        %2234 = vmatprep.subr.mxu0 0.0
        %2235 = vmatpush1.msra.mxu0 0.0
        %2236 = vmatprep.subr.mxu0 0.0
        %2237 = vmatpush1.msra.mxu0 0.0
        %2238 = vmatprep.subr.mxu0 0.0
        %2239 = vmatpush1.msra.mxu0 0.0
        %2240 = vmatprep.subr.mxu0 0.0
        %2241 = vmatpush1.msra.mxu0 0.0
        %2242 = vmatprep.subr.mxu0 0.0
        %2243 = vmatpush1.msra.mxu0 0.0
        %2244 = vmatprep.subr.mxu0 0.0
        %2245 = vmatpush1.msra.mxu0 0.0
        %2246 = vmatprep.subr.mxu0 0.0
        %2247 = vmatpush1.msra.mxu0 0.0
        %2248 = vmatprep.subr.mxu0 0.0
        %2249 = vmatpush1.msra.mxu0 0.0
        %2250 = vmatprep.subr.mxu0 0.0
        %2251 = vmatpush1.msra.mxu0 0.0
        %2252 = vmatprep.subr.mxu0 0.0
        %2253 = vmatpush1.msra.mxu0 0.0
        %2254 = vmatprep.subr.mxu0 0.0
        %2255 = vmatpush1.msra.mxu0 0.0
        %2256 = vmatprep.mubr.f32.mxu0 0.0
        %2257 = vmatmul.mubr.f32.gmra.mrb[0].mxu0 %v2190
        %v2258 = vpop.f32.mrb[0].mxu0
        %v2259 = vadd.f32 0.0, %v2258
        %v2260 = vpop.f32.mrb[0].mxu0
        %v2261 = vadd.f32 0.0, %v2260
        %2262 = vdwg.mxu0
        %v2263 = vmax.f32 %v2183, %v2259
        %v2264 = vmax.f32 %v2185, %v2261
        %v2265 = vld [vmem:[%s8] sm:$0xff]
        %v2266 = vld [vmem:[%s8 + $0x8] sm:$0xff]
        %v2267 = vld [vmem:[%s8 + $0x10] sm:$0xff]
        %v2268 = vld [vmem:[%s8 + $0x18] sm:$0xff]
        %v2269 = vld [vmem:[%s8 + $0x20] sm:$0xff]
        %v2270 = vld [vmem:[%s8 + $0x28] sm:$0xff]
        %v2271 = vld [vmem:[%s8 + $0x30] sm:$0xff]
        %v2272 = vld [vmem:[%s8 + $0x38] sm:$0xff]
        %v2273 = vld [vmem:[%s8 + $0x40] sm:$0xff]
        %v2274 = vld [vmem:[%s8 + $0x48] sm:$0xff]
        %v2275 = vld [vmem:[%s8 + $0x50] sm:$0xff]
        %v2276 = vld [vmem:[%s8 + $0x58] sm:$0xff]
        %v2277 = vld [vmem:[%s8 + $0x60] sm:$0xff]
        %v2278 = vld [vmem:[%s8 + $0x68] sm:$0xff]
        %v2279 = vld [vmem:[%s8 + $0x70] sm:$0xff]
        %v2280 = vld [vmem:[%s8 + $0x78] sm:$0xff]
        %v2281 = vld [vmem:[%s8 + $0x80] sm:$0xff]
        %v2282 = vld [vmem:[%s8 + $0x88] sm:$0xff]
        %v2283 = vld [vmem:[%s8 + $0x90] sm:$0xff]
        %v2284 = vld [vmem:[%s8 + $0x98] sm:$0xff]
        %v2286 = vsel %vm517, %v2264, 0
        %2288 = vmatprep.subr.mxu0 0.0
        %2289 = vmatpush1.msra.mxu0 %v2265
        %2290 = vmatprep.subr.mxu0 0.0
        %2291 = vmatpush1.msra.mxu0 %v2266
        %2292 = vmatprep.subr.mxu0 0.0
        %2293 = vmatpush1.msra.mxu0 %v2267
        %2294 = vmatprep.subr.mxu0 0.0
        %2295 = vmatpush1.msra.mxu0 %v2268
        %2296 = vmatprep.subr.mxu0 0.0
        %2297 = vmatpush1.msra.mxu0 %v2269
        %2298 = vmatprep.subr.mxu0 0.0
        %2299 = vmatpush1.msra.mxu0 %v2270
        %2300 = vmatprep.subr.mxu0 0.0
        %2301 = vmatpush1.msra.mxu0 %v2271
        %2302 = vmatprep.subr.mxu0 0.0
        %2303 = vmatpush1.msra.mxu0 %v2272
        %2304 = vmatprep.subr.mxu0 0.0
        %2305 = vmatpush1.msra.mxu0 %v2273
        %2306 = vmatprep.subr.mxu0 0.0
        %2307 = vmatpush1.msra.mxu0 %v2274
        %2308 = vmatprep.subr.mxu0 0.0
        %2309 = vmatpush1.msra.mxu0 %v2275
        %2310 = vmatprep.subr.mxu0 0.0
        %2311 = vmatpush1.msra.mxu0 %v2276
        %2312 = vmatprep.subr.mxu0 0.0
        %2313 = vmatpush1.msra.mxu0 %v2277
        %2314 = vmatprep.subr.mxu0 0.0
        %2315 = vmatpush1.msra.mxu0 %v2278
        %2316 = vmatprep.subr.mxu0 0.0
        %2317 = vmatpush1.msra.mxu0 %v2279
        %2318 = vmatprep.subr.mxu0 0.0
        %2319 = vmatpush1.msra.mxu0 %v2280
        %2320 = vmatprep.subr.mxu0 0.0
        %2321 = vmatpush1.msra.mxu0 %v2281
        %2322 = vmatprep.subr.mxu0 0.0
        %2323 = vmatpush1.msra.mxu0 %v2282
        %2324 = vmatprep.subr.mxu0 0.0
        %2325 = vmatpush1.msra.mxu0 %v2283
        %2326 = vmatprep.subr.mxu0 0.0
        %2327 = vmatpush1.msra.mxu0 %v2284
        %2328 = vmatprep.subr.mxu0 0.0
        %2329 = vmatpush1.msra.mxu0 0.0
        %2330 = vmatprep.subr.mxu0 0.0
        %2331 = vmatpush1.msra.mxu0 0.0
        %2332 = vmatprep.subr.mxu0 0.0
        %2333 = vmatpush1.msra.mxu0 0.0
        %2334 = vmatprep.subr.mxu0 0.0
        %2335 = vmatpush1.msra.mxu0 0.0
        %2336 = vmatprep.subr.mxu0 0.0
        %2337 = vmatpush1.msra.mxu0 0.0
        %2338 = vmatprep.subr.mxu0 0.0
        %2339 = vmatpush1.msra.mxu0 0.0
        %2340 = vmatprep.subr.mxu0 0.0
        %2341 = vmatpush1.msra.mxu0 0.0
        %2342 = vmatprep.subr.mxu0 0.0
        %2343 = vmatpush1.msra.mxu0 0.0
        %2344 = vmatprep.subr.mxu0 0.0
        %2345 = vmatpush1.msra.mxu0 0.0
        %2346 = vmatprep.subr.mxu0 0.0
        %2347 = vmatpush1.msra.mxu0 0.0
        %2348 = vmatprep.subr.mxu0 0.0
        %2349 = vmatpush1.msra.mxu0 0.0
        %2350 = vmatprep.subr.mxu0 0.0
        %2351 = vmatpush1.msra.mxu0 0.0
        %2352 = vmatprep.mubr.f32.mxu0 %v2286
        %2353 = vmatmul.mubr.f32.gmra.mrb[0].mxu0 %v2263
        %v2354 = vpop.f32.mrb[0].mxu0
        %v2355 = vadd.f32 0.0, %v2354
        %v2356 = vpop.f32.mrb[0].mxu0
        %2357 = vdwg.mxu0
        %s2358 = scalar_lea.vmem %s8, 160
        %v2359 = vld [vmem:[%s2358] sm:$0xff]
        %v2360 = vld [vmem:[%s2358 + $0x8] sm:$0xff]
        %v2361 = vld [vmem:[%s2358 + $0x10] sm:$0xff]
        %v2362 = vld [vmem:[%s2358 + $0x18] sm:$0xff]
        %v2363 = vld [vmem:[%s2358 + $0x20] sm:$0xff]
        %v2364 = vld [vmem:[%s2358 + $0x28] sm:$0xff]
        %v2365 = vld [vmem:[%s2358 + $0x30] sm:$0xff]
        %v2366 = vld [vmem:[%s2358 + $0x38] sm:$0xff]
        %v2367 = vld [vmem:[%s2358 + $0x40] sm:$0xff]
        %v2368 = vld [vmem:[%s2358 + $0x48] sm:$0xff]
        %v2369 = vld [vmem:[%s2358 + $0x50] sm:$0xff]
        %v2370 = vld [vmem:[%s2358 + $0x58] sm:$0xff]
        %v2371 = vld [vmem:[%s2358 + $0x60] sm:$0xff]
        %v2372 = vld [vmem:[%s2358 + $0x68] sm:$0xff]
        %v2373 = vld [vmem:[%s2358 + $0x70] sm:$0xff]
        %v2374 = vld [vmem:[%s2358 + $0x78] sm:$0xff]
        %v2375 = vld [vmem:[%s2358 + $0x80] sm:$0xff]
        %v2376 = vld [vmem:[%s2358 + $0x88] sm:$0xff]
        %v2377 = vld [vmem:[%s2358 + $0x90] sm:$0xff]
        %v2378 = vld [vmem:[%s2358 + $0x98] sm:$0xff]
        %2379 = vmatprep.subr.mxu0 0.0
        %2380 = vmatpush1.msra.mxu0 %v2359
        %2381 = vmatprep.subr.mxu0 0.0
        %2382 = vmatpush1.msra.mxu0 %v2360
        %2383 = vmatprep.subr.mxu0 0.0
        %2384 = vmatpush1.msra.mxu0 %v2361
        %2385 = vmatprep.subr.mxu0 0.0
        %2386 = vmatpush1.msra.mxu0 %v2362
        %2387 = vmatprep.subr.mxu0 0.0
        %2388 = vmatpush1.msra.mxu0 %v2363
        %2389 = vmatprep.subr.mxu0 0.0
        %2390 = vmatpush1.msra.mxu0 %v2364
        %2391 = vmatprep.subr.mxu0 0.0
        %2392 = vmatpush1.msra.mxu0 %v2365
        %2393 = vmatprep.subr.mxu0 0.0
        %2394 = vmatpush1.msra.mxu0 %v2366
        %2395 = vmatprep.subr.mxu0 0.0
        %2396 = vmatpush1.msra.mxu0 %v2367
        %2397 = vmatprep.subr.mxu0 0.0
        %2398 = vmatpush1.msra.mxu0 %v2368
        %2399 = vmatprep.subr.mxu0 0.0
        %2400 = vmatpush1.msra.mxu0 %v2369
        %2401 = vmatprep.subr.mxu0 0.0
        %2402 = vmatpush1.msra.mxu0 %v2370
        %2403 = vmatprep.subr.mxu0 0.0
        %2404 = vmatpush1.msra.mxu0 %v2371
        %2405 = vmatprep.subr.mxu0 0.0
        %2406 = vmatpush1.msra.mxu0 %v2372
        %2407 = vmatprep.subr.mxu0 0.0
        %2408 = vmatpush1.msra.mxu0 %v2373
        %2409 = vmatprep.subr.mxu0 0.0
        %2410 = vmatpush1.msra.mxu0 %v2374
        %2411 = vmatprep.subr.mxu0 0.0
        %2412 = vmatpush1.msra.mxu0 %v2375
        %2413 = vmatprep.subr.mxu0 0.0
        %2414 = vmatpush1.msra.mxu0 %v2376
        %2415 = vmatprep.subr.mxu0 0.0
        %2416 = vmatpush1.msra.mxu0 %v2377
        %2417 = vmatprep.subr.mxu0 0.0
        %2418 = vmatpush1.msra.mxu0 %v2378
        %2419 = vmatprep.subr.mxu0 0.0
        %2420 = vmatpush1.msra.mxu0 0.0
        %2421 = vmatprep.subr.mxu0 0.0
        %2422 = vmatpush1.msra.mxu0 0.0
        %2423 = vmatprep.subr.mxu0 0.0
        %2424 = vmatpush1.msra.mxu0 0.0
        %2425 = vmatprep.subr.mxu0 0.0
        %2426 = vmatpush1.msra.mxu0 0.0
        %2427 = vmatprep.subr.mxu0 0.0
        %2428 = vmatpush1.msra.mxu0 0.0
        %2429 = vmatprep.subr.mxu0 0.0
        %2430 = vmatpush1.msra.mxu0 0.0
        %2431 = vmatprep.subr.mxu0 0.0
        %2432 = vmatpush1.msra.mxu0 0.0
        %2433 = vmatprep.subr.mxu0 0.0
        %2434 = vmatpush1.msra.mxu0 0.0
        %2435 = vmatprep.subr.mxu0 0.0
        %2436 = vmatpush1.msra.mxu0 0.0
        %2437 = vmatprep.subr.mxu0 0.0
        %2438 = vmatpush1.msra.mxu0 0.0
        %2439 = vmatprep.subr.mxu0 0.0
        %2440 = vmatpush1.msra.mxu0 0.0
        %2441 = vmatprep.subr.mxu0 0.0
        %2442 = vmatpush1.msra.mxu0 0.0
        %2443 = vmatprep.mubr.f32.mxu0 %v2286
        %2444 = vmatmul.mubr.f32.gmra.mrb[0].mxu0 %v2263
        %v2445 = vpop.f32.mrb[0].mxu0
        %v2446 = vadd.f32 0.0, %v2445
        %v2447 = vpop.f32.mrb[0].mxu0
        %2448 = vdwg.mxu0
        %v2449 = vmax.f32 %v2355, %v2446
        %vm2450 = vcmask 651264
        %2451 = vst.msk [vmem:[#allocation3] sm:$0x1f] %vm2450, %v2449
        %v2452 = vld [vmem:[#allocation3] sm:$0x1]
        %v2453 = vld [vmem:[%s9] sm:$0xff]
        %v2454 = vld [vmem:[%s9 + $0x8] sm:$0xff]
        %v2455 = vld [vmem:[%s9 + $0x10] sm:$0xff]
        %v2456 = vld [vmem:[%s9 + $0x18] sm:$0xff]
        %v2457 = vld [vmem:[%s9 + $0x20] sm:$0xff]
        %v2458 = vld [vmem:[%s9 + $0x28] sm:$0xff]
        %v2459 = vld [vmem:[%s9 + $0x30] sm:$0xff]
        %v2460 = vld [vmem:[%s9 + $0x38] sm:$0xff]
        %v2461 = vld [vmem:[%s9 + $0x40] sm:$0xff]
        %v2462 = vld [vmem:[%s9 + $0x48] sm:$0xff]
        %v2463 = vld [vmem:[#allocation3 + $0x1] sm:$0x1]
        %s2464 = scalar_lea.vmem %s9, 80
        %v2465 = vld [vmem:[%s2464] sm:$0xff]
        %v2466 = vld [vmem:[%s2464 + $0x8] sm:$0xff]
        %v2467 = vld [vmem:[%s2464 + $0x10] sm:$0xff]
        %v2468 = vld [vmem:[%s2464 + $0x18] sm:$0xff]
        %v2469 = vld [vmem:[%s2464 + $0x20] sm:$0xff]
        %v2470 = vld [vmem:[%s2464 + $0x28] sm:$0xff]
        %v2471 = vld [vmem:[%s2464 + $0x30] sm:$0xff]
        %v2472 = vld [vmem:[%s2464 + $0x38] sm:$0xff]
        %v2473 = vld [vmem:[%s2464 + $0x40] sm:$0xff]
        %v2474 = vld [vmem:[%s2464 + $0x48] sm:$0xff]
        %vm2475 = vcmask 654336
        %v2477 = vsel %vm2475, %v2463, 0
        %2479 = vmatprep.subr.mxu0 0.0
        %2480 = vmatpush1.msra.mxu0 %v2465
        %2481 = vmatprep.subr.mxu0 0.0
        %2482 = vmatpush1.msra.mxu0 %v2466
        %2483 = vmatprep.subr.mxu0 0.0
        %2484 = vmatpush1.msra.mxu0 %v2467
        %2485 = vmatprep.subr.mxu0 0.0
        %2486 = vmatpush1.msra.mxu0 %v2468
        %2487 = vmatprep.subr.mxu0 0.0
        %2488 = vmatpush1.msra.mxu0 %v2469
        %2489 = vmatprep.subr.mxu0 0.0
        %2490 = vmatpush1.msra.mxu0 %v2470
        %2491 = vmatprep.subr.mxu0 0.0
        %2492 = vmatpush1.msra.mxu0 %v2471
        %2493 = vmatprep.subr.mxu0 0.0
        %2494 = vmatpush1.msra.mxu0 %v2472
        %2495 = vmatprep.subr.mxu0 0.0
        %2496 = vmatpush1.msra.mxu0 %v2473
        %2497 = vmatprep.subr.mxu0 0.0
        %2498 = vmatpush1.msra.mxu0 %v2474
        %2499 = vmatprep.subr.mxu0 0.0
        %2500 = vmatpush1.msra.mxu0 0.0
        %2501 = vmatprep.subr.mxu0 0.0
        %2502 = vmatpush1.msra.mxu0 0.0
        %2503 = vmatprep.subr.mxu0 0.0
        %2504 = vmatpush1.msra.mxu0 0.0
        %2505 = vmatprep.subr.mxu0 0.0
        %2506 = vmatpush1.msra.mxu0 0.0
        %2507 = vmatprep.subr.mxu0 0.0
        %2508 = vmatpush1.msra.mxu0 0.0
        %2509 = vmatprep.subr.mxu0 0.0
        %2510 = vmatpush1.msra.mxu0 0.0
        %2511 = vmatprep.subr.mxu0 0.0
        %2512 = vmatpush1.msra.mxu0 0.0
        %2513 = vmatprep.subr.mxu0 0.0
        %2514 = vmatpush1.msra.mxu0 0.0
        %2515 = vmatprep.subr.mxu0 0.0
        %2516 = vmatpush1.msra.mxu0 0.0
        %2517 = vmatprep.subr.mxu0 0.0
        %2518 = vmatpush1.msra.mxu0 0.0
        %2519 = vmatprep.subr.mxu0 0.0
        %2520 = vmatpush1.msra.mxu0 0.0
        %2521 = vmatprep.subr.mxu0 0.0
        %2522 = vmatpush1.msra.mxu0 0.0
        %2523 = vmatprep.subr.mxu0 0.0
        %2524 = vmatpush1.msra.mxu0 0.0
        %2525 = vmatprep.subr.mxu0 0.0
        %2526 = vmatpush1.msra.mxu0 0.0
        %2527 = vmatprep.subr.mxu0 0.0
        %2528 = vmatpush1.msra.mxu0 0.0
        %2529 = vmatprep.subr.mxu0 0.0
        %2530 = vmatpush1.msra.mxu0 0.0
        %2531 = vmatprep.subr.mxu0 0.0
        %2532 = vmatpush1.msra.mxu0 0.0
        %2533 = vmatprep.subr.mxu0 0.0
        %2534 = vmatpush1.msra.mxu0 0.0
        %2535 = vmatprep.subr.mxu0 0.0
        %2536 = vmatpush1.msra.mxu0 0.0
        %2537 = vmatprep.subr.mxu0 0.0
        %2538 = vmatpush1.msra.mxu0 0.0
        %2539 = vmatprep.subr.mxu0 0.0
        %2540 = vmatpush1.msra.mxu0 0.0
        %2541 = vmatprep.subr.mxu0 0.0
        %2542 = vmatpush1.msra.mxu0 0.0
        %2543 = vmatprep.mubr.f32.mxu0 0.0
        %2544 = vmatmul.mubr.f32.gmra.mrb[0].mxu0 %v2477
        %v2545 = vpop.f32.mrb[0].mxu0
        %v2546 = vadd.f32 0.0, %v2545
        %v2547 = vpop.f32.mrb[0].mxu0
        %2548 = vdwg.mxu0
        %v2550 = vsel %vm2475, %v2452, 0
        %2552 = vmatprep.subr.mxu0 0.0
        %2553 = vmatpush1.msra.mxu0 %v2453
        %2554 = vmatprep.subr.mxu0 0.0
        %2555 = vmatpush1.msra.mxu0 %v2454
        %2556 = vmatprep.subr.mxu0 0.0
        %2557 = vmatpush1.msra.mxu0 %v2455
        %2558 = vmatprep.subr.mxu0 0.0
        %2559 = vmatpush1.msra.mxu0 %v2456
        %2560 = vmatprep.subr.mxu0 0.0
        %2561 = vmatpush1.msra.mxu0 %v2457
        %2562 = vmatprep.subr.mxu0 0.0
        %2563 = vmatpush1.msra.mxu0 %v2458
        %2564 = vmatprep.subr.mxu0 0.0
        %2565 = vmatpush1.msra.mxu0 %v2459
        %2566 = vmatprep.subr.mxu0 0.0
        %2567 = vmatpush1.msra.mxu0 %v2460
        %2568 = vmatprep.subr.mxu0 0.0
        %2569 = vmatpush1.msra.mxu0 %v2461
        %2570 = vmatprep.subr.mxu0 0.0
        %2571 = vmatpush1.msra.mxu0 %v2462
        %2572 = vmatprep.subr.mxu0 0.0
        %2573 = vmatpush1.msra.mxu0 0.0
        %2574 = vmatprep.subr.mxu0 0.0
        %2575 = vmatpush1.msra.mxu0 0.0
        %2576 = vmatprep.subr.mxu0 0.0
        %2577 = vmatpush1.msra.mxu0 0.0
        %2578 = vmatprep.subr.mxu0 0.0
        %2579 = vmatpush1.msra.mxu0 0.0
        %2580 = vmatprep.subr.mxu0 0.0
        %2581 = vmatpush1.msra.mxu0 0.0
        %2582 = vmatprep.subr.mxu0 0.0
        %2583 = vmatpush1.msra.mxu0 0.0
        %2584 = vmatprep.subr.mxu0 0.0
        %2585 = vmatpush1.msra.mxu0 0.0
        %2586 = vmatprep.subr.mxu0 0.0
        %2587 = vmatpush1.msra.mxu0 0.0
        %2588 = vmatprep.subr.mxu0 0.0
        %2589 = vmatpush1.msra.mxu0 0.0
        %2590 = vmatprep.subr.mxu0 0.0
        %2591 = vmatpush1.msra.mxu0 0.0
        %2592 = vmatprep.subr.mxu0 0.0
        %2593 = vmatpush1.msra.mxu0 0.0
        %2594 = vmatprep.subr.mxu0 0.0
        %2595 = vmatpush1.msra.mxu0 0.0
        %2596 = vmatprep.subr.mxu0 0.0
        %2597 = vmatpush1.msra.mxu0 0.0
        %2598 = vmatprep.subr.mxu0 0.0
        %2599 = vmatpush1.msra.mxu0 0.0
        %2600 = vmatprep.subr.mxu0 0.0
        %2601 = vmatpush1.msra.mxu0 0.0
        %2602 = vmatprep.subr.mxu0 0.0
        %2603 = vmatpush1.msra.mxu0 0.0
        %2604 = vmatprep.subr.mxu0 0.0
        %2605 = vmatpush1.msra.mxu0 0.0
        %2606 = vmatprep.subr.mxu0 0.0
        %2607 = vmatpush1.msra.mxu0 0.0
        %2608 = vmatprep.subr.mxu0 0.0
        %2609 = vmatpush1.msra.mxu0 0.0
        %2610 = vmatprep.subr.mxu0 0.0
        %2611 = vmatpush1.msra.mxu0 0.0
        %2612 = vmatprep.subr.mxu0 0.0
        %2613 = vmatpush1.msra.mxu0 0.0
        %2614 = vmatprep.subr.mxu0 0.0
        %2615 = vmatpush1.msra.mxu0 0.0
        %2616 = vmatprep.mubr.f32.mxu0 0.0
        %2617 = vmatmul.mubr.f32.gmra.mrb[0].mxu0 %v2550
        %v2618 = vpop.f32.mrb[0].mxu0
        %v2619 = vadd.f32 %v2546, %v2618
        %v2620 = vpop.f32.mrb[0].mxu0
        %2621 = vdwg.mxu0
        %v2622 = vld [vmem:[#allocation3 + $0x2] sm:$0x1]
        %s2623 = scalar_lea.vmem %s9, 160
        %v2624 = vld [vmem:[%s2623] sm:$0xff]
        %v2625 = vld [vmem:[%s2623 + $0x8] sm:$0xff]
        %v2626 = vld [vmem:[%s2623 + $0x10] sm:$0xff]
        %v2627 = vld [vmem:[%s2623 + $0x18] sm:$0xff]
        %v2628 = vld [vmem:[%s2623 + $0x20] sm:$0xff]
        %v2629 = vld [vmem:[%s2623 + $0x28] sm:$0xff]
        %v2630 = vld [vmem:[%s2623 + $0x30] sm:$0xff]
        %v2631 = vld [vmem:[%s2623 + $0x38] sm:$0xff]
        %v2632 = vld [vmem:[%s2623 + $0x40] sm:$0xff]
        %v2633 = vld [vmem:[%s2623 + $0x48] sm:$0xff]
        %v2635 = vsel %vm2475, %v2622, 0
        %2637 = vmatprep.subr.mxu0 0.0
        %2638 = vmatpush1.msra.mxu0 %v2624
        %2639 = vmatprep.subr.mxu0 0.0
        %2640 = vmatpush1.msra.mxu0 %v2625
        %2641 = vmatprep.subr.mxu0 0.0
        %2642 = vmatpush1.msra.mxu0 %v2626
        %2643 = vmatprep.subr.mxu0 0.0
        %2644 = vmatpush1.msra.mxu0 %v2627
        %2645 = vmatprep.subr.mxu0 0.0
        %2646 = vmatpush1.msra.mxu0 %v2628
        %2647 = vmatprep.subr.mxu0 0.0
        %2648 = vmatpush1.msra.mxu0 %v2629
        %2649 = vmatprep.subr.mxu0 0.0
        %2650 = vmatpush1.msra.mxu0 %v2630
        %2651 = vmatprep.subr.mxu0 0.0
        %2652 = vmatpush1.msra.mxu0 %v2631
        %2653 = vmatprep.subr.mxu0 0.0
        %2654 = vmatpush1.msra.mxu0 %v2632
        %2655 = vmatprep.subr.mxu0 0.0
        %2656 = vmatpush1.msra.mxu0 %v2633
        %2657 = vmatprep.subr.mxu0 0.0
        %2658 = vmatpush1.msra.mxu0 0.0
        %2659 = vmatprep.subr.mxu0 0.0
        %2660 = vmatpush1.msra.mxu0 0.0
        %2661 = vmatprep.subr.mxu0 0.0
        %2662 = vmatpush1.msra.mxu0 0.0
        %2663 = vmatprep.subr.mxu0 0.0
        %2664 = vmatpush1.msra.mxu0 0.0
        %2665 = vmatprep.subr.mxu0 0.0
        %2666 = vmatpush1.msra.mxu0 0.0
        %2667 = vmatprep.subr.mxu0 0.0
        %2668 = vmatpush1.msra.mxu0 0.0
        %2669 = vmatprep.subr.mxu0 0.0
        %2670 = vmatpush1.msra.mxu0 0.0
        %2671 = vmatprep.subr.mxu0 0.0
        %2672 = vmatpush1.msra.mxu0 0.0
        %2673 = vmatprep.subr.mxu0 0.0
        %2674 = vmatpush1.msra.mxu0 0.0
        %2675 = vmatprep.subr.mxu0 0.0
        %2676 = vmatpush1.msra.mxu0 0.0
        %2677 = vmatprep.subr.mxu0 0.0
        %2678 = vmatpush1.msra.mxu0 0.0
        %2679 = vmatprep.subr.mxu0 0.0
        %2680 = vmatpush1.msra.mxu0 0.0
        %2681 = vmatprep.subr.mxu0 0.0
        %2682 = vmatpush1.msra.mxu0 0.0
        %2683 = vmatprep.subr.mxu0 0.0
        %2684 = vmatpush1.msra.mxu0 0.0
        %2685 = vmatprep.subr.mxu0 0.0
        %2686 = vmatpush1.msra.mxu0 0.0
        %2687 = vmatprep.subr.mxu0 0.0
        %2688 = vmatpush1.msra.mxu0 0.0
        %2689 = vmatprep.subr.mxu0 0.0
        %2690 = vmatpush1.msra.mxu0 0.0
        %2691 = vmatprep.subr.mxu0 0.0
        %2692 = vmatpush1.msra.mxu0 0.0
        %2693 = vmatprep.subr.mxu0 0.0
        %2694 = vmatpush1.msra.mxu0 0.0
        %2695 = vmatprep.subr.mxu0 0.0
        %2696 = vmatpush1.msra.mxu0 0.0
        %2697 = vmatprep.subr.mxu0 0.0
        %2698 = vmatpush1.msra.mxu0 0.0
        %2699 = vmatprep.subr.mxu0 0.0
        %2700 = vmatpush1.msra.mxu0 0.0
        %2701 = vmatprep.mubr.f32.mxu0 0.0
        %2702 = vmatmul.mubr.f32.gmra.mrb[0].mxu0 %v2635
        %v2703 = vpop.f32.mrb[0].mxu0
        %v2704 = vadd.f32 0.0, %v2703
        %v2705 = vpop.f32.mrb[0].mxu0
        %2706 = vdwg.mxu0
        %v2707 = vadd.f32 %v2619, %v2704
        %v2708 = vld [vmem:[#allocation3 + $0x3] sm:$0x1]
        %s2709 = scalar_lea.vmem %s9, 240
        %v2710 = vld [vmem:[%s2709] sm:$0xff]
        %v2711 = vld [vmem:[%s2709 + $0x8] sm:$0xff]
        %v2712 = vld [vmem:[%s2709 + $0x10] sm:$0xff]
        %v2713 = vld [vmem:[%s2709 + $0x18] sm:$0xff]
        %v2714 = vld [vmem:[%s2709 + $0x20] sm:$0xff]
        %v2715 = vld [vmem:[%s2709 + $0x28] sm:$0xff]
        %v2716 = vld [vmem:[%s2709 + $0x30] sm:$0xff]
        %v2717 = vld [vmem:[%s2709 + $0x38] sm:$0xff]
        %v2718 = vld [vmem:[%s2709 + $0x40] sm:$0xff]
        %v2719 = vld [vmem:[%s2709 + $0x48] sm:$0xff]
        %v2721 = vsel %vm2475, %v2708, 0
        %2723 = vmatprep.subr.mxu0 0.0
        %2724 = vmatpush1.msra.mxu0 %v2710
        %2725 = vmatprep.subr.mxu0 0.0
        %2726 = vmatpush1.msra.mxu0 %v2711
        %2727 = vmatprep.subr.mxu0 0.0
        %2728 = vmatpush1.msra.mxu0 %v2712
        %2729 = vmatprep.subr.mxu0 0.0
        %2730 = vmatpush1.msra.mxu0 %v2713
        %2731 = vmatprep.subr.mxu0 0.0
        %2732 = vmatpush1.msra.mxu0 %v2714
        %2733 = vmatprep.subr.mxu0 0.0
        %2734 = vmatpush1.msra.mxu0 %v2715
        %2735 = vmatprep.subr.mxu0 0.0
        %2736 = vmatpush1.msra.mxu0 %v2716
        %2737 = vmatprep.subr.mxu0 0.0
        %2738 = vmatpush1.msra.mxu0 %v2717
        %2739 = vmatprep.subr.mxu0 0.0
        %2740 = vmatpush1.msra.mxu0 %v2718
        %2741 = vmatprep.subr.mxu0 0.0
        %2742 = vmatpush1.msra.mxu0 %v2719
        %2743 = vmatprep.subr.mxu0 0.0
        %2744 = vmatpush1.msra.mxu0 0.0
        %2745 = vmatprep.subr.mxu0 0.0
        %2746 = vmatpush1.msra.mxu0 0.0
        %2747 = vmatprep.subr.mxu0 0.0
        %2748 = vmatpush1.msra.mxu0 0.0
        %2749 = vmatprep.subr.mxu0 0.0
        %2750 = vmatpush1.msra.mxu0 0.0
        %2751 = vmatprep.subr.mxu0 0.0
        %2752 = vmatpush1.msra.mxu0 0.0
        %2753 = vmatprep.subr.mxu0 0.0
        %2754 = vmatpush1.msra.mxu0 0.0
        %2755 = vmatprep.subr.mxu0 0.0
        %2756 = vmatpush1.msra.mxu0 0.0
        %2757 = vmatprep.subr.mxu0 0.0
        %2758 = vmatpush1.msra.mxu0 0.0
        %2759 = vmatprep.subr.mxu0 0.0
        %2760 = vmatpush1.msra.mxu0 0.0
        %2761 = vmatprep.subr.mxu0 0.0
        %2762 = vmatpush1.msra.mxu0 0.0
        %2763 = vmatprep.subr.mxu0 0.0
        %2764 = vmatpush1.msra.mxu0 0.0
        %2765 = vmatprep.subr.mxu0 0.0
        %2766 = vmatpush1.msra.mxu0 0.0
        %2767 = vmatprep.subr.mxu0 0.0
        %2768 = vmatpush1.msra.mxu0 0.0
        %2769 = vmatprep.subr.mxu0 0.0
        %2770 = vmatpush1.msra.mxu0 0.0
        %2771 = vmatprep.subr.mxu0 0.0
        %2772 = vmatpush1.msra.mxu0 0.0
        %2773 = vmatprep.subr.mxu0 0.0
        %2774 = vmatpush1.msra.mxu0 0.0
        %2775 = vmatprep.subr.mxu0 0.0
        %2776 = vmatpush1.msra.mxu0 0.0
        %2777 = vmatprep.subr.mxu0 0.0
        %2778 = vmatpush1.msra.mxu0 0.0
        %2779 = vmatprep.subr.mxu0 0.0
        %2780 = vmatpush1.msra.mxu0 0.0
        %2781 = vmatprep.subr.mxu0 0.0
        %2782 = vmatpush1.msra.mxu0 0.0
        %2783 = vmatprep.subr.mxu0 0.0
        %2784 = vmatpush1.msra.mxu0 0.0
        %2785 = vmatprep.subr.mxu0 0.0
        %2786 = vmatpush1.msra.mxu0 0.0
        %2787 = vmatprep.mubr.f32.mxu0 0.0
        %2788 = vmatmul.mubr.f32.gmra.mrb[0].mxu0 %v2721
        %v2789 = vpop.f32.mrb[0].mxu0
        %v2790 = vadd.f32 0.0, %v2789
        %v2791 = vpop.f32.mrb[0].mxu0
        %2792 = vdwg.mxu0
        %v2793 = vadd.f32 %v2707, %v2790
        %v2794 = vld [vmem:[#allocation3 + $0x4] sm:$0x1]
        %s2795 = scalar_lea.vmem %s9, 320
        %v2796 = vld [vmem:[%s2795] sm:$0xff]
        %v2797 = vld [vmem:[%s2795 + $0x8] sm:$0xff]
        %v2798 = vld [vmem:[%s2795 + $0x10] sm:$0xff]
        %v2799 = vld [vmem:[%s2795 + $0x18] sm:$0xff]
        %v2800 = vld [vmem:[%s2795 + $0x20] sm:$0xff]
        %v2801 = vld [vmem:[%s2795 + $0x28] sm:$0xff]
        %v2802 = vld [vmem:[%s2795 + $0x30] sm:$0xff]
        %v2803 = vld [vmem:[%s2795 + $0x38] sm:$0xff]
        %v2804 = vld [vmem:[%s2795 + $0x40] sm:$0xff]
        %v2805 = vld [vmem:[%s2795 + $0x48] sm:$0xff]
        %v2807 = vsel %vm2475, %v2794, 0
        %2809 = vmatprep.subr.mxu0 0.0
        %2810 = vmatpush1.msra.mxu0 %v2796
        %2811 = vmatprep.subr.mxu0 0.0
        %2812 = vmatpush1.msra.mxu0 %v2797
        %2813 = vmatprep.subr.mxu0 0.0
        %2814 = vmatpush1.msra.mxu0 %v2798
        %2815 = vmatprep.subr.mxu0 0.0
        %2816 = vmatpush1.msra.mxu0 %v2799
        %2817 = vmatprep.subr.mxu0 0.0
        %2818 = vmatpush1.msra.mxu0 %v2800
        %2819 = vmatprep.subr.mxu0 0.0
        %2820 = vmatpush1.msra.mxu0 %v2801
        %2821 = vmatprep.subr.mxu0 0.0
        %2822 = vmatpush1.msra.mxu0 %v2802
        %2823 = vmatprep.subr.mxu0 0.0
        %2824 = vmatpush1.msra.mxu0 %v2803
        %2825 = vmatprep.subr.mxu0 0.0
        %2826 = vmatpush1.msra.mxu0 %v2804
        %2827 = vmatprep.subr.mxu0 0.0
        %2828 = vmatpush1.msra.mxu0 %v2805
        %2829 = vmatprep.subr.mxu0 0.0
        %2830 = vmatpush1.msra.mxu0 0.0
        %2831 = vmatprep.subr.mxu0 0.0
        %2832 = vmatpush1.msra.mxu0 0.0
        %2833 = vmatprep.subr.mxu0 0.0
        %2834 = vmatpush1.msra.mxu0 0.0
        %2835 = vmatprep.subr.mxu0 0.0
        %2836 = vmatpush1.msra.mxu0 0.0
        %2837 = vmatprep.subr.mxu0 0.0
        %2838 = vmatpush1.msra.mxu0 0.0
        %2839 = vmatprep.subr.mxu0 0.0
        %2840 = vmatpush1.msra.mxu0 0.0
        %2841 = vmatprep.subr.mxu0 0.0
        %2842 = vmatpush1.msra.mxu0 0.0
        %2843 = vmatprep.subr.mxu0 0.0
        %2844 = vmatpush1.msra.mxu0 0.0
        %2845 = vmatprep.subr.mxu0 0.0
        %2846 = vmatpush1.msra.mxu0 0.0
        %2847 = vmatprep.subr.mxu0 0.0
        %2848 = vmatpush1.msra.mxu0 0.0
        %2849 = vmatprep.subr.mxu0 0.0
        %2850 = vmatpush1.msra.mxu0 0.0
        %2851 = vmatprep.subr.mxu0 0.0
        %2852 = vmatpush1.msra.mxu0 0.0
        %2853 = vmatprep.subr.mxu0 0.0
        %2854 = vmatpush1.msra.mxu0 0.0
        %2855 = vmatprep.subr.mxu0 0.0
        %2856 = vmatpush1.msra.mxu0 0.0
        %2857 = vmatprep.subr.mxu0 0.0
        %2858 = vmatpush1.msra.mxu0 0.0
        %2859 = vmatprep.subr.mxu0 0.0
        %2860 = vmatpush1.msra.mxu0 0.0
        %2861 = vmatprep.subr.mxu0 0.0
        %2862 = vmatpush1.msra.mxu0 0.0
        %2863 = vmatprep.subr.mxu0 0.0
        %2864 = vmatpush1.msra.mxu0 0.0
        %2865 = vmatprep.subr.mxu0 0.0
        %2866 = vmatpush1.msra.mxu0 0.0
        %2867 = vmatprep.subr.mxu0 0.0
        %2868 = vmatpush1.msra.mxu0 0.0
        %2869 = vmatprep.subr.mxu0 0.0
        %2870 = vmatpush1.msra.mxu0 0.0
        %2871 = vmatprep.subr.mxu0 0.0
        %2872 = vmatpush1.msra.mxu0 0.0
        %2873 = vmatprep.mubr.f32.mxu0 0.0
        %2874 = vmatmul.mubr.f32.gmra.mrb[0].mxu0 %v2807
        %v2875 = vpop.f32.mrb[0].mxu0
        %v2876 = vadd.f32 0.0, %v2875
        %v2877 = vpop.f32.mrb[0].mxu0
        %2878 = vdwg.mxu0
        %v2879 = vadd.f32 %v2793, %v2876
        %v2880 = vld [vmem:[%s10] sm:$0x1]
        %v2881 = vadd.f32 %v2879, %v2880
        %v2882 = vmax.f32 %v2881, 0.0
        %v2883 = vld [vmem:[%s11] sm:$0xff]
        %v2884 = vld [vmem:[%s11 + $0x8] sm:$0xff]
        %v2885 = vld [vmem:[%s11 + $0x10] sm:$0xff]
        %v2886 = vld [vmem:[%s11 + $0x18] sm:$0xff]
        %v2887 = vld [vmem:[%s11 + $0x20] sm:$0xff]
        %v2888 = vld [vmem:[%s11 + $0x28] sm:$0xff]
        %v2889 = vld [vmem:[%s11 + $0x30] sm:$0xff]
        %v2890 = vld [vmem:[%s11 + $0x38] sm:$0xff]
        %v2891 = vld [vmem:[%s11 + $0x40] sm:$0xff]
        %v2892 = vld [vmem:[%s11 + $0x48] sm:$0xff]
        %v2893 = vld [vmem:[%s11 + $0x50] sm:$0xff]
        %v2894 = vld [vmem:[%s11 + $0x58] sm:$0xff]
        %v2895 = vld [vmem:[%s11 + $0x60] sm:$0xff]
        %v2896 = vld [vmem:[%s11 + $0x68] sm:$0xff]
        %v2897 = vld [vmem:[%s11 + $0x70] sm:$0xff]
        %v2898 = vld [vmem:[%s12] sm:$0x1]
        %vm2899 = vcmask 982016
        %v2901 = vsel %vm2899, %v2882, 0
        %2903 = vmatprep.subr.mxu0 0.0
        %2904 = vmatpush1.msra.mxu0 %v2883
        %2905 = vmatprep.subr.mxu0 0.0
        %2906 = vmatpush1.msra.mxu0 %v2884
        %2907 = vmatprep.subr.mxu0 0.0
        %2908 = vmatpush1.msra.mxu0 %v2885
        %2909 = vmatprep.subr.mxu0 0.0
        %2910 = vmatpush1.msra.mxu0 %v2886
        %2911 = vmatprep.subr.mxu0 0.0
        %2912 = vmatpush1.msra.mxu0 %v2887
        %2913 = vmatprep.subr.mxu0 0.0
        %2914 = vmatpush1.msra.mxu0 %v2888
        %2915 = vmatprep.subr.mxu0 0.0
        %2916 = vmatpush1.msra.mxu0 %v2889
        %2917 = vmatprep.subr.mxu0 0.0
        %2918 = vmatpush1.msra.mxu0 %v2890
        %2919 = vmatprep.subr.mxu0 0.0
        %2920 = vmatpush1.msra.mxu0 %v2891
        %2921 = vmatprep.subr.mxu0 0.0
        %2922 = vmatpush1.msra.mxu0 %v2892
        %2923 = vmatprep.subr.mxu0 0.0
        %2924 = vmatpush1.msra.mxu0 %v2893
        %2925 = vmatprep.subr.mxu0 0.0
        %2926 = vmatpush1.msra.mxu0 %v2894
        %2927 = vmatprep.subr.mxu0 0.0
        %2928 = vmatpush1.msra.mxu0 %v2895
        %2929 = vmatprep.subr.mxu0 0.0
        %2930 = vmatpush1.msra.mxu0 %v2896
        %2931 = vmatprep.subr.mxu0 0.0
        %2932 = vmatpush1.msra.mxu0 %v2897
        %2933 = vmatprep.subr.mxu0 0.0
        %2934 = vmatpush1.msra.mxu0 0.0
        %2935 = vmatprep.subr.mxu0 0.0
        %2936 = vmatpush1.msra.mxu0 0.0
        %2937 = vmatprep.subr.mxu0 0.0
        %2938 = vmatpush1.msra.mxu0 0.0
        %2939 = vmatprep.subr.mxu0 0.0
        %2940 = vmatpush1.msra.mxu0 0.0
        %2941 = vmatprep.subr.mxu0 0.0
        %2942 = vmatpush1.msra.mxu0 0.0
        %2943 = vmatprep.subr.mxu0 0.0
        %2944 = vmatpush1.msra.mxu0 0.0
        %2945 = vmatprep.subr.mxu0 0.0
        %2946 = vmatpush1.msra.mxu0 0.0
        %2947 = vmatprep.subr.mxu0 0.0
        %2948 = vmatpush1.msra.mxu0 0.0
        %2949 = vmatprep.subr.mxu0 0.0
        %2950 = vmatpush1.msra.mxu0 0.0
        %2951 = vmatprep.subr.mxu0 0.0
        %2952 = vmatpush1.msra.mxu0 0.0
        %2953 = vmatprep.subr.mxu0 0.0
        %2954 = vmatpush1.msra.mxu0 0.0
        %2955 = vmatprep.subr.mxu0 0.0
        %2956 = vmatpush1.msra.mxu0 0.0
        %2957 = vmatprep.subr.mxu0 0.0
        %2958 = vmatpush1.msra.mxu0 0.0
        %2959 = vmatprep.subr.mxu0 0.0
        %2960 = vmatpush1.msra.mxu0 0.0
        %2961 = vmatprep.subr.mxu0 0.0
        %2962 = vmatpush1.msra.mxu0 0.0
        %2963 = vmatprep.subr.mxu0 0.0
        %2964 = vmatpush1.msra.mxu0 0.0
        %2965 = vmatprep.subr.mxu0 0.0
        %2966 = vmatpush1.msra.mxu0 0.0
        %2967 = vmatprep.mubr.f32.mxu0 0.0
        %2968 = vmatmul.mubr.f32.gmra.mrb[0].mxu0 %v2901
        %v2969 = vpop.f32.mrb[0].mxu0
        %v2970 = vadd.f32 %v2898, %v2969
        %v2971 = vpop.f32.mrb[0].mxu0
        %2972 = vdwg.mxu0
        %v2973 = vmax.f32 %v2970, 0.0
        %v2974 = vld [vmem:[%s13] sm:$0xff]
        %v2975 = vld [vmem:[%s13 + $0x8] sm:$0xff]
        %v2976 = vld [vmem:[%s13 + $0x10] sm:$0xff]
        %v2977 = vld [vmem:[%s13 + $0x18] sm:$0xff]
        %v2978 = vld [vmem:[%s13 + $0x20] sm:$0xff]
        %v2979 = vld [vmem:[%s13 + $0x28] sm:$0xff]
        %v2980 = vld [vmem:[%s13 + $0x30] sm:$0xff]
        %v2981 = vld [vmem:[%s13 + $0x38] sm:$0xff]
        %v2982 = vld [vmem:[%s13 + $0x40] sm:$0xff]
        %v2983 = vld [vmem:[%s13 + $0x48] sm:$0xff]
        %v2984 = vld [vmem:[%s13 + $0x50] sm:$0xf]
        %v2985 = vld [vmem:[%s14] sm:$0x1]
        %v2987 = vsel %vm1499, %v2973, 0
        %v2990 = vsel %vm1123, %v2984, 0
        %2992 = vmatprep.subr.mxu0 0.0
        %2993 = vmatpush1.msra.mxu0 %v2974
        %2994 = vmatprep.subr.mxu0 0.0
        %2995 = vmatpush1.msra.mxu0 %v2975
        %2996 = vmatprep.subr.mxu0 0.0
        %2997 = vmatpush1.msra.mxu0 %v2976
        %2998 = vmatprep.subr.mxu0 0.0
        %2999 = vmatpush1.msra.mxu0 %v2977
        %3000 = vmatprep.subr.mxu0 0.0
        %3001 = vmatpush1.msra.mxu0 %v2978
        %3002 = vmatprep.subr.mxu0 0.0
        %3003 = vmatpush1.msra.mxu0 %v2979
        %3004 = vmatprep.subr.mxu0 0.0
        %3005 = vmatpush1.msra.mxu0 %v2980
        %3006 = vmatprep.subr.mxu0 0.0
        %3007 = vmatpush1.msra.mxu0 %v2981
        %3008 = vmatprep.subr.mxu0 0.0
        %3009 = vmatpush1.msra.mxu0 %v2982
        %3010 = vmatprep.subr.mxu0 0.0
        %3011 = vmatpush1.msra.mxu0 %v2983
        %3012 = vmatprep.subr.mxu0 0.0
        %3013 = vmatpush1.msra.mxu0 %v2990
        %3014 = vmatprep.subr.mxu0 0.0
        %3015 = vmatpush1.msra.mxu0 0.0
        %3016 = vmatprep.subr.mxu0 0.0
        %3017 = vmatpush1.msra.mxu0 0.0
        %3018 = vmatprep.subr.mxu0 0.0
        %3019 = vmatpush1.msra.mxu0 0.0
        %3020 = vmatprep.subr.mxu0 0.0
        %3021 = vmatpush1.msra.mxu0 0.0
        %3022 = vmatprep.subr.mxu0 0.0
        %3023 = vmatpush1.msra.mxu0 0.0
        %3024 = vmatprep.subr.mxu0 0.0
        %3025 = vmatpush1.msra.mxu0 0.0
        %3026 = vmatprep.subr.mxu0 0.0
        %3027 = vmatpush1.msra.mxu0 0.0
        %3028 = vmatprep.subr.mxu0 0.0
        %3029 = vmatpush1.msra.mxu0 0.0
        %3030 = vmatprep.subr.mxu0 0.0
        %3031 = vmatpush1.msra.mxu0 0.0
        %3032 = vmatprep.subr.mxu0 0.0
        %3033 = vmatpush1.msra.mxu0 0.0
        %3034 = vmatprep.subr.mxu0 0.0
        %3035 = vmatpush1.msra.mxu0 0.0
        %3036 = vmatprep.subr.mxu0 0.0
        %3037 = vmatpush1.msra.mxu0 0.0
        %3038 = vmatprep.subr.mxu0 0.0
        %3039 = vmatpush1.msra.mxu0 0.0
        %3040 = vmatprep.subr.mxu0 0.0
        %3041 = vmatpush1.msra.mxu0 0.0
        %3042 = vmatprep.subr.mxu0 0.0
        %3043 = vmatpush1.msra.mxu0 0.0
        %3044 = vmatprep.subr.mxu0 0.0
        %3045 = vmatpush1.msra.mxu0 0.0
        %3046 = vmatprep.subr.mxu0 0.0
        %3047 = vmatpush1.msra.mxu0 0.0
        %3048 = vmatprep.subr.mxu0 0.0
        %3049 = vmatpush1.msra.mxu0 0.0
        %3050 = vmatprep.subr.mxu0 0.0
        %3051 = vmatpush1.msra.mxu0 0.0
        %3052 = vmatprep.subr.mxu0 0.0
        %3053 = vmatpush1.msra.mxu0 0.0
        %3054 = vmatprep.subr.mxu0 0.0
        %3055 = vmatpush1.msra.mxu0 0.0
        %3056 = vmatprep.mubr.f32.mxu0 0.0
        %3057 = vmatmul.mubr.f32.gmra.mrb[0].mxu0 %v2987
        %v3058 = vpop.f32.mrb[0].mxu0
        %v3059 = vadd.f32 %v2985, %v3058
        %v3060 = vpop.f32.mrb[0].mxu0
        %3061 = vdwg.mxu0
        %vm3062 = vcmask 73728
        %3063 = vst.msk [vmem:[%s486] sm:$0x1] %vm3062, %v3059
        %s3064 = sand.u32 %s357, 1
        %s3065 = scalar_lea.sflag [#allocation5], %s3064
        %s3066 = sand.u32 %s357, 1
        %s3067 = scalar_lea.vmem [#allocation4], %s3066
        // Predicated region
        $region81: #{cnn_forward.1} parent=79 // pred_check
          %p3068 = pneg %p367
        $region82: #{cnn_forward.1} parent=79 // pred_check_branch
          %3070 = sbr.rel (%p3068) target = $region84
        $region83: #{cnn_forward.1} parent=79 // pred_region
          %s3072 = ssub.s32 16, 16
          %3073 = vsyncadd %s3065, %s3072
          %s3074 = smul.addr %s29, 16
          %s3075 = scalar_lea.hbm %s15, %s3074
          %s3077 = sshll.u32 %s3067, 4
          %s3078 = int_to_ptr.vmem [resolvable:$true] %s3077
          %3080 = dma.vmem_to_hbm [thread:$0]  %s3078, 16, %s3075, %s3065
        $region84: #{cnn_forward.1} parent=79 // pred_fallthru
          _
      $region80: #{cnn_forward.1} parent=5 // pred_fallthru
        _
      %p3081 = scmp.le.s32.totalorder 2, %s24
      // Predicated region
      $region85: #{cnn_forward.1} parent=5 // pred_check
        %p3082 = pneg %p3081
      $region86: #{cnn_forward.1} parent=5 // pred_check_branch
        %3084 = sbr.rel (%p3082) target = $region88
      $region87: #{cnn_forward.1} parent=5 // pred_region
        %s3085 = ssub.s32 %s24, 2
        // Predicated region
        $region89: #{cnn_forward.1} parent=87 // pred_check
          %p3086 = pneg %p373
        $region90: #{cnn_forward.1} parent=87 // pred_check_branch
          %3088 = sbr.rel (%p3086) target = $region92
        $region91: #{cnn_forward.1} parent=87 // pred_region
          %s3089 = sand.u32 %s358, 1
          %s3090 = scalar_lea.sflag [#allocation5], %s3089
          %s3091 = sand.u32 %s358, 1
          %s3092 = scalar_lea.vmem [#allocation4], %s3091
          %3093 = dma.done %s3090, 16
        $region92: #{cnn_forward.1} parent=87 // pred_fallthru
          _
      $region88: #{cnn_forward.1} parent=5 // pred_fallthru
        _
    $region6: #{cnn_forward.1} parent=1 // loop_footer
      %s28 = sadd.s32 1, %s24
    $region7: #{cnn_forward.1} parent=1 // loop_footer_branch
      %23 = sbr.rel target = $region3
    $region8: #{cnn_forward.1} parent=1 // loop_exit
      _
    %3094 = vsyncpa [#allocation5], 1
    %s3095 = scalar_lea.sflag [#allocation5], 1
    %3096 = vsyncpa %s3095, 1

</llo_original>
